<compile_context>
chip_gen: v7x
topology: tpu7x:2x2x1
jax: 0.10.0
libtpu: 0.0.40
codegen_flags: <defaults>
</compile_context>

<pallas_src>
import math
import functools

import jax
import jax.numpy as jnp
from jax.experimental import pallas as pl
from jax.experimental.pallas import tpu as pltpu


# ----------------------------- in-kernel helpers ---------------------------

def _add_layernorm(x, y, g, b, eps):
    """LayerNorm(x + y) over the last axis (biased variance, PyTorch-style)."""
    z = x + y
    mu = jnp.mean(z, axis=-1, keepdims=True)
    zc = z - mu
    var = jnp.mean(zc * zc, axis=-1, keepdims=True)
    return zc * jax.lax.rsqrt(var + eps) * g + b


# ------------------------------ fused kernel -------------------------------

def _comment_embedder_kernel(x_ref, pe_ref, w_in_ref, wblob_ref, pblob_ref,
                             o_ref, *, nhead, num_layers, eps, woffs, poffs):
    """Fused forward for one batch block.

    x_ref    : (Bb, S, E) f32   input slice (Bb batch elements)
    pe_ref   : (S, H)     f32   positional encoding rows
    w_in_ref : (E, H)     bf16  input projection
    wblob_ref: (H, W)     bf16  all layer weights, column-packed (128-aligned)
    pblob_ref: (1, P)     f32   all biases / LN params, packed (128-aligned)
    o_ref    : (Bb, S, H) f32
    """
    Bb, S, E = x_ref.shape
    H = pe_ref.shape[-1]
    hd = H // nhead
    R = Bb * S
    scale = 1.0 / math.sqrt(hd)

    def wget(name):
        # bf16 (H, n) weight slice; offsets are 128-lane aligned -> unmasked loads.
        off, n = woffs[name]
        return wblob_ref[:, off:off + n]

    def pget(name):
        # f32 (1, n) parameter slice.
        off, n = poffs[name]
        return pblob_ref[:, off:off + n]

    # ---- TimeDistributed input linear + PE add (dropout = identity, eval) --
    x = x_ref[...].reshape(R, E).astype(jnp.bfloat16)
    h = jnp.dot(x, w_in_ref[...], preferred_element_type=jnp.float32)
    h = h + pget("b_in")
    h = (h.reshape(Bb, S, H) + pe_ref[...][None, :, :]).reshape(R, H)

    for li in range(num_layers):
        # ------------------------- self attention --------------------------
        hb = h.astype(jnp.bfloat16)                      # cast once per layer
        qkv = jnp.dot(hb, wget(f"in_w_{li}"),
                      preferred_element_type=jnp.float32) + pget(f"in_b_{li}")
        qkv = qkv.astype(jnp.bfloat16).reshape(Bb, S, 3 * H)

        ctx_parts = []
        for hh in range(nhead):                          # heads stay in vregs
            q = qkv[:, :, hh * hd:(hh + 1) * hd]
            k = qkv[:, :, H + hh * hd:H + (hh + 1) * hd]
            v = qkv[:, :, 2 * H + hh * hd:2 * H + (hh + 1) * hd]
            s = jnp.einsum("bqd,bkd->bqk", q, k,
                           preferred_element_type=jnp.float32) * scale
            m = jnp.max(s, axis=-1, keepdims=True)
            ex = jnp.exp(s - m)
            denom = jnp.sum(ex, axis=-1, keepdims=True)
            # EUP divide; use approx=False for bit-level softmax parity.
            prob = ex * pl.reciprocal(denom, approx=True)
            ctx_parts.append(
                jnp.einsum("bqk,bkd->bqd", prob.astype(jnp.bfloat16), v,
                           preferred_element_type=jnp.float32))
        ctx = jnp.concatenate(ctx_parts, axis=-1).reshape(R, H)

        attn = jnp.dot(ctx.astype(jnp.bfloat16), wget(f"out_w_{li}"),
                       preferred_element_type=jnp.float32) + pget(f"out_b_{li}")
        h = _add_layernorm(h, attn, pget(f"ln1_g_{li}"), pget(f"ln1_b_{li}"),
                           eps)

        # --------------------------- feed forward ---------------------------
        ff = jnp.maximum(
            jnp.dot(h.astype(jnp.bfloat16), wget(f"lin1_w_{li}"),
                    preferred_element_type=jnp.float32) + pget(f"lin1_b_{li}"),
            0.0)
        # linear2 weight stored (H, F) (lane-dense in F); contract over F.
        ff = jax.lax.dot_general(
            ff.astype(jnp.bfloat16), wget(f"lin2_wT_{li}"),
            dimension_numbers=(((1,), (1,)), ((), ())),
            preferred_element_type=jnp.float32) + pget(f"lin2_b_{li}")
        h = _add_layernorm(h, ff, pget(f"ln2_g_{li}"), pget(f"ln2_b_{li}"),
                           eps)

    o_ref[...] = h.reshape(Bb, S, H)


# --------------------------- parameter packing -----------------------------

def _pack_vectors(entries):
    """Pack 1-D f32 params into one (1, P) blob; each at a 128-aligned offset."""
    chunks, offs, off = [], {}, 0
    for name, v in entries:
        v = jnp.asarray(v, jnp.float32).reshape(-1)
        n = v.shape[0]
        pad = (-n) % 128
        offs[name] = (off, n)
        chunks.append(jnp.pad(v, (0, pad)))
        off += n + pad
    return jnp.concatenate(chunks).reshape(1, -1), offs


def _pack_weight_cols(entries):
    """Pack (H, n) f32 weights column-wise into one bf16 blob (128-aligned)."""
    chunks, offs, off = [], {}, 0
    for name, m in entries:
        n = m.shape[1]
        pad = (-n) % 128
        offs[name] = (off, n)
        chunks.append(jnp.pad(m, ((0, 0), (0, pad))))
        off += n + pad
    return jnp.concatenate(chunks, axis=1).astype(jnp.bfloat16), offs


# ------------------------------ host wrapper -------------------------------

def comment_embedder_forward(x, pe, w_in, wblob, woffs, pblob, poffs, *,
                             nhead, num_layers, eps=1e-5):
    """x: (B, S, E) f32 -> (S, B, H) f32 (matches the PyTorch module)."""
    B, S, E = x.shape
    H = pe.shape[-1]

    # 2-way parallel batch split when possible (keeps both v7x TCs busy);
    # otherwise a single block (best row fill / no per-step overhead).
    G = 2 if (B >= 2 and B % 2 == 0) else 1
    Bb = B // G

    kernel = functools.partial(
        _comment_embedder_kernel, nhead=nhead, num_layers=num_layers,
        eps=eps, woffs=woffs, poffs=poffs)

    out = pl.pallas_call(
        kernel,
        out_shape=jax.ShapeDtypeStruct((B, S, H), jnp.float32),
        grid=(G,),
        in_specs=[
            pl.BlockSpec((Bb, S, E), lambda g: (g, 0, 0)),
            pl.BlockSpec(pe.shape, lambda g: (0, 0)),
            pl.BlockSpec(w_in.shape, lambda g: (0, 0)),
            pl.BlockSpec(wblob.shape, lambda g: (0, 0)),
            pl.BlockSpec(pblob.shape, lambda g: (0, 0)),
        ],
        out_specs=pl.BlockSpec((Bb, S, H), lambda g: (g, 0, 0)),
        compiler_params=pltpu.CompilerParams(
            dimension_semantics=("parallel",),
            vmem_limit_bytes=8 * 1024 * 1024),
    )(x, pe, w_in, wblob, pblob)

    # (B, S, H) -> (S, B, H): the module's permute(1, 0, 2) output layout.
    # TODO(synk): fold this tiny transpose into the consumer to drop one XLA
    # dispatch for sub-10us end-to-end latency.
    return jnp.transpose(out, (1, 0, 2))


def make_positional_encoding(max_len, d_model):
    position = jnp.arange(max_len, dtype=jnp.float32)[:, None]
    div_term = jnp.exp(jnp.arange(0, d_model, 2, dtype=jnp.float32)
                       * (-math.log(10000.0) / d_model))
    pe = jnp.zeros((max_len, d_model), dtype=jnp.float32)
    pe = pe.at[:, 0::2].set(jnp.sin(position * div_term))
    pe = pe.at[:, 1::2].set(jnp.cos(position * div_term))
    return pe                                              # (max_len, H)


class CommentEmbedderPallas:
    """Pallas/JAX re-implementation of CommentEmbedder (eval mode).

    Weight layout (for porting real PyTorch weights):
      * nn.Linear stores weight as (out, in); this class stores every
        projection TRANSPOSED as (in, out) -- except linear2, which is stored
        exactly as PyTorch's linear2.weight (H, F) because the kernel
        contracts over F directly (lane-dense layout).
      * in_proj_weight (3H, H) -> stored transposed as (H, 3H).
    """

    def __init__(self, output_dim, embedding_dim, hidden_dim, comment_len,
                 key, nhead=4, num_layers=2, dim_feedforward=2048):
        self.output_dim = output_dim          # stored but unused (matches ref)
        self.hidden_dim = hidden_dim
        self.nhead = nhead
        self.num_layers = num_layers
        self.comment_len = comment_len
        H, E, F = hidden_dim, embedding_dim, dim_feedforward

        def nrm(k, shape, scale=0.02):
            return scale * jax.random.normal(k, shape, dtype=jnp.float32)

        ks = jax.random.split(key, 2 + num_layers)
        self.w_in = nrm(ks[0], (E, H)).astype(jnp.bfloat16)   # Linear(E,H).weight.T
        self.pe = make_positional_encoding(comment_len, H)    # (comment_len, H) f32

        pvecs = [("b_in", nrm(ks[1], (H,)))]
        wmats = []
        for li in range(num_layers):
            lk = jax.random.split(ks[2 + li], 6)
            wmats += [
                (f"in_w_{li}",   nrm(lk[0], (H, 3 * H))),   # in_proj_weight.T
                (f"out_w_{li}",  nrm(lk[1], (H, H))),       # out_proj.weight.T
                (f"lin1_w_{li}", nrm(lk[2], (H, F))),       # linear1.weight.T
                (f"lin2_wT_{li}", nrm(lk[3], (H, F))),      # linear2.weight
            ]
            pvecs += [
                (f"in_b_{li}",   nrm(lk[4], (3 * H,))),
                (f"out_b_{li}",  jnp.zeros((H,), jnp.float32)),
                (f"ln1_g_{li}",  jnp.ones((H,), jnp.float32)),
                (f"ln1_b_{li}",  jnp.zeros((H,), jnp.float32)),
                (f"lin1_b_{li}", jnp.zeros((F,), jnp.float32)),
                (f"lin2_b_{li}", jnp.zeros((H,), jnp.float32)),
                (f"ln2_g_{li}",  jnp.ones((H,), jnp.float32)),
                (f"ln2_b_{li}",  jnp.zeros((H,), jnp.float32)),
            ]
        self.wblob, self.woffs = _pack_weight_cols(wmats)   # (H, W) bf16
        self.pblob, self.poffs = _pack_vectors(pvecs)       # (1, P) f32

    def __call__(self, x):
        """x: (batch, seq, embedding_dim) f32 -> (seq, batch, hidden_dim) f32."""
        _, S, _ = x.shape
        if S > self.comment_len:
            raise ValueError(
                f"sequence length {S} exceeds comment_len {self.comment_len}")
        # TODO(synk): training-mode dropout (p=0.1 / 0.2) not implemented;
        # eval semantics only.
        return comment_embedder_forward(
            x, self.pe[:S], self.w_in, self.wblob, self.woffs,
            self.pblob, self.poffs, nhead=self.nhead,
            num_layers=self.num_layers)


if __name__ == "__main__":
    key = jax.random.PRNGKey(0)
    B, S, E, H, comment_len = 2, 8, 48, 32, 16
    model = CommentEmbedderPallas(output_dim=10, embedding_dim=E,
                                  hidden_dim=H, comment_len=comment_len,
                                  key=key)
    x = jax.random.normal(jax.random.fold_in(key, 999), (B, S, E),
                          dtype=jnp.float32)
    out = jax.jit(model)(x)
    jax.block_until_ready(out)
    assert out.shape == (S, B, H), out.shape
    assert bool(jnp.all(jnp.isfinite(out)))
    print("KERNEL_OK")
</pallas_src>

<mosaic_0001>
module attributes {stable_mosaic.version = 11 : i64} {
  func.func @_comment_embedder_kernel(%arg0: i32, %arg1: memref<1x8x48xf32, #tpu.memory_space<vmem>>, %arg2: memref<8x32xf32, #tpu.memory_space<vmem>>, %arg3: memref<48x32xbf16, #tpu.memory_space<vmem>>, %arg4: memref<32x8704xbf16, #tpu.memory_space<vmem>>, %arg5: memref<1x6016xf32, #tpu.memory_space<vmem>>, %arg6: memref<1x8x32xf32, #tpu.memory_space<vmem>>) attributes {dimension_semantics = [#tpu.dimension_semantics<parallel>], iteration_bounds = array<i64: 2>, scalar_prefetch = 0 : i64, scratch_operands = 0 : i64, tpu.core_type = #tpu.core_type<tc>, window_params = [{transform_indices = @transform_0, window_bounds = array<i64: 1, 8, 48>}, {pipeline_mode = #tpu.pipeline_mode<synchronous>, transform_indices = @transform_1, window_bounds = array<i64: 8, 32>}, {pipeline_mode = #tpu.pipeline_mode<synchronous>, transform_indices = @transform_2, window_bounds = array<i64: 48, 32>}, {pipeline_mode = #tpu.pipeline_mode<synchronous>, transform_indices = @transform_3, window_bounds = array<i64: 32, 8704>}, {pipeline_mode = #tpu.pipeline_mode<synchronous>, transform_indices = @transform_4, window_bounds = array<i64: 1, 6016>}, {transform_indices = @transform_5, window_bounds = array<i64: 1, 8, 32>}]} {
    %c0 = arith.constant 0 : index
    %c0_0 = arith.constant 0 : index
    %c0_1 = arith.constant 0 : index
    %0 = vector.load %arg1[%c0, %c0_0, %c0_1] : memref<1x8x48xf32, #tpu.memory_space<vmem>>, vector<1x8x48xf32>
    %1 = vector.shape_cast %0 : vector<1x8x48xf32> to vector<8x48xf32>
    %2 = arith.truncf %1 : vector<8x48xf32> to vector<8x48xbf16>
    %c0_2 = arith.constant 0 : index
    %c0_3 = arith.constant 0 : index
    %3 = vector.load %arg3[%c0_2, %c0_3] : memref<48x32xbf16, #tpu.memory_space<vmem>>, vector<48x32xbf16>
    %cst = arith.constant dense<0.000000e+00> : vector<8x32xf32>
    %4 = tpu.matmul %2, %3, %cst {dimension_numbers = #tpu.dot_dimension_numbers<[1], [0], [0], [1], [0, 0, 1, 1], [], []>} : vector<8x48xbf16>, vector<48x32xbf16>, vector<8x32xf32> -> vector<8x32xf32>
    %c0_4 = arith.constant 0 : index
    %c0_5 = arith.constant 0 : index
    %5 = vector.load %arg5[%c0_4, %c0_5] : memref<1x6016xf32, #tpu.memory_space<vmem>>, vector<1x32xf32>
    %6 = vector.broadcast %5 : vector<1x32xf32> to vector<8x32xf32>
    %7 = arith.addf %4, %6 : vector<8x32xf32>
    %8 = vector.shape_cast %7 : vector<8x32xf32> to vector<1x8x32xf32>
    %c0_6 = arith.constant 0 : index
    %c0_7 = arith.constant 0 : index
    %9 = vector.load %arg2[%c0_6, %c0_7] : memref<8x32xf32, #tpu.memory_space<vmem>>, vector<8x32xf32>
    %10 = vector.shape_cast %9 : vector<8x32xf32> to vector<1x8x32xf32>
    %11 = arith.addf %8, %10 : vector<1x8x32xf32>
    %12 = vector.shape_cast %11 : vector<1x8x32xf32> to vector<8x32xf32>
    %13 = arith.truncf %12 : vector<8x32xf32> to vector<8x32xbf16>
    %c0_8 = arith.constant 0 : index
    %c0_9 = arith.constant 0 : index
    %14 = vector.load %arg4[%c0_8, %c0_9] : memref<32x8704xbf16, #tpu.memory_space<vmem>>, vector<32x96xbf16>
    %cst_10 = arith.constant dense<0.000000e+00> : vector<8x96xf32>
    %15 = tpu.matmul %13, %14, %cst_10 {dimension_numbers = #tpu.dot_dimension_numbers<[1], [0], [0], [1], [0, 0, 1, 1], [], []>} : vector<8x32xbf16>, vector<32x96xbf16>, vector<8x96xf32> -> vector<8x96xf32>
    %c0_11 = arith.constant 0 : index
    %c128 = arith.constant 128 : index
    %16 = vector.load %arg5[%c0_11, %c128] : memref<1x6016xf32, #tpu.memory_space<vmem>>, vector<1x96xf32>
    %17 = vector.broadcast %16 : vector<1x96xf32> to vector<8x96xf32>
    %18 = arith.addf %15, %17 : vector<8x96xf32>
    %19 = arith.truncf %18 : vector<8x96xf32> to vector<8x96xbf16>
    %20 = vector.shape_cast %19 : vector<8x96xbf16> to vector<1x8x96xbf16>
    %21 = vector.extract_strided_slice %20 {offsets = [0, 0, 0], sizes = [1, 8, 8], strides = [1, 1, 1]} : vector<1x8x96xbf16> to vector<1x8x8xbf16>
    %22 = vector.extract_strided_slice %20 {offsets = [0, 0, 32], sizes = [1, 8, 8], strides = [1, 1, 1]} : vector<1x8x96xbf16> to vector<1x8x8xbf16>
    %23 = vector.extract_strided_slice %20 {offsets = [0, 0, 64], sizes = [1, 8, 8], strides = [1, 1, 1]} : vector<1x8x96xbf16> to vector<1x8x8xbf16>
    "tpu.trace_start"() <{level = 10 : i32, message = "bqd,bkd->bqk"}> : () -> ()
    %cst_12 = arith.constant dense<0.000000e+00> : vector<1x8x8xf32>
    %24 = tpu.matmul %21, %22, %cst_12 {dimension_numbers = #tpu.dot_dimension_numbers<[2], [2], [1], [1], [0, 0, 0, 1, 1, 1], [0], [0]>} : vector<1x8x8xbf16>, vector<1x8x8xbf16>, vector<1x8x8xf32> -> vector<1x8x8xf32>
    "tpu.trace_stop"() : () -> ()
    %cst_13 = arith.constant 0.353553385 : f32
    %25 = vector.broadcast %cst_13 : f32 to vector<1x8x8xf32>
    %26 = arith.mulf %24, %25 : vector<1x8x8xf32>
    %cst_14 = arith.constant dense<0xFF800000> : vector<1x8xf32>
    %27 = vector.multi_reduction <maximumf>, %26, %cst_14 [2] : vector<1x8x8xf32> to vector<1x8xf32>
    %28 = vector.shape_cast %27 : vector<1x8xf32> to vector<1x8x1xf32>
    %29 = vector.broadcast %28 : vector<1x8x1xf32> to vector<1x8x8xf32>
    %30 = arith.subf %26, %29 : vector<1x8x8xf32>
    %31 = math.exp %30 : vector<1x8x8xf32>
    %cst_15 = arith.constant dense<0.000000e+00> : vector<1x8xf32>
    %32 = vector.multi_reduction <add>, %31, %cst_15 [2] : vector<1x8x8xf32> to vector<1x8xf32>
    %33 = vector.shape_cast %32 : vector<1x8xf32> to vector<1x8x1xf32>
    %34 = tpu.reciprocal %33 {approx = true} : vector<1x8x1xf32> -> vector<1x8x1xf32>
    %35 = vector.broadcast %34 : vector<1x8x1xf32> to vector<1x8x8xf32>
    %36 = arith.mulf %31, %35 : vector<1x8x8xf32>
    %37 = arith.truncf %36 : vector<1x8x8xf32> to vector<1x8x8xbf16>
    "tpu.trace_start"() <{level = 10 : i32, message = "bqk,bkd->bqd"}> : () -> ()
    %cst_16 = arith.constant dense<0.000000e+00> : vector<1x8x8xf32>
    %38 = tpu.matmul %37, %23, %cst_16 {dimension_numbers = #tpu.dot_dimension_numbers<[2], [1], [1], [2], [0, 0, 0, 1, 1, 2], [0], [0]>} : vector<1x8x8xbf16>, vector<1x8x8xbf16>, vector<1x8x8xf32> -> vector<1x8x8xf32>
    "tpu.trace_stop"() : () -> ()
    %39 = vector.extract_strided_slice %20 {offsets = [0, 0, 8], sizes = [1, 8, 8], strides = [1, 1, 1]} : vector<1x8x96xbf16> to vector<1x8x8xbf16>
    %40 = vector.extract_strided_slice %20 {offsets = [0, 0, 40], sizes = [1, 8, 8], strides = [1, 1, 1]} : vector<1x8x96xbf16> to vector<1x8x8xbf16>
    %41 = vector.extract_strided_slice %20 {offsets = [0, 0, 72], sizes = [1, 8, 8], strides = [1, 1, 1]} : vector<1x8x96xbf16> to vector<1x8x8xbf16>
    "tpu.trace_start"() <{level = 10 : i32, message = "bqd,bkd->bqk"}> : () -> ()
    %cst_17 = arith.constant dense<0.000000e+00> : vector<1x8x8xf32>
    %42 = tpu.matmul %39, %40, %cst_17 {dimension_numbers = #tpu.dot_dimension_numbers<[2], [2], [1], [1], [0, 0, 0, 1, 1, 1], [0], [0]>} : vector<1x8x8xbf16>, vector<1x8x8xbf16>, vector<1x8x8xf32> -> vector<1x8x8xf32>
    "tpu.trace_stop"() : () -> ()
    %cst_18 = arith.constant 0.353553385 : f32
    %43 = vector.broadcast %cst_18 : f32 to vector<1x8x8xf32>
    %44 = arith.mulf %42, %43 : vector<1x8x8xf32>
    %cst_19 = arith.constant dense<0xFF800000> : vector<1x8xf32>
    %45 = vector.multi_reduction <maximumf>, %44, %cst_19 [2] : vector<1x8x8xf32> to vector<1x8xf32>
    %46 = vector.shape_cast %45 : vector<1x8xf32> to vector<1x8x1xf32>
    %47 = vector.broadcast %46 : vector<1x8x1xf32> to vector<1x8x8xf32>
    %48 = arith.subf %44, %47 : vector<1x8x8xf32>
    %49 = math.exp %48 : vector<1x8x8xf32>
    %cst_20 = arith.constant dense<0.000000e+00> : vector<1x8xf32>
    %50 = vector.multi_reduction <add>, %49, %cst_20 [2] : vector<1x8x8xf32> to vector<1x8xf32>
    %51 = vector.shape_cast %50 : vector<1x8xf32> to vector<1x8x1xf32>
    %52 = tpu.reciprocal %51 {approx = true} : vector<1x8x1xf32> -> vector<1x8x1xf32>
    %53 = vector.broadcast %52 : vector<1x8x1xf32> to vector<1x8x8xf32>
    %54 = arith.mulf %49, %53 : vector<1x8x8xf32>
    %55 = arith.truncf %54 : vector<1x8x8xf32> to vector<1x8x8xbf16>
    "tpu.trace_start"() <{level = 10 : i32, message = "bqk,bkd->bqd"}> : () -> ()
    %cst_21 = arith.constant dense<0.000000e+00> : vector<1x8x8xf32>
    %56 = tpu.matmul %55, %41, %cst_21 {dimension_numbers = #tpu.dot_dimension_numbers<[2], [1], [1], [2], [0, 0, 0, 1, 1, 2], [0], [0]>} : vector<1x8x8xbf16>, vector<1x8x8xbf16>, vector<1x8x8xf32> -> vector<1x8x8xf32>
    "tpu.trace_stop"() : () -> ()
    %57 = vector.extract_strided_slice %20 {offsets = [0, 0, 16], sizes = [1, 8, 8], strides = [1, 1, 1]} : vector<1x8x96xbf16> to vector<1x8x8xbf16>
    %58 = vector.extract_strided_slice %20 {offsets = [0, 0, 48], sizes = [1, 8, 8], strides = [1, 1, 1]} : vector<1x8x96xbf16> to vector<1x8x8xbf16>
    %59 = vector.extract_strided_slice %20 {offsets = [0, 0, 80], sizes = [1, 8, 8], strides = [1, 1, 1]} : vector<1x8x96xbf16> to vector<1x8x8xbf16>
    "tpu.trace_start"() <{level = 10 : i32, message = "bqd,bkd->bqk"}> : () -> ()
    %cst_22 = arith.constant dense<0.000000e+00> : vector<1x8x8xf32>
    %60 = tpu.matmul %57, %58, %cst_22 {dimension_numbers = #tpu.dot_dimension_numbers<[2], [2], [1], [1], [0, 0, 0, 1, 1, 1], [0], [0]>} : vector<1x8x8xbf16>, vector<1x8x8xbf16>, vector<1x8x8xf32> -> vector<1x8x8xf32>
    "tpu.trace_stop"() : () -> ()
    %cst_23 = arith.constant 0.353553385 : f32
    %61 = vector.broadcast %cst_23 : f32 to vector<1x8x8xf32>
    %62 = arith.mulf %60, %61 : vector<1x8x8xf32>
    %cst_24 = arith.constant dense<0xFF800000> : vector<1x8xf32>
    %63 = vector.multi_reduction <maximumf>, %62, %cst_24 [2] : vector<1x8x8xf32> to vector<1x8xf32>
    %64 = vector.shape_cast %63 : vector<1x8xf32> to vector<1x8x1xf32>
    %65 = vector.broadcast %64 : vector<1x8x1xf32> to vector<1x8x8xf32>
    %66 = arith.subf %62, %65 : vector<1x8x8xf32>
    %67 = math.exp %66 : vector<1x8x8xf32>
    %cst_25 = arith.constant dense<0.000000e+00> : vector<1x8xf32>
    %68 = vector.multi_reduction <add>, %67, %cst_25 [2] : vector<1x8x8xf32> to vector<1x8xf32>
    %69 = vector.shape_cast %68 : vector<1x8xf32> to vector<1x8x1xf32>
    %70 = tpu.reciprocal %69 {approx = true} : vector<1x8x1xf32> -> vector<1x8x1xf32>
    %71 = vector.broadcast %70 : vector<1x8x1xf32> to vector<1x8x8xf32>
    %72 = arith.mulf %67, %71 : vector<1x8x8xf32>
    %73 = arith.truncf %72 : vector<1x8x8xf32> to vector<1x8x8xbf16>
    "tpu.trace_start"() <{level = 10 : i32, message = "bqk,bkd->bqd"}> : () -> ()
    %cst_26 = arith.constant dense<0.000000e+00> : vector<1x8x8xf32>
    %74 = tpu.matmul %73, %59, %cst_26 {dimension_numbers = #tpu.dot_dimension_numbers<[2], [1], [1], [2], [0, 0, 0, 1, 1, 2], [0], [0]>} : vector<1x8x8xbf16>, vector<1x8x8xbf16>, vector<1x8x8xf32> -> vector<1x8x8xf32>
    "tpu.trace_stop"() : () -> ()
    %75 = vector.extract_strided_slice %20 {offsets = [0, 0, 24], sizes = [1, 8, 8], strides = [1, 1, 1]} : vector<1x8x96xbf16> to vector<1x8x8xbf16>
    %76 = vector.extract_strided_slice %20 {offsets = [0, 0, 56], sizes = [1, 8, 8], strides = [1, 1, 1]} : vector<1x8x96xbf16> to vector<1x8x8xbf16>
    %77 = vector.extract_strided_slice %20 {offsets = [0, 0, 88], sizes = [1, 8, 8], strides = [1, 1, 1]} : vector<1x8x96xbf16> to vector<1x8x8xbf16>
    "tpu.trace_start"() <{level = 10 : i32, message = "bqd,bkd->bqk"}> : () -> ()
    %cst_27 = arith.constant dense<0.000000e+00> : vector<1x8x8xf32>
    %78 = tpu.matmul %75, %76, %cst_27 {dimension_numbers = #tpu.dot_dimension_numbers<[2], [2], [1], [1], [0, 0, 0, 1, 1, 1], [0], [0]>} : vector<1x8x8xbf16>, vector<1x8x8xbf16>, vector<1x8x8xf32> -> vector<1x8x8xf32>
    "tpu.trace_stop"() : () -> ()
    %cst_28 = arith.constant 0.353553385 : f32
    %79 = vector.broadcast %cst_28 : f32 to vector<1x8x8xf32>
    %80 = arith.mulf %78, %79 : vector<1x8x8xf32>
    %cst_29 = arith.constant dense<0xFF800000> : vector<1x8xf32>
    %81 = vector.multi_reduction <maximumf>, %80, %cst_29 [2] : vector<1x8x8xf32> to vector<1x8xf32>
    %82 = vector.shape_cast %81 : vector<1x8xf32> to vector<1x8x1xf32>
    %83 = vector.broadcast %82 : vector<1x8x1xf32> to vector<1x8x8xf32>
    %84 = arith.subf %80, %83 : vector<1x8x8xf32>
    %85 = math.exp %84 : vector<1x8x8xf32>
    %cst_30 = arith.constant dense<0.000000e+00> : vector<1x8xf32>
    %86 = vector.multi_reduction <add>, %85, %cst_30 [2] : vector<1x8x8xf32> to vector<1x8xf32>
    %87 = vector.shape_cast %86 : vector<1x8xf32> to vector<1x8x1xf32>
    %88 = tpu.reciprocal %87 {approx = true} : vector<1x8x1xf32> -> vector<1x8x1xf32>
    %89 = vector.broadcast %88 : vector<1x8x1xf32> to vector<1x8x8xf32>
    %90 = arith.mulf %85, %89 : vector<1x8x8xf32>
    %91 = arith.truncf %90 : vector<1x8x8xf32> to vector<1x8x8xbf16>
    "tpu.trace_start"() <{level = 10 : i32, message = "bqk,bkd->bqd"}> : () -> ()
    %cst_31 = arith.constant dense<0.000000e+00> : vector<1x8x8xf32>
    %92 = tpu.matmul %91, %77, %cst_31 {dimension_numbers = #tpu.dot_dimension_numbers<[2], [1], [1], [2], [0, 0, 0, 1, 1, 2], [0], [0]>} : vector<1x8x8xbf16>, vector<1x8x8xbf16>, vector<1x8x8xf32> -> vector<1x8x8xf32>
    "tpu.trace_stop"() : () -> ()
    %93 = tpu.concatenate %38, %56, %74, %92 in 2 : vector<1x8x8xf32>, vector<1x8x8xf32>, vector<1x8x8xf32>, vector<1x8x8xf32> -> vector<1x8x32xf32>
    %94 = vector.shape_cast %93 : vector<1x8x32xf32> to vector<8x32xf32>
    %95 = arith.truncf %94 : vector<8x32xf32> to vector<8x32xbf16>
    %c0_32 = arith.constant 0 : index
    %c128_33 = arith.constant 128 : index
    %96 = vector.load %arg4[%c0_32, %c128_33] : memref<32x8704xbf16, #tpu.memory_space<vmem>>, vector<32x32xbf16>
    %cst_34 = arith.constant dense<0.000000e+00> : vector<8x32xf32>
    %97 = tpu.matmul %95, %96, %cst_34 {dimension_numbers = #tpu.dot_dimension_numbers<[1], [0], [0], [1], [0, 0, 1, 1], [], []>} : vector<8x32xbf16>, vector<32x32xbf16>, vector<8x32xf32> -> vector<8x32xf32>
    %c0_35 = arith.constant 0 : index
    %c256 = arith.constant 256 : index
    %98 = vector.load %arg5[%c0_35, %c256] : memref<1x6016xf32, #tpu.memory_space<vmem>>, vector<1x32xf32>
    %99 = vector.broadcast %98 : vector<1x32xf32> to vector<8x32xf32>
    %100 = arith.addf %97, %99 : vector<8x32xf32>
    %c0_36 = arith.constant 0 : index
    %c384 = arith.constant 384 : index
    %101 = vector.load %arg5[%c0_36, %c384] : memref<1x6016xf32, #tpu.memory_space<vmem>>, vector<1x32xf32>
    %c0_37 = arith.constant 0 : index
    %c512 = arith.constant 512 : index
    %102 = vector.load %arg5[%c0_37, %c512] : memref<1x6016xf32, #tpu.memory_space<vmem>>, vector<1x32xf32>
    %103 = arith.addf %12, %100 : vector<8x32xf32>
    %cst_38 = arith.constant dense<0.000000e+00> : vector<8xf32>
    %104 = vector.multi_reduction <add>, %103, %cst_38 [1] : vector<8x32xf32> to vector<8xf32>
    %105 = vector.shape_cast %104 : vector<8xf32> to vector<8x1xf32>
    %cst_39 = arith.constant 3.200000e+01 : f32
    %106 = vector.broadcast %cst_39 : f32 to vector<8x1xf32>
    %107 = arith.divf %105, %106 : vector<8x1xf32>
    %108 = vector.broadcast %107 : vector<8x1xf32> to vector<8x32xf32>
    %109 = arith.subf %103, %108 : vector<8x32xf32>
    %110 = arith.mulf %109, %109 : vector<8x32xf32>
    %cst_40 = arith.constant dense<0.000000e+00> : vector<8xf32>
    %111 = vector.multi_reduction <add>, %110, %cst_40 [1] : vector<8x32xf32> to vector<8xf32>
    %112 = vector.shape_cast %111 : vector<8xf32> to vector<8x1xf32>
    %cst_41 = arith.constant 3.200000e+01 : f32
    %113 = vector.broadcast %cst_41 : f32 to vector<8x1xf32>
    %114 = arith.divf %112, %113 : vector<8x1xf32>
    %cst_42 = arith.constant 9.99999974E-6 : f32
    %115 = vector.broadcast %cst_42 : f32 to vector<8x1xf32>
    %116 = arith.addf %114, %115 : vector<8x1xf32>
    %117 = math.rsqrt %116 : vector<8x1xf32>
    %118 = vector.broadcast %117 : vector<8x1xf32> to vector<8x32xf32>
    %119 = arith.mulf %109, %118 : vector<8x32xf32>
    %120 = vector.broadcast %101 : vector<1x32xf32> to vector<8x32xf32>
    %121 = arith.mulf %119, %120 : vector<8x32xf32>
    %122 = vector.broadcast %102 : vector<1x32xf32> to vector<8x32xf32>
    %123 = arith.addf %121, %122 : vector<8x32xf32>
    %124 = arith.truncf %123 : vector<8x32xf32> to vector<8x32xbf16>
    %c0_43 = arith.constant 0 : index
    %c256_44 = arith.constant 256 : index
    %125 = vector.load %arg4[%c0_43, %c256_44] : memref<32x8704xbf16, #tpu.memory_space<vmem>>, vector<32x2048xbf16>
    %cst_45 = arith.constant dense<0.000000e+00> : vector<8x2048xf32>
    %126 = tpu.matmul %124, %125, %cst_45 {dimension_numbers = #tpu.dot_dimension_numbers<[1], [0], [0], [1], [0, 0, 1, 1], [], []>} : vector<8x32xbf16>, vector<32x2048xbf16>, vector<8x2048xf32> -> vector<8x2048xf32>
    %c0_46 = arith.constant 0 : index
    %c640 = arith.constant 640 : index
    %127 = vector.load %arg5[%c0_46, %c640] : memref<1x6016xf32, #tpu.memory_space<vmem>>, vector<1x2048xf32>
    %128 = vector.broadcast %127 : vector<1x2048xf32> to vector<8x2048xf32>
    %129 = arith.addf %126, %128 : vector<8x2048xf32>
    %cst_47 = arith.constant 0.000000e+00 : f32
    %130 = vector.broadcast %cst_47 : f32 to vector<8x2048xf32>
    %131 = arith.maximumf %129, %130 : vector<8x2048xf32>
    %132 = arith.truncf %131 : vector<8x2048xf32> to vector<8x2048xbf16>
    %c0_48 = arith.constant 0 : index
    %c2304 = arith.constant 2304 : index
    %133 = vector.load %arg4[%c0_48, %c2304] : memref<32x8704xbf16, #tpu.memory_space<vmem>>, vector<32x2048xbf16>
    %cst_49 = arith.constant dense<0.000000e+00> : vector<8x32xf32>
    %134 = tpu.matmul %132, %133, %cst_49 {dimension_numbers = #tpu.dot_dimension_numbers<[1], [1], [0], [0], [0, 0, 1, 0], [], []>} : vector<8x2048xbf16>, vector<32x2048xbf16>, vector<8x32xf32> -> vector<8x32xf32>
    %c0_50 = arith.constant 0 : index
    %c2688 = arith.constant 2688 : index
    %135 = vector.load %arg5[%c0_50, %c2688] : memref<1x6016xf32, #tpu.memory_space<vmem>>, vector<1x32xf32>
    %136 = vector.broadcast %135 : vector<1x32xf32> to vector<8x32xf32>
    %137 = arith.addf %134, %136 : vector<8x32xf32>
    %c0_51 = arith.constant 0 : index
    %c2816 = arith.constant 2816 : index
    %138 = vector.load %arg5[%c0_51, %c2816] : memref<1x6016xf32, #tpu.memory_space<vmem>>, vector<1x32xf32>
    %c0_52 = arith.constant 0 : index
    %c2944 = arith.constant 2944 : index
    %139 = vector.load %arg5[%c0_52, %c2944] : memref<1x6016xf32, #tpu.memory_space<vmem>>, vector<1x32xf32>
    %140 = arith.addf %123, %137 : vector<8x32xf32>
    %cst_53 = arith.constant dense<0.000000e+00> : vector<8xf32>
    %141 = vector.multi_reduction <add>, %140, %cst_53 [1] : vector<8x32xf32> to vector<8xf32>
    %142 = vector.shape_cast %141 : vector<8xf32> to vector<8x1xf32>
    %cst_54 = arith.constant 3.200000e+01 : f32
    %143 = vector.broadcast %cst_54 : f32 to vector<8x1xf32>
    %144 = arith.divf %142, %143 : vector<8x1xf32>
    %145 = vector.broadcast %144 : vector<8x1xf32> to vector<8x32xf32>
    %146 = arith.subf %140, %145 : vector<8x32xf32>
    %147 = arith.mulf %146, %146 : vector<8x32xf32>
    %cst_55 = arith.constant dense<0.000000e+00> : vector<8xf32>
    %148 = vector.multi_reduction <add>, %147, %cst_55 [1] : vector<8x32xf32> to vector<8xf32>
    %149 = vector.shape_cast %148 : vector<8xf32> to vector<8x1xf32>
    %cst_56 = arith.constant 3.200000e+01 : f32
    %150 = vector.broadcast %cst_56 : f32 to vector<8x1xf32>
    %151 = arith.divf %149, %150 : vector<8x1xf32>
    %cst_57 = arith.constant 9.99999974E-6 : f32
    %152 = vector.broadcast %cst_57 : f32 to vector<8x1xf32>
    %153 = arith.addf %151, %152 : vector<8x1xf32>
    %154 = math.rsqrt %153 : vector<8x1xf32>
    %155 = vector.broadcast %154 : vector<8x1xf32> to vector<8x32xf32>
    %156 = arith.mulf %146, %155 : vector<8x32xf32>
    %157 = vector.broadcast %138 : vector<1x32xf32> to vector<8x32xf32>
    %158 = arith.mulf %156, %157 : vector<8x32xf32>
    %159 = vector.broadcast %139 : vector<1x32xf32> to vector<8x32xf32>
    %160 = arith.addf %158, %159 : vector<8x32xf32>
    %161 = arith.truncf %160 : vector<8x32xf32> to vector<8x32xbf16>
    %c0_58 = arith.constant 0 : index
    %c4352 = arith.constant 4352 : index
    %162 = vector.load %arg4[%c0_58, %c4352] : memref<32x8704xbf16, #tpu.memory_space<vmem>>, vector<32x96xbf16>
    %cst_59 = arith.constant dense<0.000000e+00> : vector<8x96xf32>
    %163 = tpu.matmul %161, %162, %cst_59 {dimension_numbers = #tpu.dot_dimension_numbers<[1], [0], [0], [1], [0, 0, 1, 1], [], []>} : vector<8x32xbf16>, vector<32x96xbf16>, vector<8x96xf32> -> vector<8x96xf32>
    %c0_60 = arith.constant 0 : index
    %c3072 = arith.constant 3072 : index
    %164 = vector.load %arg5[%c0_60, %c3072] : memref<1x6016xf32, #tpu.memory_space<vmem>>, vector<1x96xf32>
    %165 = vector.broadcast %164 : vector<1x96xf32> to vector<8x96xf32>
    %166 = arith.addf %163, %165 : vector<8x96xf32>
    %167 = arith.truncf %166 : vector<8x96xf32> to vector<8x96xbf16>
    %168 = vector.shape_cast %167 : vector<8x96xbf16> to vector<1x8x96xbf16>
    %169 = vector.extract_strided_slice %168 {offsets = [0, 0, 0], sizes = [1, 8, 8], strides = [1, 1, 1]} : vector<1x8x96xbf16> to vector<1x8x8xbf16>
    %170 = vector.extract_strided_slice %168 {offsets = [0, 0, 32], sizes = [1, 8, 8], strides = [1, 1, 1]} : vector<1x8x96xbf16> to vector<1x8x8xbf16>
    %171 = vector.extract_strided_slice %168 {offsets = [0, 0, 64], sizes = [1, 8, 8], strides = [1, 1, 1]} : vector<1x8x96xbf16> to vector<1x8x8xbf16>
    "tpu.trace_start"() <{level = 10 : i32, message = "bqd,bkd->bqk"}> : () -> ()
    %cst_61 = arith.constant dense<0.000000e+00> : vector<1x8x8xf32>
    %172 = tpu.matmul %169, %170, %cst_61 {dimension_numbers = #tpu.dot_dimension_numbers<[2], [2], [1], [1], [0, 0, 0, 1, 1, 1], [0], [0]>} : vector<1x8x8xbf16>, vector<1x8x8xbf16>, vector<1x8x8xf32> -> vector<1x8x8xf32>
    "tpu.trace_stop"() : () -> ()
    %cst_62 = arith.constant 0.353553385 : f32
    %173 = vector.broadcast %cst_62 : f32 to vector<1x8x8xf32>
    %174 = arith.mulf %172, %173 : vector<1x8x8xf32>
    %cst_63 = arith.constant dense<0xFF800000> : vector<1x8xf32>
    %175 = vector.multi_reduction <maximumf>, %174, %cst_63 [2] : vector<1x8x8xf32> to vector<1x8xf32>
    %176 = vector.shape_cast %175 : vector<1x8xf32> to vector<1x8x1xf32>
    %177 = vector.broadcast %176 : vector<1x8x1xf32> to vector<1x8x8xf32>
    %178 = arith.subf %174, %177 : vector<1x8x8xf32>
    %179 = math.exp %178 : vector<1x8x8xf32>
    %cst_64 = arith.constant dense<0.000000e+00> : vector<1x8xf32>
    %180 = vector.multi_reduction <add>, %179, %cst_64 [2] : vector<1x8x8xf32> to vector<1x8xf32>
    %181 = vector.shape_cast %180 : vector<1x8xf32> to vector<1x8x1xf32>
    %182 = tpu.reciprocal %181 {approx = true} : vector<1x8x1xf32> -> vector<1x8x1xf32>
    %183 = vector.broadcast %182 : vector<1x8x1xf32> to vector<1x8x8xf32>
    %184 = arith.mulf %179, %183 : vector<1x8x8xf32>
    %185 = arith.truncf %184 : vector<1x8x8xf32> to vector<1x8x8xbf16>
    "tpu.trace_start"() <{level = 10 : i32, message = "bqk,bkd->bqd"}> : () -> ()
    %cst_65 = arith.constant dense<0.000000e+00> : vector<1x8x8xf32>
    %186 = tpu.matmul %185, %171, %cst_65 {dimension_numbers = #tpu.dot_dimension_numbers<[2], [1], [1], [2], [0, 0, 0, 1, 1, 2], [0], [0]>} : vector<1x8x8xbf16>, vector<1x8x8xbf16>, vector<1x8x8xf32> -> vector<1x8x8xf32>
    "tpu.trace_stop"() : () -> ()
    %187 = vector.extract_strided_slice %168 {offsets = [0, 0, 8], sizes = [1, 8, 8], strides = [1, 1, 1]} : vector<1x8x96xbf16> to vector<1x8x8xbf16>
    %188 = vector.extract_strided_slice %168 {offsets = [0, 0, 40], sizes = [1, 8, 8], strides = [1, 1, 1]} : vector<1x8x96xbf16> to vector<1x8x8xbf16>
    %189 = vector.extract_strided_slice %168 {offsets = [0, 0, 72], sizes = [1, 8, 8], strides = [1, 1, 1]} : vector<1x8x96xbf16> to vector<1x8x8xbf16>
    "tpu.trace_start"() <{level = 10 : i32, message = "bqd,bkd->bqk"}> : () -> ()
    %cst_66 = arith.constant dense<0.000000e+00> : vector<1x8x8xf32>
    %190 = tpu.matmul %187, %188, %cst_66 {dimension_numbers = #tpu.dot_dimension_numbers<[2], [2], [1], [1], [0, 0, 0, 1, 1, 1], [0], [0]>} : vector<1x8x8xbf16>, vector<1x8x8xbf16>, vector<1x8x8xf32> -> vector<1x8x8xf32>
    "tpu.trace_stop"() : () -> ()
    %cst_67 = arith.constant 0.353553385 : f32
    %191 = vector.broadcast %cst_67 : f32 to vector<1x8x8xf32>
    %192 = arith.mulf %190, %191 : vector<1x8x8xf32>
    %cst_68 = arith.constant dense<0xFF800000> : vector<1x8xf32>
    %193 = vector.multi_reduction <maximumf>, %192, %cst_68 [2] : vector<1x8x8xf32> to vector<1x8xf32>
    %194 = vector.shape_cast %193 : vector<1x8xf32> to vector<1x8x1xf32>
    %195 = vector.broadcast %194 : vector<1x8x1xf32> to vector<1x8x8xf32>
    %196 = arith.subf %192, %195 : vector<1x8x8xf32>
    %197 = math.exp %196 : vector<1x8x8xf32>
    %cst_69 = arith.constant dense<0.000000e+00> : vector<1x8xf32>
    %198 = vector.multi_reduction <add>, %197, %cst_69 [2] : vector<1x8x8xf32> to vector<1x8xf32>
    %199 = vector.shape_cast %198 : vector<1x8xf32> to vector<1x8x1xf32>
    %200 = tpu.reciprocal %199 {approx = true} : vector<1x8x1xf32> -> vector<1x8x1xf32>
    %201 = vector.broadcast %200 : vector<1x8x1xf32> to vector<1x8x8xf32>
    %202 = arith.mulf %197, %201 : vector<1x8x8xf32>
    %203 = arith.truncf %202 : vector<1x8x8xf32> to vector<1x8x8xbf16>
    "tpu.trace_start"() <{level = 10 : i32, message = "bqk,bkd->bqd"}> : () -> ()
    %cst_70 = arith.constant dense<0.000000e+00> : vector<1x8x8xf32>
    %204 = tpu.matmul %203, %189, %cst_70 {dimension_numbers = #tpu.dot_dimension_numbers<[2], [1], [1], [2], [0, 0, 0, 1, 1, 2], [0], [0]>} : vector<1x8x8xbf16>, vector<1x8x8xbf16>, vector<1x8x8xf32> -> vector<1x8x8xf32>
    "tpu.trace_stop"() : () -> ()
    %205 = vector.extract_strided_slice %168 {offsets = [0, 0, 16], sizes = [1, 8, 8], strides = [1, 1, 1]} : vector<1x8x96xbf16> to vector<1x8x8xbf16>
    %206 = vector.extract_strided_slice %168 {offsets = [0, 0, 48], sizes = [1, 8, 8], strides = [1, 1, 1]} : vector<1x8x96xbf16> to vector<1x8x8xbf16>
    %207 = vector.extract_strided_slice %168 {offsets = [0, 0, 80], sizes = [1, 8, 8], strides = [1, 1, 1]} : vector<1x8x96xbf16> to vector<1x8x8xbf16>
    "tpu.trace_start"() <{level = 10 : i32, message = "bqd,bkd->bqk"}> : () -> ()
    %cst_71 = arith.constant dense<0.000000e+00> : vector<1x8x8xf32>
    %208 = tpu.matmul %205, %206, %cst_71 {dimension_numbers = #tpu.dot_dimension_numbers<[2], [2], [1], [1], [0, 0, 0, 1, 1, 1], [0], [0]>} : vector<1x8x8xbf16>, vector<1x8x8xbf16>, vector<1x8x8xf32> -> vector<1x8x8xf32>
    "tpu.trace_stop"() : () -> ()
    %cst_72 = arith.constant 0.353553385 : f32
    %209 = vector.broadcast %cst_72 : f32 to vector<1x8x8xf32>
    %210 = arith.mulf %208, %209 : vector<1x8x8xf32>
    %cst_73 = arith.constant dense<0xFF800000> : vector<1x8xf32>
    %211 = vector.multi_reduction <maximumf>, %210, %cst_73 [2] : vector<1x8x8xf32> to vector<1x8xf32>
    %212 = vector.shape_cast %211 : vector<1x8xf32> to vector<1x8x1xf32>
    %213 = vector.broadcast %212 : vector<1x8x1xf32> to vector<1x8x8xf32>
    %214 = arith.subf %210, %213 : vector<1x8x8xf32>
    %215 = math.exp %214 : vector<1x8x8xf32>
    %cst_74 = arith.constant dense<0.000000e+00> : vector<1x8xf32>
    %216 = vector.multi_reduction <add>, %215, %cst_74 [2] : vector<1x8x8xf32> to vector<1x8xf32>
    %217 = vector.shape_cast %216 : vector<1x8xf32> to vector<1x8x1xf32>
    %218 = tpu.reciprocal %217 {approx = true} : vector<1x8x1xf32> -> vector<1x8x1xf32>
    %219 = vector.broadcast %218 : vector<1x8x1xf32> to vector<1x8x8xf32>
    %220 = arith.mulf %215, %219 : vector<1x8x8xf32>
    %221 = arith.truncf %220 : vector<1x8x8xf32> to vector<1x8x8xbf16>
    "tpu.trace_start"() <{level = 10 : i32, message = "bqk,bkd->bqd"}> : () -> ()
    %cst_75 = arith.constant dense<0.000000e+00> : vector<1x8x8xf32>
    %222 = tpu.matmul %221, %207, %cst_75 {dimension_numbers = #tpu.dot_dimension_numbers<[2], [1], [1], [2], [0, 0, 0, 1, 1, 2], [0], [0]>} : vector<1x8x8xbf16>, vector<1x8x8xbf16>, vector<1x8x8xf32> -> vector<1x8x8xf32>
    "tpu.trace_stop"() : () -> ()
    %223 = vector.extract_strided_slice %168 {offsets = [0, 0, 24], sizes = [1, 8, 8], strides = [1, 1, 1]} : vector<1x8x96xbf16> to vector<1x8x8xbf16>
    %224 = vector.extract_strided_slice %168 {offsets = [0, 0, 56], sizes = [1, 8, 8], strides = [1, 1, 1]} : vector<1x8x96xbf16> to vector<1x8x8xbf16>
    %225 = vector.extract_strided_slice %168 {offsets = [0, 0, 88], sizes = [1, 8, 8], strides = [1, 1, 1]} : vector<1x8x96xbf16> to vector<1x8x8xbf16>
    "tpu.trace_start"() <{level = 10 : i32, message = "bqd,bkd->bqk"}> : () -> ()
    %cst_76 = arith.constant dense<0.000000e+00> : vector<1x8x8xf32>
    %226 = tpu.matmul %223, %224, %cst_76 {dimension_numbers = #tpu.dot_dimension_numbers<[2], [2], [1], [1], [0, 0, 0, 1, 1, 1], [0], [0]>} : vector<1x8x8xbf16>, vector<1x8x8xbf16>, vector<1x8x8xf32> -> vector<1x8x8xf32>
    "tpu.trace_stop"() : () -> ()
    %cst_77 = arith.constant 0.353553385 : f32
    %227 = vector.broadcast %cst_77 : f32 to vector<1x8x8xf32>
    %228 = arith.mulf %226, %227 : vector<1x8x8xf32>
    %cst_78 = arith.constant dense<0xFF800000> : vector<1x8xf32>
    %229 = vector.multi_reduction <maximumf>, %228, %cst_78 [2] : vector<1x8x8xf32> to vector<1x8xf32>
    %230 = vector.shape_cast %229 : vector<1x8xf32> to vector<1x8x1xf32>
    %231 = vector.broadcast %230 : vector<1x8x1xf32> to vector<1x8x8xf32>
    %232 = arith.subf %228, %231 : vector<1x8x8xf32>
    %233 = math.exp %232 : vector<1x8x8xf32>
    %cst_79 = arith.constant dense<0.000000e+00> : vector<1x8xf32>
    %234 = vector.multi_reduction <add>, %233, %cst_79 [2] : vector<1x8x8xf32> to vector<1x8xf32>
    %235 = vector.shape_cast %234 : vector<1x8xf32> to vector<1x8x1xf32>
    %236 = tpu.reciprocal %235 {approx = true} : vector<1x8x1xf32> -> vector<1x8x1xf32>
    %237 = vector.broadcast %236 : vector<1x8x1xf32> to vector<1x8x8xf32>
    %238 = arith.mulf %233, %237 : vector<1x8x8xf32>
    %239 = arith.truncf %238 : vector<1x8x8xf32> to vector<1x8x8xbf16>
    "tpu.trace_start"() <{level = 10 : i32, message = "bqk,bkd->bqd"}> : () -> ()
    %cst_80 = arith.constant dense<0.000000e+00> : vector<1x8x8xf32>
    %240 = tpu.matmul %239, %225, %cst_80 {dimension_numbers = #tpu.dot_dimension_numbers<[2], [1], [1], [2], [0, 0, 0, 1, 1, 2], [0], [0]>} : vector<1x8x8xbf16>, vector<1x8x8xbf16>, vector<1x8x8xf32> -> vector<1x8x8xf32>
    "tpu.trace_stop"() : () -> ()
    %241 = tpu.concatenate %186, %204, %222, %240 in 2 : vector<1x8x8xf32>, vector<1x8x8xf32>, vector<1x8x8xf32>, vector<1x8x8xf32> -> vector<1x8x32xf32>
    %242 = vector.shape_cast %241 : vector<1x8x32xf32> to vector<8x32xf32>
    %243 = arith.truncf %242 : vector<8x32xf32> to vector<8x32xbf16>
    %c0_81 = arith.constant 0 : index
    %c4480 = arith.constant 4480 : index
    %244 = vector.load %arg4[%c0_81, %c4480] : memref<32x8704xbf16, #tpu.memory_space<vmem>>, vector<32x32xbf16>
    %cst_82 = arith.constant dense<0.000000e+00> : vector<8x32xf32>
    %245 = tpu.matmul %243, %244, %cst_82 {dimension_numbers = #tpu.dot_dimension_numbers<[1], [0], [0], [1], [0, 0, 1, 1], [], []>} : vector<8x32xbf16>, vector<32x32xbf16>, vector<8x32xf32> -> vector<8x32xf32>
    %c0_83 = arith.constant 0 : index
    %c3200 = arith.constant 3200 : index
    %246 = vector.load %arg5[%c0_83, %c3200] : memref<1x6016xf32, #tpu.memory_space<vmem>>, vector<1x32xf32>
    %247 = vector.broadcast %246 : vector<1x32xf32> to vector<8x32xf32>
    %248 = arith.addf %245, %247 : vector<8x32xf32>
    %c0_84 = arith.constant 0 : index
    %c3328 = arith.constant 3328 : index
    %249 = vector.load %arg5[%c0_84, %c3328] : memref<1x6016xf32, #tpu.memory_space<vmem>>, vector<1x32xf32>
    %c0_85 = arith.constant 0 : index
    %c3456 = arith.constant 3456 : index
    %250 = vector.load %arg5[%c0_85, %c3456] : memref<1x6016xf32, #tpu.memory_space<vmem>>, vector<1x32xf32>
    %251 = arith.addf %160, %248 : vector<8x32xf32>
    %cst_86 = arith.constant dense<0.000000e+00> : vector<8xf32>
    %252 = vector.multi_reduction <add>, %251, %cst_86 [1] : vector<8x32xf32> to vector<8xf32>
    %253 = vector.shape_cast %252 : vector<8xf32> to vector<8x1xf32>
    %cst_87 = arith.constant 3.200000e+01 : f32
    %254 = vector.broadcast %cst_87 : f32 to vector<8x1xf32>
    %255 = arith.divf %253, %254 : vector<8x1xf32>
    %256 = vector.broadcast %255 : vector<8x1xf32> to vector<8x32xf32>
    %257 = arith.subf %251, %256 : vector<8x32xf32>
    %258 = arith.mulf %257, %257 : vector<8x32xf32>
    %cst_88 = arith.constant dense<0.000000e+00> : vector<8xf32>
    %259 = vector.multi_reduction <add>, %258, %cst_88 [1] : vector<8x32xf32> to vector<8xf32>
    %260 = vector.shape_cast %259 : vector<8xf32> to vector<8x1xf32>
    %cst_89 = arith.constant 3.200000e+01 : f32
    %261 = vector.broadcast %cst_89 : f32 to vector<8x1xf32>
    %262 = arith.divf %260, %261 : vector<8x1xf32>
    %cst_90 = arith.constant 9.99999974E-6 : f32
    %263 = vector.broadcast %cst_90 : f32 to vector<8x1xf32>
    %264 = arith.addf %262, %263 : vector<8x1xf32>
    %265 = math.rsqrt %264 : vector<8x1xf32>
    %266 = vector.broadcast %265 : vector<8x1xf32> to vector<8x32xf32>
    %267 = arith.mulf %257, %266 : vector<8x32xf32>
    %268 = vector.broadcast %249 : vector<1x32xf32> to vector<8x32xf32>
    %269 = arith.mulf %267, %268 : vector<8x32xf32>
    %270 = vector.broadcast %250 : vector<1x32xf32> to vector<8x32xf32>
    %271 = arith.addf %269, %270 : vector<8x32xf32>
    %272 = arith.truncf %271 : vector<8x32xf32> to vector<8x32xbf16>
    %c0_91 = arith.constant 0 : index
    %c4608 = arith.constant 4608 : index
    %273 = vector.load %arg4[%c0_91, %c4608] : memref<32x8704xbf16, #tpu.memory_space<vmem>>, vector<32x2048xbf16>
    %cst_92 = arith.constant dense<0.000000e+00> : vector<8x2048xf32>
    %274 = tpu.matmul %272, %273, %cst_92 {dimension_numbers = #tpu.dot_dimension_numbers<[1], [0], [0], [1], [0, 0, 1, 1], [], []>} : vector<8x32xbf16>, vector<32x2048xbf16>, vector<8x2048xf32> -> vector<8x2048xf32>
    %c0_93 = arith.constant 0 : index
    %c3584 = arith.constant 3584 : index
    %275 = vector.load %arg5[%c0_93, %c3584] : memref<1x6016xf32, #tpu.memory_space<vmem>>, vector<1x2048xf32>
    %276 = vector.broadcast %275 : vector<1x2048xf32> to vector<8x2048xf32>
    %277 = arith.addf %274, %276 : vector<8x2048xf32>
    %cst_94 = arith.constant 0.000000e+00 : f32
    %278 = vector.broadcast %cst_94 : f32 to vector<8x2048xf32>
    %279 = arith.maximumf %277, %278 : vector<8x2048xf32>
    %280 = arith.truncf %279 : vector<8x2048xf32> to vector<8x2048xbf16>
    %c0_95 = arith.constant 0 : index
    %c6656 = arith.constant 6656 : index
    %281 = vector.load %arg4[%c0_95, %c6656] : memref<32x8704xbf16, #tpu.memory_space<vmem>>, vector<32x2048xbf16>
    %cst_96 = arith.constant dense<0.000000e+00> : vector<8x32xf32>
    %282 = tpu.matmul %280, %281, %cst_96 {dimension_numbers = #tpu.dot_dimension_numbers<[1], [1], [0], [0], [0, 0, 1, 0], [], []>} : vector<8x2048xbf16>, vector<32x2048xbf16>, vector<8x32xf32> -> vector<8x32xf32>
    %c0_97 = arith.constant 0 : index
    %c5632 = arith.constant 5632 : index
    %283 = vector.load %arg5[%c0_97, %c5632] : memref<1x6016xf32, #tpu.memory_space<vmem>>, vector<1x32xf32>
    %284 = vector.broadcast %283 : vector<1x32xf32> to vector<8x32xf32>
    %285 = arith.addf %282, %284 : vector<8x32xf32>
    %c0_98 = arith.constant 0 : index
    %c5760 = arith.constant 5760 : index
    %286 = vector.load %arg5[%c0_98, %c5760] : memref<1x6016xf32, #tpu.memory_space<vmem>>, vector<1x32xf32>
    %c0_99 = arith.constant 0 : index
    %c5888 = arith.constant 5888 : index
    %287 = vector.load %arg5[%c0_99, %c5888] : memref<1x6016xf32, #tpu.memory_space<vmem>>, vector<1x32xf32>
    %288 = arith.addf %271, %285 : vector<8x32xf32>
    %cst_100 = arith.constant dense<0.000000e+00> : vector<8xf32>
    %289 = vector.multi_reduction <add>, %288, %cst_100 [1] : vector<8x32xf32> to vector<8xf32>
    %290 = vector.shape_cast %289 : vector<8xf32> to vector<8x1xf32>
    %cst_101 = arith.constant 3.200000e+01 : f32
    %291 = vector.broadcast %cst_101 : f32 to vector<8x1xf32>
    %292 = arith.divf %290, %291 : vector<8x1xf32>
    %293 = vector.broadcast %292 : vector<8x1xf32> to vector<8x32xf32>
    %294 = arith.subf %288, %293 : vector<8x32xf32>
    %295 = arith.mulf %294, %294 : vector<8x32xf32>
    %cst_102 = arith.constant dense<0.000000e+00> : vector<8xf32>
    %296 = vector.multi_reduction <add>, %295, %cst_102 [1] : vector<8x32xf32> to vector<8xf32>
    %297 = vector.shape_cast %296 : vector<8xf32> to vector<8x1xf32>
    %cst_103 = arith.constant 3.200000e+01 : f32
    %298 = vector.broadcast %cst_103 : f32 to vector<8x1xf32>
    %299 = arith.divf %297, %298 : vector<8x1xf32>
    %cst_104 = arith.constant 9.99999974E-6 : f32
    %300 = vector.broadcast %cst_104 : f32 to vector<8x1xf32>
    %301 = arith.addf %299, %300 : vector<8x1xf32>
    %302 = math.rsqrt %301 : vector<8x1xf32>
    %303 = vector.broadcast %302 : vector<8x1xf32> to vector<8x32xf32>
    %304 = arith.mulf %294, %303 : vector<8x32xf32>
    %305 = vector.broadcast %286 : vector<1x32xf32> to vector<8x32xf32>
    %306 = arith.mulf %304, %305 : vector<8x32xf32>
    %307 = vector.broadcast %287 : vector<1x32xf32> to vector<8x32xf32>
    %308 = arith.addf %306, %307 : vector<8x32xf32>
    %309 = vector.shape_cast %308 : vector<8x32xf32> to vector<1x8x32xf32>
    %c0_105 = arith.constant 0 : index
    %c0_106 = arith.constant 0 : index
    %c0_107 = arith.constant 0 : index
    %310 = vector.load %arg6[%c0_105, %c0_106, %c0_107] : memref<1x8x32xf32, #tpu.memory_space<vmem>>, vector<1x8x32xf32>
    tpu.vector_store %arg6[%c0_105, %c0_106, %c0_107], %309 {strides = array<i32>} : memref<1x8x32xf32, #tpu.memory_space<vmem>>, vector<1x8x32xf32>,
    return
  }
  func.func @transform_0(%arg0: i32) -> (i32, i32, i32) {
    %c0_i32 = arith.constant 0 : i32
    %c0_i32_0 = arith.constant 0 : i32
    %c0_i32_1 = arith.constant 0 : i32
    return %arg0, %c0_i32, %c0_i32_0 : i32, i32, i32
  }
  func.func @transform_1(%arg0: i32) -> (i32, i32) {
    %c0_i32 = arith.constant 0 : i32
    %c0_i32_0 = arith.constant 0 : i32
    %c0_i32_1 = arith.constant 0 : i32
    return %c0_i32, %c0_i32_0 : i32, i32
  }
  func.func @transform_2(%arg0: i32) -> (i32, i32) {
    %c0_i32 = arith.constant 0 : i32
    %c0_i32_0 = arith.constant 0 : i32
    %c0_i32_1 = arith.constant 0 : i32
    return %c0_i32, %c0_i32_0 : i32, i32
  }
  func.func @transform_3(%arg0: i32) -> (i32, i32) {
    %c0_i32 = arith.constant 0 : i32
    %c0_i32_0 = arith.constant 0 : i32
    %c0_i32_1 = arith.constant 0 : i32
    return %c0_i32, %c0_i32_0 : i32, i32
  }
  func.func @transform_4(%arg0: i32) -> (i32, i32) {
    %c0_i32 = arith.constant 0 : i32
    %c0_i32_0 = arith.constant 0 : i32
    %c0_i32_1 = arith.constant 0 : i32
    return %c0_i32, %c0_i32_0 : i32, i32
  }
  func.func @transform_5(%arg0: i32) -> (i32, i32, i32) {
    %c0_i32 = arith.constant 0 : i32
    %c0_i32_0 = arith.constant 0 : i32
    %c0_i32_1 = arith.constant 0 : i32
    return %arg0, %c0_i32, %c0_i32_0 : i32, i32, i32
  }
}

</mosaic_0001>

<llo_original>
// kernel: _unnamed_function_.1
$region0: #{_unnamed_function_.1}
  #allocation0 [shape = 'u32[]', space=smem, size = 0x4, offset = 0x4, fixed_abs, tag = 'smem constant byte address 0x4 - core index']
  #allocation1 [shape = 'u32[144,128]{1,0:T(1,128)}', space=vmem, size = 0x12000, scoped, tag = 'internal scratch']
  %s0 = inlined_call_operand.vmem [shape: f32[2,8,48], index: 0, kind: input, shape index: {}]
  %s1 = inlined_call_operand.vmem [shape: f32[8,32], index: 1, kind: input, shape index: {}]
  %s2 = inlined_call_operand.vmem [shape: bf16[48,32], index: 2, kind: input, shape index: {}]
  %s3 = inlined_call_operand.vmem [shape: bf16[32,8704], index: 3, kind: input, shape index: {}]
  %s4 = inlined_call_operand.vmem [shape: f32[1,6016], index: 4, kind: input, shape index: {}]
  %s5 = inlined_call_operand.vmem [shape: f32[2,8,32], index: 5, kind: output, shape index: {}]
  %s6 = sld [smem:[#allocation0]]
  $region53: #{_unnamed_function_.1} parent=0
    _
  %s8 = ssub.s32 1, %s6
  %s9 = scalar_select 0, %s8, %s6
  loop: start=0, step=1, limit=4
  $region2: #{_unnamed_function_.1} parent=0 // loop_pre_header
    _
  $region3: #{_unnamed_function_.1} parent=0 // loop_header
    %s11 = sphi 0, %s15
    %p12 = scmp.ge.s32.totalorder %s11, 4
    %s21 = sphi 0, %s23
    %s24 = sphi 0, %s21
    %s25 = sphi 0, %s24
    %s41 = sphi 0, %s25
    %s45 = sphi 0, %s45
    %s47 = sphi 0, %s45
    %s48 = sphi 0, %s47
    %s62 = sphi 0, %s48
    %s66 = sphi 0, %s66
    %s68 = sphi 0, %s66
    %s69 = sphi 0, %s68
    %s83 = sphi 0, %s69
    %s87 = sphi 0, %s87
    %s89 = sphi 0, %s87
    %s90 = sphi 0, %s89
    %s104 = sphi 0, %s90
    %s108 = sphi 0, %s108
    %s110 = sphi 0, %s108
    %s111 = sphi 0, %s110
    %s125 = sphi 0, %s111
    %s131 = sphi 0, %s133
    %s134 = sphi 0, %s131
    %s135 = sphi 0, %s134
    %s151 = sphi 0, %s135
  $region4: #{_unnamed_function_.1} parent=0 // loop_header_branch
    %14 = sbr.rel (%p12) target = $region8
  $region5: #{_unnamed_function_.1} parent=0 // loop_body
    %s16 = ssub.s32 %s11, 1
    %s17 = ssub.s32 %s11, 2
    %s18 = sadd.s32 %s11, 1
    %s19 = ssub.s32 %s11, %s18
    %p20 = scmp.eq.s32.totalorder %s19, 0
    %s22 = sadd.s32 %s21, 1
    %s23 = scalar_select %p20, %s21, %s22
    %p26 = pneg %p20
    %p27 = scmp.eq.s32.totalorder %s11, 1
    %p28 = por %p26, %p27
    %p29 = scmp.ne.s32.totalorder %s21, %s24
    %p30 = scmp.eq.s32.totalorder %s11, 0
    %p31 = por %p29, %p30
    %p32 = scmp.ne.s32.totalorder %s21, %s24
    %p33 = scmp.eq.s32.totalorder %s16, 1
    %p34 = por %p32, %p33
    %p35 = scmp.ne.s32.totalorder %s24, %s25
    %p36 = scmp.eq.s32.totalorder %s16, 0
    %p37 = por %p35, %p36
    %p38 = scmp.ne.s32.totalorder %s24, %s25
    %p39 = scmp.eq.s32.totalorder %s17, 1
    %p40 = por %p38, %p39
    %p42 = scmp.ne.s32.totalorder %s25, %s41
    %p43 = scmp.eq.s32.totalorder %s17, 0
    %p44 = por %p42, %p43
    %s46 = sadd.s32 %s45, 1
    %p49 = scmp.eq.s32.totalorder %s11, 1
    %p50 = scmp.ne.s32.totalorder %s45, %s47
    %p51 = scmp.eq.s32.totalorder %s11, 0
    %p52 = por %p50, %p51
    %p53 = scmp.ne.s32.totalorder %s45, %s47
    %p54 = scmp.eq.s32.totalorder %s16, 1
    %p55 = por %p53, %p54
    %p56 = scmp.ne.s32.totalorder %s47, %s48
    %p57 = scmp.eq.s32.totalorder %s16, 0
    %p58 = por %p56, %p57
    %p59 = scmp.ne.s32.totalorder %s47, %s48
    %p60 = scmp.eq.s32.totalorder %s17, 1
    %p61 = por %p59, %p60
    %p63 = scmp.ne.s32.totalorder %s48, %s62
    %p64 = scmp.eq.s32.totalorder %s17, 0
    %p65 = por %p63, %p64
    %s67 = sadd.s32 %s66, 1
    %p70 = scmp.eq.s32.totalorder %s11, 1
    %p71 = scmp.ne.s32.totalorder %s66, %s68
    %p72 = scmp.eq.s32.totalorder %s11, 0
    %p73 = por %p71, %p72
    %p74 = scmp.ne.s32.totalorder %s66, %s68
    %p75 = scmp.eq.s32.totalorder %s16, 1
    %p76 = por %p74, %p75
    %p77 = scmp.ne.s32.totalorder %s68, %s69
    %p78 = scmp.eq.s32.totalorder %s16, 0
    %p79 = por %p77, %p78
    %p80 = scmp.ne.s32.totalorder %s68, %s69
    %p81 = scmp.eq.s32.totalorder %s17, 1
    %p82 = por %p80, %p81
    %p84 = scmp.ne.s32.totalorder %s69, %s83
    %p85 = scmp.eq.s32.totalorder %s17, 0
    %p86 = por %p84, %p85
    %s88 = sadd.s32 %s87, 1
    %p91 = scmp.eq.s32.totalorder %s11, 1
    %p92 = scmp.ne.s32.totalorder %s87, %s89
    %p93 = scmp.eq.s32.totalorder %s11, 0
    %p94 = por %p92, %p93
    %p95 = scmp.ne.s32.totalorder %s87, %s89
    %p96 = scmp.eq.s32.totalorder %s16, 1
    %p97 = por %p95, %p96
    %p98 = scmp.ne.s32.totalorder %s89, %s90
    %p99 = scmp.eq.s32.totalorder %s16, 0
    %p100 = por %p98, %p99
    %p101 = scmp.ne.s32.totalorder %s89, %s90
    %p102 = scmp.eq.s32.totalorder %s17, 1
    %p103 = por %p101, %p102
    %p105 = scmp.ne.s32.totalorder %s90, %s104
    %p106 = scmp.eq.s32.totalorder %s17, 0
    %p107 = por %p105, %p106
    %s109 = sadd.s32 %s108, 1
    %p112 = scmp.eq.s32.totalorder %s11, 1
    %p113 = scmp.ne.s32.totalorder %s108, %s110
    %p114 = scmp.eq.s32.totalorder %s11, 0
    %p115 = por %p113, %p114
    %p116 = scmp.ne.s32.totalorder %s108, %s110
    %p117 = scmp.eq.s32.totalorder %s16, 1
    %p118 = por %p116, %p117
    %p119 = scmp.ne.s32.totalorder %s110, %s111
    %p120 = scmp.eq.s32.totalorder %s16, 0
    %p121 = por %p119, %p120
    %p122 = scmp.ne.s32.totalorder %s110, %s111
    %p123 = scmp.eq.s32.totalorder %s17, 1
    %p124 = por %p122, %p123
    %p126 = scmp.ne.s32.totalorder %s111, %s125
    %p127 = scmp.eq.s32.totalorder %s17, 0
    %p128 = por %p126, %p127
    %s129 = ssub.s32 %s11, %s18
    %p130 = scmp.eq.s32.totalorder %s129, 0
    %s132 = sadd.s32 %s131, 1
    %s133 = scalar_select %p130, %s131, %s132
    %p136 = pneg %p130
    %p137 = scmp.eq.s32.totalorder %s11, 1
    %p138 = por %p136, %p137
    %p139 = scmp.ne.s32.totalorder %s131, %s134
    %p140 = scmp.eq.s32.totalorder %s11, 0
    %p141 = por %p139, %p140
    %p142 = scmp.ne.s32.totalorder %s131, %s134
    %p143 = scmp.eq.s32.totalorder %s16, 1
    %p144 = por %p142, %p143
    %p145 = scmp.ne.s32.totalorder %s134, %s135
    %p146 = scmp.eq.s32.totalorder %s16, 0
    %p147 = por %p145, %p146
    %p148 = scmp.ne.s32.totalorder %s134, %s135
    %p149 = scmp.eq.s32.totalorder %s17, 1
    %p150 = por %p148, %p149
    %p152 = scmp.ne.s32.totalorder %s135, %s151
    %p153 = scmp.eq.s32.totalorder %s17, 0
    %p154 = por %p152, %p153
    %p155 = scmp.le.s32.totalorder 1, %s11
    %p156 = scmp.lt.s32.totalorder %s11, 3
    %p157 = pnand %p155, %p156
    %p158 = pneg %p157
    // Predicated region
    $region9: #{_unnamed_function_.1} parent=5 // pred_check
      _
    $region10: #{_unnamed_function_.1} parent=5 // pred_check_branch
      %160 = sbr.rel (%p157) target = $region12
    $region11: #{_unnamed_function_.1} parent=5 // pred_region
      %s161 = ssub.s32 %s11, 1
      // Predicated region
      $region13: #{_unnamed_function_.1} parent=11 // pred_check
        %p162 = pneg %p58
      $region14: #{_unnamed_function_.1} parent=11 // pred_check_branch
        %164 = sbr.rel (%p162) target = $region16
      $region15: #{_unnamed_function_.1} parent=11 // pred_region
        _
      $region16: #{_unnamed_function_.1} parent=11 // pred_fallthru
        _
      // Predicated region
      $region17: #{_unnamed_function_.1} parent=11 // pred_check
        %p165 = pneg %p79
      $region18: #{_unnamed_function_.1} parent=11 // pred_check_branch
        %167 = sbr.rel (%p165) target = $region20
      $region19: #{_unnamed_function_.1} parent=11 // pred_region
        _
      $region20: #{_unnamed_function_.1} parent=11 // pred_fallthru
        _
      // Predicated region
      $region21: #{_unnamed_function_.1} parent=11 // pred_check
        %p168 = pneg %p100
      $region22: #{_unnamed_function_.1} parent=11 // pred_check_branch
        %170 = sbr.rel (%p168) target = $region24
      $region23: #{_unnamed_function_.1} parent=11 // pred_region
        _
      $region24: #{_unnamed_function_.1} parent=11 // pred_fallthru
        _
      // Predicated region
      $region25: #{_unnamed_function_.1} parent=11 // pred_check
        %p171 = pneg %p121
      $region26: #{_unnamed_function_.1} parent=11 // pred_check_branch
        %173 = sbr.rel (%p171) target = $region28
      $region27: #{_unnamed_function_.1} parent=11 // pred_region
        _
      $region28: #{_unnamed_function_.1} parent=11 // pred_fallthru
        _
    $region12: #{_unnamed_function_.1} parent=5 // pred_fallthru
      _
    %p174 = scmp.lt.s32.totalorder %s11, 2
    // Predicated region
    $region29: #{_unnamed_function_.1} parent=5 // pred_check
      %p175 = pneg %p174
    $region30: #{_unnamed_function_.1} parent=5 // pred_check_branch
      %177 = sbr.rel (%p175) target = $region32
    $region31: #{_unnamed_function_.1} parent=5 // pred_region
      // Predicated region
      $region33: #{_unnamed_function_.1} parent=31 // pred_check
        %p178 = pneg %p31
      $region34: #{_unnamed_function_.1} parent=31 // pred_check_branch
        %180 = sbr.rel (%p178) target = $region36
      $region35: #{_unnamed_function_.1} parent=31 // pred_region
        %p181 = scmp.lt.s32.totalorder %s11, 1
        %s182 = scalar_select %p181, %s11, 1
        %s183 = smul.addr %s182, 8
        %s184 = scalar_lea.vmem %s0, %s183
      $region36: #{_unnamed_function_.1} parent=31 // pred_fallthru
        _
    $region32: #{_unnamed_function_.1} parent=5 // pred_fallthru
      _
    %p185 = scmp.le.s32.totalorder 1, %s11
    %p186 = scmp.lt.s32.totalorder %s11, 3
    %p187 = pnand %p185, %p186
    %p188 = pneg %p187
    // Predicated region
    $region37: #{_unnamed_function_.1} parent=5 // pred_check
      _
    $region38: #{_unnamed_function_.1} parent=5 // pred_check_branch
      %190 = sbr.rel (%p187) target = $region40
    $region39: #{_unnamed_function_.1} parent=5 // pred_region
      %s191 = ssub.s32 %s11, 1
      %p192 = scmp.lt.s32.totalorder %s16, 1
      %s193 = scalar_select %p192, %s16, 1
      %s194 = smul.addr %s193, 8
      %s195 = scalar_lea.vmem %s0, %s194
      %p196 = pneg %p37
      %p197 = pneg %p34
      %p198 = pneg %p58
      %p199 = pneg %p55
      %p200 = pneg %p79
      %p201 = pneg %p76
      %p202 = pneg %p100
      %p203 = pneg %p97
      %p204 = pneg %p121
      %p205 = pneg %p118
      %p206 = pneg %p147
      %p207 = pneg %p144
      %p208 = scmp.lt.s32.totalorder %s16, 1
      %s209 = scalar_select %p208, %s16, 1
      %s210 = smul.addr %s209, 8
      %s211 = scalar_lea.vmem %s5, %s210
      %p212 = scmp.lt.s32.totalorder %s16, 1
      %s213 = scalar_select %p212, %s16, 1
      %s214 = smul.addr %s213, 8
      %s215 = scalar_lea.vmem %s0, %s214
      %p216 = scmp.lt.s32.totalorder %s16, 1
      %s217 = scalar_select %p216, %s16, 1
      %s218 = smul.addr %s217, 8
      %s219 = scalar_lea.vmem %s5, %s218
      %v221 = vld [vmem:[%s215] sm:$0xff]
      %v222 = vpack.c.bf16 %v221, %v221
      %v223 = vld [vmem:[%s2] sm:$0xf]
      %v224 = vld [vmem:[%s2 + $0x4] sm:$0xf]
      %v225 = vld [vmem:[%s2 + $0x8] sm:$0xf]
      %v226 = vld [vmem:[%s2 + $0xc] sm:$0xf]
      %v227 = vld [vmem:[%s2 + $0x10] sm:$0xf]
      %v228 = vld [vmem:[%s2 + $0x14] sm:$0xf]
      %v229 = vld [vmem:[%s4] sm:$0x1]
      %v231 = vlaneseq
      %v232 = vshrl.u32 %v231, 7
      %v233 = vsub.s32 0, %v232
      %v234 = vrot.slane %v229, %v233
      %v242 = vunpack.c.l.b16 %v223
      %v243 = vunpack.c.l.b16 %v224
      %v244 = vunpack.c.l.b16 %v225
      %v245 = vunpack.c.l.b16 %v226
      %v246 = vunpack.c.l.b16 %v227
      %v247 = vunpack.c.l.b16 %v228
      %v248 = vpack.c.b16 %v243, %v242
      %v249 = vpack.c.b16 %v245, %v244
      %v250 = vpack.c.b16 %v247, %v246
      %vm254 = vcmask 392192
      %v256 = vsel %vm254, %v222, 0
      %258 = vmatprep.subr.bf16.mxu0 0
      %259 = vmatpush1.bf16.msra.mxu0 %v248
      %260 = vmatprep.subr.bf16.mxu0 0
      %261 = vmatpush1.bf16.msra.mxu0 %v249
      %262 = vmatprep.subr.bf16.mxu0 0
      %263 = vmatpush1.bf16.msra.mxu0 %v250
      %264 = vmatprep.subr.bf16.mxu0 0
      %265 = vmatpush1.bf16.msra.mxu0 0
      %266 = vmatprep.subr.bf16.mxu0 0
      %267 = vmatpush1.bf16.msra.mxu0 0
      %268 = vmatprep.subr.bf16.mxu0 0
      %269 = vmatpush1.bf16.msra.mxu0 0
      %270 = vmatprep.subr.bf16.mxu0 0
      %271 = vmatpush1.bf16.msra.mxu0 0
      %272 = vmatprep.subr.bf16.mxu0 0
      %273 = vmatpush1.bf16.msra.mxu0 0
      %274 = vmatprep.subr.bf16.mxu0 0
      %275 = vmatpush1.bf16.msra.mxu0 0
      %276 = vmatprep.subr.bf16.mxu0 0
      %277 = vmatpush1.bf16.msra.mxu0 0
      %278 = vmatprep.subr.bf16.mxu0 0
      %279 = vmatpush1.bf16.msra.mxu0 0
      %280 = vmatprep.subr.bf16.mxu0 0
      %281 = vmatpush1.bf16.msra.mxu0 0
      %282 = vmatprep.subr.bf16.mxu0 0
      %283 = vmatpush1.bf16.msra.mxu0 0
      %284 = vmatprep.subr.bf16.mxu0 0
      %285 = vmatpush1.bf16.msra.mxu0 0
      %286 = vmatprep.subr.bf16.mxu0 0
      %287 = vmatpush1.bf16.msra.mxu0 0
      %288 = vmatprep.subr.bf16.mxu0 0
      %289 = vmatpush1.bf16.msra.mxu0 0
      %290 = vmatprep.mubr.bf16.mxu0 0
      %291 = vmatmul.mubr.bf16.gmra.mrb[0].mxu0 %v256
      %v292 = vpop.f32.mrb[0].mxu0
      %v293 = vadd.f32 %v234, %v292
      %v294 = vpop.f32.mrb[0].mxu0
      %v295 = vpop.f32.mrb[0].mxu0
      %v296 = vpop.f32.mrb[0].mxu0
      %297 = vdwg.mxu0
      %v298 = vld [vmem:[%s1] sm:$0xff]
      %v299 = vadd.f32 %v293, %v298
      %v300 = vpack.c.bf16 %v299, %v299
      %v301 = vld [vmem:[%s3] sm:$0xf]
      %v302 = vld [vmem:[%s3 + $0x110] sm:$0xf]
      %v303 = vld [vmem:[%s3 + $0x220] sm:$0xf]
      %v304 = vld [vmem:[%s3 + $0x330] sm:$0xf]
      %v305 = vld [vmem:[%s4 + $0x1] sm:$0x1]
      %v307 = vlaneseq
      %v308 = vshrl.u32 %v307, 7
      %v309 = vsub.s32 0, %v308
      %v310 = vrot.slane %v305, %v309
      %v316 = vunpack.c.l.b16 %v301
      %v317 = vunpack.c.l.b16 %v302
      %v318 = vunpack.c.l.b16 %v303
      %v319 = vunpack.c.l.b16 %v304
      %v320 = vpack.c.b16 %v317, %v316
      %v321 = vpack.c.b16 %v319, %v318
      %vm324 = vcmask 261120
      %v326 = vsel %vm324, %v300, 0
      %328 = vmatprep.subr.bf16.mxu0 0
      %329 = vmatpush1.bf16.msra.mxu0 %v320
      %330 = vmatprep.subr.bf16.mxu0 0
      %331 = vmatpush1.bf16.msra.mxu0 %v321
      %332 = vmatprep.subr.bf16.mxu0 0
      %333 = vmatpush1.bf16.msra.mxu0 0
      %334 = vmatprep.subr.bf16.mxu0 0
      %335 = vmatpush1.bf16.msra.mxu0 0
      %336 = vmatprep.subr.bf16.mxu0 0
      %337 = vmatpush1.bf16.msra.mxu0 0
      %338 = vmatprep.subr.bf16.mxu0 0
      %339 = vmatpush1.bf16.msra.mxu0 0
      %340 = vmatprep.subr.bf16.mxu0 0
      %341 = vmatpush1.bf16.msra.mxu0 0
      %342 = vmatprep.subr.bf16.mxu0 0
      %343 = vmatpush1.bf16.msra.mxu0 0
      %344 = vmatprep.subr.bf16.mxu0 0
      %345 = vmatpush1.bf16.msra.mxu0 0
      %346 = vmatprep.subr.bf16.mxu0 0
      %347 = vmatpush1.bf16.msra.mxu0 0
      %348 = vmatprep.subr.bf16.mxu0 0
      %349 = vmatpush1.bf16.msra.mxu0 0
      %350 = vmatprep.subr.bf16.mxu0 0
      %351 = vmatpush1.bf16.msra.mxu0 0
      %352 = vmatprep.subr.bf16.mxu0 0
      %353 = vmatpush1.bf16.msra.mxu0 0
      %354 = vmatprep.subr.bf16.mxu0 0
      %355 = vmatpush1.bf16.msra.mxu0 0
      %356 = vmatprep.subr.bf16.mxu0 0
      %357 = vmatpush1.bf16.msra.mxu0 0
      %358 = vmatprep.subr.bf16.mxu0 0
      %359 = vmatpush1.bf16.msra.mxu0 0
      %360 = vmatprep.mubr.bf16.mxu0 0
      %361 = vmatmul.mubr.bf16.gmra.mrb[0].mxu0 %v326
      %v362 = vpop.f32.mrb[0].mxu0
      %v363 = vadd.f32 %v310, %v362
      %v364 = vpop.f32.mrb[0].mxu0
      %v365 = vpop.f32.mrb[0].mxu0
      %v366 = vpop.f32.mrb[0].mxu0
      %367 = vdwg.mxu0
      %v368 = vpack.c.bf16 %v363, %v363
      %370 = vrot.lane.b32.xlu0 %v368, 96
      %v371 = vpop.permute.xlu0 %370
      %vm372 = vcmask 64512
      %v374 = vsel %vm372, %v368, 0
      %v377 = vsel %vm372, %v371, 0
      %379 = vmatprep.subr.bf16.mxu0 0
      %380 = vmatpush1.bf16.xpose.msra.mxu0 %v377
      %381 = vmatprep.subr.bf16.mxu0 0
      %382 = vmatpush1.bf16.xpose.msra.mxu0 0
      %383 = vmatprep.subr.bf16.mxu0 0
      %384 = vmatpush1.bf16.xpose.msra.mxu0 0
      %385 = vmatprep.subr.bf16.mxu0 0
      %386 = vmatpush1.bf16.xpose.msra.mxu0 0
      %387 = vmatprep.subr.bf16.mxu0 0
      %388 = vmatpush1.bf16.xpose.msra.mxu0 0
      %389 = vmatprep.subr.bf16.mxu0 0
      %390 = vmatpush1.bf16.xpose.msra.mxu0 0
      %391 = vmatprep.subr.bf16.mxu0 0
      %392 = vmatpush1.bf16.xpose.msra.mxu0 0
      %393 = vmatprep.subr.bf16.mxu0 0
      %394 = vmatpush1.bf16.xpose.msra.mxu0 0
      %395 = vmatprep.subr.bf16.mxu0 0
      %396 = vmatpush1.bf16.xpose.msra.mxu0 0
      %397 = vmatprep.subr.bf16.mxu0 0
      %398 = vmatpush1.bf16.xpose.msra.mxu0 0
      %399 = vmatprep.subr.bf16.mxu0 0
      %400 = vmatpush1.bf16.xpose.msra.mxu0 0
      %401 = vmatprep.subr.bf16.mxu0 0
      %402 = vmatpush1.bf16.xpose.msra.mxu0 0
      %403 = vmatprep.subr.bf16.mxu0 0
      %404 = vmatpush1.bf16.xpose.msra.mxu0 0
      %405 = vmatprep.subr.bf16.mxu0 0
      %406 = vmatpush1.bf16.xpose.msra.mxu0 0
      %407 = vmatprep.subr.bf16.mxu0 0
      %408 = vmatpush1.bf16.xpose.msra.mxu0 0
      %409 = vmatprep.subr.bf16.mxu0 0
      %410 = vmatpush1.bf16.xpose.msra.mxu0 0
      %411 = vmatprep.mubr.bf16.mxu0 0
      %412 = vmatmul.mubr.bf16.gmra.mrb[0].mxu0 %v374
      %v413 = vpop.f32.mrb[0].mxu0
      %v414 = vadd.f32 0.0, %v413
      %v415 = vpop.f32.mrb[0].mxu0
      %v416 = vpop.f32.mrb[0].mxu0
      %v417 = vpop.f32.mrb[0].mxu0
      %418 = vdwg.mxu0
      %v419 = vmul.f32 %v414, 0.35355338
      %v420 = vsel %vm372, %v419, -inf
      %421 = vmax.xlane.f32.xlu0 %v420
      %v422 = vpop.xlane.xlu0 %421
      %v423 = vsub.f32 %v419, %v422
      %v424 = vmul.f32 %v423, 1.442695
      %v425 = vpow.pop %v424
      %v426 = vsel %vm372, %v425, 0.0
      %427 = vadd.xlane.f32.xlu0 %v426
      %v428 = vpop.xlane.xlu0 %427
      %v429 = vrcp.pop %v428
      %v430 = vmul.f32 %v425, %v429
      %v431 = vpack.c.bf16 %v430, %v430
      %432 = vrot.lane.b32.xlu0 %v368, 64
      %v433 = vpop.permute.xlu0 %432
      %v435 = vsel %vm372, %v431, 0
      %vm437 = vcmask 1043456
      %v439 = vsel %vm437, %v433, 0
      %441 = vmatprep.subr.bf16.mxu0 0
      %442 = vmatpush1.bf16.msra.mxu0 %v439
      %443 = vmatprep.subr.bf16.mxu0 0
      %444 = vmatpush1.bf16.msra.mxu0 0
      %445 = vmatprep.subr.bf16.mxu0 0
      %446 = vmatpush1.bf16.msra.mxu0 0
      %447 = vmatprep.subr.bf16.mxu0 0
      %448 = vmatpush1.bf16.msra.mxu0 0
      %449 = vmatprep.subr.bf16.mxu0 0
      %450 = vmatpush1.bf16.msra.mxu0 0
      %451 = vmatprep.subr.bf16.mxu0 0
      %452 = vmatpush1.bf16.msra.mxu0 0
      %453 = vmatprep.subr.bf16.mxu0 0
      %454 = vmatpush1.bf16.msra.mxu0 0
      %455 = vmatprep.subr.bf16.mxu0 0
      %456 = vmatpush1.bf16.msra.mxu0 0
      %457 = vmatprep.subr.bf16.mxu0 0
      %458 = vmatpush1.bf16.msra.mxu0 0
      %459 = vmatprep.subr.bf16.mxu0 0
      %460 = vmatpush1.bf16.msra.mxu0 0
      %461 = vmatprep.subr.bf16.mxu0 0
      %462 = vmatpush1.bf16.msra.mxu0 0
      %463 = vmatprep.subr.bf16.mxu0 0
      %464 = vmatpush1.bf16.msra.mxu0 0
      %465 = vmatprep.subr.bf16.mxu0 0
      %466 = vmatpush1.bf16.msra.mxu0 0
      %467 = vmatprep.subr.bf16.mxu0 0
      %468 = vmatpush1.bf16.msra.mxu0 0
      %469 = vmatprep.subr.bf16.mxu0 0
      %470 = vmatpush1.bf16.msra.mxu0 0
      %471 = vmatprep.subr.bf16.mxu0 0
      %472 = vmatpush1.bf16.msra.mxu0 0
      %473 = vmatprep.mubr.bf16.mxu0 0
      %474 = vmatmul.mubr.bf16.gmra.mrb[0].mxu0 %v435
      %v475 = vpop.f32.mrb[0].mxu0
      %v476 = vadd.f32 0.0, %v475
      %v477 = vpop.f32.mrb[0].mxu0
      %v478 = vpop.f32.mrb[0].mxu0
      %v479 = vpop.f32.mrb[0].mxu0
      %480 = vdwg.mxu0
      %481 = vrot.lane.b32.xlu0 %v368, 120
      %v482 = vpop.permute.xlu0 %481
      %483 = vrot.lane.b32.xlu0 %v368, 88
      %v484 = vpop.permute.xlu0 %483
      %v486 = vsel %vm372, %v482, 0
      %v489 = vsel %vm372, %v484, 0
      %491 = vmatprep.subr.bf16.mxu0 0
      %492 = vmatpush1.bf16.xpose.msra.mxu0 %v489
      %493 = vmatprep.subr.bf16.mxu0 0
      %494 = vmatpush1.bf16.xpose.msra.mxu0 0
      %495 = vmatprep.subr.bf16.mxu0 0
      %496 = vmatpush1.bf16.xpose.msra.mxu0 0
      %497 = vmatprep.subr.bf16.mxu0 0
      %498 = vmatpush1.bf16.xpose.msra.mxu0 0
      %499 = vmatprep.subr.bf16.mxu0 0
      %500 = vmatpush1.bf16.xpose.msra.mxu0 0
      %501 = vmatprep.subr.bf16.mxu0 0
      %502 = vmatpush1.bf16.xpose.msra.mxu0 0
      %503 = vmatprep.subr.bf16.mxu0 0
      %504 = vmatpush1.bf16.xpose.msra.mxu0 0
      %505 = vmatprep.subr.bf16.mxu0 0
      %506 = vmatpush1.bf16.xpose.msra.mxu0 0
      %507 = vmatprep.subr.bf16.mxu0 0
      %508 = vmatpush1.bf16.xpose.msra.mxu0 0
      %509 = vmatprep.subr.bf16.mxu0 0
      %510 = vmatpush1.bf16.xpose.msra.mxu0 0
      %511 = vmatprep.subr.bf16.mxu0 0
      %512 = vmatpush1.bf16.xpose.msra.mxu0 0
      %513 = vmatprep.subr.bf16.mxu0 0
      %514 = vmatpush1.bf16.xpose.msra.mxu0 0
      %515 = vmatprep.subr.bf16.mxu0 0
      %516 = vmatpush1.bf16.xpose.msra.mxu0 0
      %517 = vmatprep.subr.bf16.mxu0 0
      %518 = vmatpush1.bf16.xpose.msra.mxu0 0
      %519 = vmatprep.subr.bf16.mxu0 0
      %520 = vmatpush1.bf16.xpose.msra.mxu0 0
      %521 = vmatprep.subr.bf16.mxu0 0
      %522 = vmatpush1.bf16.xpose.msra.mxu0 0
      %523 = vmatprep.mubr.bf16.mxu0 0
      %524 = vmatmul.mubr.bf16.gmra.mrb[0].mxu0 %v486
      %v525 = vpop.f32.mrb[0].mxu0
      %v526 = vadd.f32 0.0, %v525
      %v527 = vpop.f32.mrb[0].mxu0
      %v528 = vpop.f32.mrb[0].mxu0
      %v529 = vpop.f32.mrb[0].mxu0
      %530 = vdwg.mxu0
      %v531 = vmul.f32 %v526, 0.35355338
      %v532 = vsel %vm372, %v531, -inf
      %533 = vmax.xlane.f32.xlu0 %v532
      %v534 = vpop.xlane.xlu0 %533
      %v535 = vsub.f32 %v531, %v534
      %v536 = vmul.f32 %v535, 1.442695
      %v537 = vpow.pop %v536
      %v538 = vsel %vm372, %v537, 0.0
      %539 = vadd.xlane.f32.xlu0 %v538
      %v540 = vpop.xlane.xlu0 %539
      %v541 = vrcp.pop %v540
      %v542 = vmul.f32 %v537, %v541
      %v543 = vpack.c.bf16 %v542, %v542
      %544 = vrot.lane.b32.xlu0 %v368, 56
      %v545 = vpop.permute.xlu0 %544
      %v547 = vsel %vm372, %v543, 0
      %v550 = vsel %vm437, %v545, 0
      %552 = vmatprep.subr.bf16.mxu0 0
      %553 = vmatpush1.bf16.msra.mxu0 %v550
      %554 = vmatprep.subr.bf16.mxu0 0
      %555 = vmatpush1.bf16.msra.mxu0 0
      %556 = vmatprep.subr.bf16.mxu0 0
      %557 = vmatpush1.bf16.msra.mxu0 0
      %558 = vmatprep.subr.bf16.mxu0 0
      %559 = vmatpush1.bf16.msra.mxu0 0
      %560 = vmatprep.subr.bf16.mxu0 0
      %561 = vmatpush1.bf16.msra.mxu0 0
      %562 = vmatprep.subr.bf16.mxu0 0
      %563 = vmatpush1.bf16.msra.mxu0 0
      %564 = vmatprep.subr.bf16.mxu0 0
      %565 = vmatpush1.bf16.msra.mxu0 0
      %566 = vmatprep.subr.bf16.mxu0 0
      %567 = vmatpush1.bf16.msra.mxu0 0
      %568 = vmatprep.subr.bf16.mxu0 0
      %569 = vmatpush1.bf16.msra.mxu0 0
      %570 = vmatprep.subr.bf16.mxu0 0
      %571 = vmatpush1.bf16.msra.mxu0 0
      %572 = vmatprep.subr.bf16.mxu0 0
      %573 = vmatpush1.bf16.msra.mxu0 0
      %574 = vmatprep.subr.bf16.mxu0 0
      %575 = vmatpush1.bf16.msra.mxu0 0
      %576 = vmatprep.subr.bf16.mxu0 0
      %577 = vmatpush1.bf16.msra.mxu0 0
      %578 = vmatprep.subr.bf16.mxu0 0
      %579 = vmatpush1.bf16.msra.mxu0 0
      %580 = vmatprep.subr.bf16.mxu0 0
      %581 = vmatpush1.bf16.msra.mxu0 0
      %582 = vmatprep.subr.bf16.mxu0 0
      %583 = vmatpush1.bf16.msra.mxu0 0
      %584 = vmatprep.mubr.bf16.mxu0 0
      %585 = vmatmul.mubr.bf16.gmra.mrb[0].mxu0 %v547
      %v586 = vpop.f32.mrb[0].mxu0
      %v587 = vadd.f32 0.0, %v586
      %v588 = vpop.f32.mrb[0].mxu0
      %v589 = vpop.f32.mrb[0].mxu0
      %v590 = vpop.f32.mrb[0].mxu0
      %591 = vdwg.mxu0
      %592 = vrot.lane.b32.xlu0 %v368, 112
      %v593 = vpop.permute.xlu0 %592
      %594 = vrot.lane.b32.xlu0 %v368, 80
      %v595 = vpop.permute.xlu0 %594
      %v597 = vsel %vm372, %v593, 0
      %v600 = vsel %vm372, %v595, 0
      %602 = vmatprep.subr.bf16.mxu0 0
      %603 = vmatpush1.bf16.xpose.msra.mxu0 %v600
      %604 = vmatprep.subr.bf16.mxu0 0
      %605 = vmatpush1.bf16.xpose.msra.mxu0 0
      %606 = vmatprep.subr.bf16.mxu0 0
      %607 = vmatpush1.bf16.xpose.msra.mxu0 0
      %608 = vmatprep.subr.bf16.mxu0 0
      %609 = vmatpush1.bf16.xpose.msra.mxu0 0
      %610 = vmatprep.subr.bf16.mxu0 0
      %611 = vmatpush1.bf16.xpose.msra.mxu0 0
      %612 = vmatprep.subr.bf16.mxu0 0
      %613 = vmatpush1.bf16.xpose.msra.mxu0 0
      %614 = vmatprep.subr.bf16.mxu0 0
      %615 = vmatpush1.bf16.xpose.msra.mxu0 0
      %616 = vmatprep.subr.bf16.mxu0 0
      %617 = vmatpush1.bf16.xpose.msra.mxu0 0
      %618 = vmatprep.subr.bf16.mxu0 0
      %619 = vmatpush1.bf16.xpose.msra.mxu0 0
      %620 = vmatprep.subr.bf16.mxu0 0
      %621 = vmatpush1.bf16.xpose.msra.mxu0 0
      %622 = vmatprep.subr.bf16.mxu0 0
      %623 = vmatpush1.bf16.xpose.msra.mxu0 0
      %624 = vmatprep.subr.bf16.mxu0 0
      %625 = vmatpush1.bf16.xpose.msra.mxu0 0
      %626 = vmatprep.subr.bf16.mxu0 0
      %627 = vmatpush1.bf16.xpose.msra.mxu0 0
      %628 = vmatprep.subr.bf16.mxu0 0
      %629 = vmatpush1.bf16.xpose.msra.mxu0 0
      %630 = vmatprep.subr.bf16.mxu0 0
      %631 = vmatpush1.bf16.xpose.msra.mxu0 0
      %632 = vmatprep.subr.bf16.mxu0 0
      %633 = vmatpush1.bf16.xpose.msra.mxu0 0
      %634 = vmatprep.mubr.bf16.mxu0 0
      %635 = vmatmul.mubr.bf16.gmra.mrb[0].mxu0 %v597
      %v636 = vpop.f32.mrb[0].mxu0
      %v637 = vadd.f32 0.0, %v636
      %v638 = vpop.f32.mrb[0].mxu0
      %v639 = vpop.f32.mrb[0].mxu0
      %v640 = vpop.f32.mrb[0].mxu0
      %641 = vdwg.mxu0
      %v642 = vmul.f32 %v637, 0.35355338
      %v643 = vsel %vm372, %v642, -inf
      %644 = vmax.xlane.f32.xlu0 %v643
      %v645 = vpop.xlane.xlu0 %644
      %v646 = vsub.f32 %v642, %v645
      %v647 = vmul.f32 %v646, 1.442695
      %v648 = vpow.pop %v647
      %v649 = vsel %vm372, %v648, 0.0
      %650 = vadd.xlane.f32.xlu0 %v649
      %v651 = vpop.xlane.xlu0 %650
      %v652 = vrcp.pop %v651
      %v653 = vmul.f32 %v648, %v652
      %v654 = vpack.c.bf16 %v653, %v653
      %655 = vrot.lane.b32.xlu0 %v368, 48
      %v656 = vpop.permute.xlu0 %655
      %v658 = vsel %vm372, %v654, 0
      %v661 = vsel %vm437, %v656, 0
      %663 = vmatprep.subr.bf16.mxu0 0
      %664 = vmatpush1.bf16.msra.mxu0 %v661
      %665 = vmatprep.subr.bf16.mxu0 0
      %666 = vmatpush1.bf16.msra.mxu0 0
      %667 = vmatprep.subr.bf16.mxu0 0
      %668 = vmatpush1.bf16.msra.mxu0 0
      %669 = vmatprep.subr.bf16.mxu0 0
      %670 = vmatpush1.bf16.msra.mxu0 0
      %671 = vmatprep.subr.bf16.mxu0 0
      %672 = vmatpush1.bf16.msra.mxu0 0
      %673 = vmatprep.subr.bf16.mxu0 0
      %674 = vmatpush1.bf16.msra.mxu0 0
      %675 = vmatprep.subr.bf16.mxu0 0
      %676 = vmatpush1.bf16.msra.mxu0 0
      %677 = vmatprep.subr.bf16.mxu0 0
      %678 = vmatpush1.bf16.msra.mxu0 0
      %679 = vmatprep.subr.bf16.mxu0 0
      %680 = vmatpush1.bf16.msra.mxu0 0
      %681 = vmatprep.subr.bf16.mxu0 0
      %682 = vmatpush1.bf16.msra.mxu0 0
      %683 = vmatprep.subr.bf16.mxu0 0
      %684 = vmatpush1.bf16.msra.mxu0 0
      %685 = vmatprep.subr.bf16.mxu0 0
      %686 = vmatpush1.bf16.msra.mxu0 0
      %687 = vmatprep.subr.bf16.mxu0 0
      %688 = vmatpush1.bf16.msra.mxu0 0
      %689 = vmatprep.subr.bf16.mxu0 0
      %690 = vmatpush1.bf16.msra.mxu0 0
      %691 = vmatprep.subr.bf16.mxu0 0
      %692 = vmatpush1.bf16.msra.mxu0 0
      %693 = vmatprep.subr.bf16.mxu0 0
      %694 = vmatpush1.bf16.msra.mxu0 0
      %695 = vmatprep.mubr.bf16.mxu0 0
      %696 = vmatmul.mubr.bf16.gmra.mrb[0].mxu0 %v658
      %v697 = vpop.f32.mrb[0].mxu0
      %v698 = vadd.f32 0.0, %v697
      %v699 = vpop.f32.mrb[0].mxu0
      %v700 = vpop.f32.mrb[0].mxu0
      %v701 = vpop.f32.mrb[0].mxu0
      %702 = vdwg.mxu0
      %703 = vrot.lane.b32.xlu0 %v368, 104
      %v704 = vpop.permute.xlu0 %703
      %705 = vrot.lane.b32.xlu0 %v368, 72
      %v706 = vpop.permute.xlu0 %705
      %v708 = vsel %vm372, %v704, 0
      %v711 = vsel %vm372, %v706, 0
      %713 = vmatprep.subr.bf16.mxu0 0
      %714 = vmatpush1.bf16.xpose.msra.mxu0 %v711
      %715 = vmatprep.subr.bf16.mxu0 0
      %716 = vmatpush1.bf16.xpose.msra.mxu0 0
      %717 = vmatprep.subr.bf16.mxu0 0
      %718 = vmatpush1.bf16.xpose.msra.mxu0 0
      %719 = vmatprep.subr.bf16.mxu0 0
      %720 = vmatpush1.bf16.xpose.msra.mxu0 0
      %721 = vmatprep.subr.bf16.mxu0 0
      %722 = vmatpush1.bf16.xpose.msra.mxu0 0
      %723 = vmatprep.subr.bf16.mxu0 0
      %724 = vmatpush1.bf16.xpose.msra.mxu0 0
      %725 = vmatprep.subr.bf16.mxu0 0
      %726 = vmatpush1.bf16.xpose.msra.mxu0 0
      %727 = vmatprep.subr.bf16.mxu0 0
      %728 = vmatpush1.bf16.xpose.msra.mxu0 0
      %729 = vmatprep.subr.bf16.mxu0 0
      %730 = vmatpush1.bf16.xpose.msra.mxu0 0
      %731 = vmatprep.subr.bf16.mxu0 0
      %732 = vmatpush1.bf16.xpose.msra.mxu0 0
      %733 = vmatprep.subr.bf16.mxu0 0
      %734 = vmatpush1.bf16.xpose.msra.mxu0 0
      %735 = vmatprep.subr.bf16.mxu0 0
      %736 = vmatpush1.bf16.xpose.msra.mxu0 0
      %737 = vmatprep.subr.bf16.mxu0 0
      %738 = vmatpush1.bf16.xpose.msra.mxu0 0
      %739 = vmatprep.subr.bf16.mxu0 0
      %740 = vmatpush1.bf16.xpose.msra.mxu0 0
      %741 = vmatprep.subr.bf16.mxu0 0
      %742 = vmatpush1.bf16.xpose.msra.mxu0 0
      %743 = vmatprep.subr.bf16.mxu0 0
      %744 = vmatpush1.bf16.xpose.msra.mxu0 0
      %745 = vmatprep.mubr.bf16.mxu0 0
      %746 = vmatmul.mubr.bf16.gmra.mrb[0].mxu0 %v708
      %v747 = vpop.f32.mrb[0].mxu0
      %v748 = vadd.f32 0.0, %v747
      %v749 = vpop.f32.mrb[0].mxu0
      %v750 = vpop.f32.mrb[0].mxu0
      %v751 = vpop.f32.mrb[0].mxu0
      %752 = vdwg.mxu0
      %v753 = vmul.f32 %v748, 0.35355338
      %v754 = vsel %vm372, %v753, -inf
      %755 = vmax.xlane.f32.xlu0 %v754
      %v756 = vpop.xlane.xlu0 %755
      %v757 = vsub.f32 %v753, %v756
      %v758 = vmul.f32 %v757, 1.442695
      %v759 = vpow.pop %v758
      %v760 = vsel %vm372, %v759, 0.0
      %761 = vadd.xlane.f32.xlu0 %v760
      %v762 = vpop.xlane.xlu0 %761
      %v763 = vrcp.pop %v762
      %v764 = vmul.f32 %v759, %v763
      %v765 = vpack.c.bf16 %v764, %v764
      %766 = vrot.lane.b32.xlu0 %v368, 40
      %v767 = vpop.permute.xlu0 %766
      %v769 = vsel %vm372, %v765, 0
      %v772 = vsel %vm437, %v767, 0
      %774 = vmatprep.subr.bf16.mxu0 0
      %775 = vmatpush1.bf16.msra.mxu0 %v772
      %776 = vmatprep.subr.bf16.mxu0 0
      %777 = vmatpush1.bf16.msra.mxu0 0
      %778 = vmatprep.subr.bf16.mxu0 0
      %779 = vmatpush1.bf16.msra.mxu0 0
      %780 = vmatprep.subr.bf16.mxu0 0
      %781 = vmatpush1.bf16.msra.mxu0 0
      %782 = vmatprep.subr.bf16.mxu0 0
      %783 = vmatpush1.bf16.msra.mxu0 0
      %784 = vmatprep.subr.bf16.mxu0 0
      %785 = vmatpush1.bf16.msra.mxu0 0
      %786 = vmatprep.subr.bf16.mxu0 0
      %787 = vmatpush1.bf16.msra.mxu0 0
      %788 = vmatprep.subr.bf16.mxu0 0
      %789 = vmatpush1.bf16.msra.mxu0 0
      %790 = vmatprep.subr.bf16.mxu0 0
      %791 = vmatpush1.bf16.msra.mxu0 0
      %792 = vmatprep.subr.bf16.mxu0 0
      %793 = vmatpush1.bf16.msra.mxu0 0
      %794 = vmatprep.subr.bf16.mxu0 0
      %795 = vmatpush1.bf16.msra.mxu0 0
      %796 = vmatprep.subr.bf16.mxu0 0
      %797 = vmatpush1.bf16.msra.mxu0 0
      %798 = vmatprep.subr.bf16.mxu0 0
      %799 = vmatpush1.bf16.msra.mxu0 0
      %800 = vmatprep.subr.bf16.mxu0 0
      %801 = vmatpush1.bf16.msra.mxu0 0
      %802 = vmatprep.subr.bf16.mxu0 0
      %803 = vmatpush1.bf16.msra.mxu0 0
      %804 = vmatprep.subr.bf16.mxu0 0
      %805 = vmatpush1.bf16.msra.mxu0 0
      %806 = vmatprep.mubr.bf16.mxu0 0
      %807 = vmatmul.mubr.bf16.gmra.mrb[0].mxu0 %v769
      %v808 = vpop.f32.mrb[0].mxu0
      %v809 = vadd.f32 0.0, %v808
      %v810 = vpop.f32.mrb[0].mxu0
      %v811 = vpop.f32.mrb[0].mxu0
      %v812 = vpop.f32.mrb[0].mxu0
      %813 = vdwg.mxu0
      %815 = vrot.lane.b32.xlu0 %v587, 8
      %v816 = vpop.permute.xlu0 %815
      %819 = vrot.lane.b32.xlu0 %v698, 16
      %v820 = vpop.permute.xlu0 %819
      %823 = vrot.lane.b32.xlu0 %v809, 24
      %v824 = vpop.permute.xlu0 %823
      %v826 = vsel %vm372, %v476, %v816
      %vm827 = vcmask 130048
      %v828 = vsel %vm827, %v826, %v820
      %vm829 = vcmask 195584
      %v830 = vsel %vm829, %v828, %v824
      %v831 = vpack.c.bf16 %v830, %v830
      %v832 = vld [vmem:[%s3 + $0x4] sm:$0xf]
      %v833 = vld [vmem:[%s3 + $0x114] sm:$0xf]
      %v834 = vld [vmem:[%s3 + $0x224] sm:$0xf]
      %v835 = vld [vmem:[%s3 + $0x334] sm:$0xf]
      %v836 = vld [vmem:[%s4 + $0x2] sm:$0x1]
      %v838 = vlaneseq
      %v839 = vshrl.u32 %v838, 7
      %v840 = vsub.s32 0, %v839
      %v841 = vrot.slane %v836, %v840
      %v847 = vunpack.c.l.b16 %v832
      %v848 = vunpack.c.l.b16 %v833
      %v849 = vunpack.c.l.b16 %v834
      %v850 = vunpack.c.l.b16 %v835
      %v851 = vpack.c.b16 %v848, %v847
      %v852 = vpack.c.b16 %v850, %v849
      %v856 = vsel %vm324, %v831, 0
      %858 = vmatprep.subr.bf16.mxu0 0
      %859 = vmatpush1.bf16.msra.mxu0 %v851
      %860 = vmatprep.subr.bf16.mxu0 0
      %861 = vmatpush1.bf16.msra.mxu0 %v852
      %862 = vmatprep.subr.bf16.mxu0 0
      %863 = vmatpush1.bf16.msra.mxu0 0
      %864 = vmatprep.subr.bf16.mxu0 0
      %865 = vmatpush1.bf16.msra.mxu0 0
      %866 = vmatprep.subr.bf16.mxu0 0
      %867 = vmatpush1.bf16.msra.mxu0 0
      %868 = vmatprep.subr.bf16.mxu0 0
      %869 = vmatpush1.bf16.msra.mxu0 0
      %870 = vmatprep.subr.bf16.mxu0 0
      %871 = vmatpush1.bf16.msra.mxu0 0
      %872 = vmatprep.subr.bf16.mxu0 0
      %873 = vmatpush1.bf16.msra.mxu0 0
      %874 = vmatprep.subr.bf16.mxu0 0
      %875 = vmatpush1.bf16.msra.mxu0 0
      %876 = vmatprep.subr.bf16.mxu0 0
      %877 = vmatpush1.bf16.msra.mxu0 0
      %878 = vmatprep.subr.bf16.mxu0 0
      %879 = vmatpush1.bf16.msra.mxu0 0
      %880 = vmatprep.subr.bf16.mxu0 0
      %881 = vmatpush1.bf16.msra.mxu0 0
      %882 = vmatprep.subr.bf16.mxu0 0
      %883 = vmatpush1.bf16.msra.mxu0 0
      %884 = vmatprep.subr.bf16.mxu0 0
      %885 = vmatpush1.bf16.msra.mxu0 0
      %886 = vmatprep.subr.bf16.mxu0 0
      %887 = vmatpush1.bf16.msra.mxu0 0
      %888 = vmatprep.subr.bf16.mxu0 0
      %889 = vmatpush1.bf16.msra.mxu0 0
      %890 = vmatprep.mubr.bf16.mxu0 0
      %891 = vmatmul.mubr.bf16.gmra.mrb[0].mxu0 %v856
      %v892 = vpop.f32.mrb[0].mxu0
      %v893 = vadd.f32 %v841, %v892
      %v894 = vpop.f32.mrb[0].mxu0
      %v895 = vpop.f32.mrb[0].mxu0
      %v896 = vpop.f32.mrb[0].mxu0
      %897 = vdwg.mxu0
      %v898 = vld [vmem:[%s4 + $0x3] sm:$0x1]
      %v899 = vld [vmem:[%s4 + $0x4] sm:$0x1]
      %v900 = vadd.f32 %v299, %v893
      %v901 = vsel %vm324, %v900, 0.0
      %902 = vadd.xlane.f32.xlu0 %v901
      %v903 = vpop.xlane.xlu0 %902
      %v904 = vrcp.pop 32.0
      %v905 = vmul.f32 %v903, %v904
      %v906 = vsub.f32 %v900, %v905
      %v907 = vmul.f32 %v906, %v906
      %v908 = vsel %vm324, %v907, 0.0
      %909 = vadd.xlane.f32.xlu0 %v908
      %v910 = vpop.xlane.xlu0 %909
      %v911 = vmul.f32 %v910, %v904
      %v912 = vadd.f32 %v911, 1e-05
      %v913 = vrsqrt.pop %v912
      %v914 = vmul.f32 %v906, %v913
      %v916 = vlaneseq
      %v917 = vshrl.u32 %v916, 7
      %v918 = vsub.s32 0, %v917
      %v919 = vrot.slane %v898, %v918
      %v921 = vmul.f32 %v914, %v919
      %v923 = vlaneseq
      %v924 = vshrl.u32 %v923, 7
      %v925 = vsub.s32 0, %v924
      %v926 = vrot.slane %v899, %v925
      %v928 = vadd.f32 %v921, %v926
      %v929 = vpack.c.bf16 %v928, %v928
      %v930 = vld [vmem:[%s3 + $0x8] sm:$0xff]
      %v931 = vld [vmem:[%s3 + $0x10] sm:$0xff]
      %v932 = vld [vmem:[%s3 + $0x18] sm:$0xff]
      %v933 = vld [vmem:[%s3 + $0x20] sm:$0xff]
      %v934 = vld [vmem:[%s3 + $0x28] sm:$0xff]
      %v935 = vld [vmem:[%s3 + $0x30] sm:$0xff]
      %v936 = vld [vmem:[%s3 + $0x38] sm:$0xff]
      %v937 = vld [vmem:[%s3 + $0x40] sm:$0xff]
      %v938 = vld [vmem:[%s3 + $0x118] sm:$0xff]
      %v939 = vld [vmem:[%s3 + $0x120] sm:$0xff]
      %v940 = vld [vmem:[%s3 + $0x128] sm:$0xff]
      %v941 = vld [vmem:[%s3 + $0x130] sm:$0xff]
      %v942 = vld [vmem:[%s3 + $0x138] sm:$0xff]
      %v943 = vld [vmem:[%s3 + $0x140] sm:$0xff]
      %v944 = vld [vmem:[%s3 + $0x148] sm:$0xff]
      %v945 = vld [vmem:[%s3 + $0x150] sm:$0xff]
      %v946 = vld [vmem:[%s3 + $0x228] sm:$0xff]
      %v947 = vld [vmem:[%s3 + $0x230] sm:$0xff]
      %v948 = vld [vmem:[%s3 + $0x238] sm:$0xff]
      %v949 = vld [vmem:[%s3 + $0x240] sm:$0xff]
      %v950 = vld [vmem:[%s3 + $0x248] sm:$0xff]
      %v951 = vld [vmem:[%s3 + $0x250] sm:$0xff]
      %v952 = vld [vmem:[%s3 + $0x258] sm:$0xff]
      %v953 = vld [vmem:[%s3 + $0x260] sm:$0xff]
      %v954 = vld [vmem:[%s3 + $0x338] sm:$0xff]
      %v955 = vld [vmem:[%s3 + $0x340] sm:$0xff]
      %v956 = vld [vmem:[%s3 + $0x348] sm:$0xff]
      %v957 = vld [vmem:[%s3 + $0x350] sm:$0xff]
      %v958 = vld [vmem:[%s3 + $0x358] sm:$0xff]
      %v959 = vld [vmem:[%s3 + $0x360] sm:$0xff]
      %v960 = vld [vmem:[%s3 + $0x368] sm:$0xff]
      %v961 = vld [vmem:[%s3 + $0x370] sm:$0xff]
      %v962 = vld [vmem:[%s4 + $0x5] sm:$0xff]
      %v963 = vld [vmem:[%s4 + $0xd] sm:$0xff]
      %v966 = vlaneseq
      %v967 = vshrl.u32 %v966, 7
      %v968 = vsub.s32 0, %v967
      %v969 = vrot.slane %v962, %v968
      %v970 = vlaneseq
      %v971 = vshrl.u32 %v970, 7
      %v972 = vsub.s32 1, %v971
      %v973 = vrot.slane %v962, %v972
      %v974 = vlaneseq
      %v975 = vshrl.u32 %v974, 7
      %v976 = vsub.s32 2, %v975
      %v977 = vrot.slane %v962, %v976
      %v978 = vlaneseq
      %v979 = vshrl.u32 %v978, 7
      %v980 = vsub.s32 3, %v979
      %v981 = vrot.slane %v962, %v980
      %v982 = vlaneseq
      %v983 = vshrl.u32 %v982, 7
      %v984 = vsub.s32 4, %v983
      %v985 = vrot.slane %v962, %v984
      %v986 = vlaneseq
      %v987 = vshrl.u32 %v986, 7
      %v988 = vsub.s32 5, %v987
      %v989 = vrot.slane %v962, %v988
      %v990 = vlaneseq
      %v991 = vshrl.u32 %v990, 7
      %v992 = vsub.s32 6, %v991
      %v993 = vrot.slane %v962, %v992
      %v994 = vlaneseq
      %v995 = vshrl.u32 %v994, 7
      %v996 = vsub.s32 7, %v995
      %v997 = vrot.slane %v962, %v996
      %v998 = vlaneseq
      %v999 = vshrl.u32 %v998, 7
      %v1000 = vsub.s32 0, %v999
      %v1001 = vrot.slane %v963, %v1000
      %v1002 = vlaneseq
      %v1003 = vshrl.u32 %v1002, 7
      %v1004 = vsub.s32 1, %v1003
      %v1005 = vrot.slane %v963, %v1004
      %v1006 = vlaneseq
      %v1007 = vshrl.u32 %v1006, 7
      %v1008 = vsub.s32 2, %v1007
      %v1009 = vrot.slane %v963, %v1008
      %v1010 = vlaneseq
      %v1011 = vshrl.u32 %v1010, 7
      %v1012 = vsub.s32 3, %v1011
      %v1013 = vrot.slane %v963, %v1012
      %v1014 = vlaneseq
      %v1015 = vshrl.u32 %v1014, 7
      %v1016 = vsub.s32 4, %v1015
      %v1017 = vrot.slane %v963, %v1016
      %v1018 = vlaneseq
      %v1019 = vshrl.u32 %v1018, 7
      %v1020 = vsub.s32 5, %v1019
      %v1021 = vrot.slane %v963, %v1020
      %v1022 = vlaneseq
      %v1023 = vshrl.u32 %v1022, 7
      %v1024 = vsub.s32 6, %v1023
      %v1025 = vrot.slane %v963, %v1024
      %v1026 = vlaneseq
      %v1027 = vshrl.u32 %v1026, 7
      %v1028 = vsub.s32 7, %v1027
      %v1029 = vrot.slane %v963, %v1028
      %v1078 = vunpack.c.l.b16 %v930
      %v1079 = vunpack.c.h.b16 %v930
      %v1080 = vunpack.c.l.b16 %v931
      %v1081 = vunpack.c.h.b16 %v931
      %v1082 = vunpack.c.l.b16 %v932
      %v1083 = vunpack.c.h.b16 %v932
      %v1084 = vunpack.c.l.b16 %v933
      %v1085 = vunpack.c.h.b16 %v933
      %v1086 = vunpack.c.l.b16 %v934
      %v1087 = vunpack.c.h.b16 %v934
      %v1088 = vunpack.c.l.b16 %v935
      %v1089 = vunpack.c.h.b16 %v935
      %v1090 = vunpack.c.l.b16 %v936
      %v1091 = vunpack.c.h.b16 %v936
      %v1092 = vunpack.c.l.b16 %v937
      %v1093 = vunpack.c.h.b16 %v937
      %v1094 = vunpack.c.l.b16 %v938
      %v1095 = vunpack.c.h.b16 %v938
      %v1096 = vunpack.c.l.b16 %v939
      %v1097 = vunpack.c.h.b16 %v939
      %v1098 = vunpack.c.l.b16 %v940
      %v1099 = vunpack.c.h.b16 %v940
      %v1100 = vunpack.c.l.b16 %v941
      %v1101 = vunpack.c.h.b16 %v941
      %v1102 = vunpack.c.l.b16 %v942
      %v1103 = vunpack.c.h.b16 %v942
      %v1104 = vunpack.c.l.b16 %v943
      %v1105 = vunpack.c.h.b16 %v943
      %v1106 = vunpack.c.l.b16 %v944
      %v1107 = vunpack.c.h.b16 %v944
      %v1108 = vunpack.c.l.b16 %v945
      %v1109 = vunpack.c.h.b16 %v945
      %v1110 = vunpack.c.l.b16 %v946
      %v1111 = vunpack.c.h.b16 %v946
      %v1112 = vunpack.c.l.b16 %v947
      %v1113 = vunpack.c.h.b16 %v947
      %v1114 = vunpack.c.l.b16 %v948
      %v1115 = vunpack.c.h.b16 %v948
      %v1116 = vunpack.c.l.b16 %v949
      %v1117 = vunpack.c.h.b16 %v949
      %v1118 = vunpack.c.l.b16 %v950
      %v1119 = vunpack.c.h.b16 %v950
      %v1120 = vunpack.c.l.b16 %v951
      %v1121 = vunpack.c.h.b16 %v951
      %v1122 = vunpack.c.l.b16 %v952
      %v1123 = vunpack.c.h.b16 %v952
      %v1124 = vunpack.c.l.b16 %v953
      %v1125 = vunpack.c.h.b16 %v953
      %v1126 = vunpack.c.l.b16 %v954
      %v1127 = vunpack.c.h.b16 %v954
      %v1128 = vunpack.c.l.b16 %v955
      %v1129 = vunpack.c.h.b16 %v955
      %v1130 = vunpack.c.l.b16 %v956
      %v1131 = vunpack.c.h.b16 %v956
      %v1132 = vunpack.c.l.b16 %v957
      %v1133 = vunpack.c.h.b16 %v957
      %v1134 = vunpack.c.l.b16 %v958
      %v1135 = vunpack.c.h.b16 %v958
      %v1136 = vunpack.c.l.b16 %v959
      %v1137 = vunpack.c.h.b16 %v959
      %v1138 = vunpack.c.l.b16 %v960
      %v1139 = vunpack.c.h.b16 %v960
      %v1140 = vunpack.c.l.b16 %v961
      %v1141 = vunpack.c.h.b16 %v961
      %v1142 = vpack.c.b16 %v1094, %v1078
      %v1143 = vpack.c.b16 %v1095, %v1079
      %v1144 = vpack.c.b16 %v1096, %v1080
      %v1145 = vpack.c.b16 %v1097, %v1081
      %v1146 = vpack.c.b16 %v1098, %v1082
      %v1147 = vpack.c.b16 %v1099, %v1083
      %v1148 = vpack.c.b16 %v1100, %v1084
      %v1149 = vpack.c.b16 %v1101, %v1085
      %v1150 = vpack.c.b16 %v1102, %v1086
      %v1151 = vpack.c.b16 %v1103, %v1087
      %v1152 = vpack.c.b16 %v1104, %v1088
      %v1153 = vpack.c.b16 %v1105, %v1089
      %v1154 = vpack.c.b16 %v1106, %v1090
      %v1155 = vpack.c.b16 %v1107, %v1091
      %v1156 = vpack.c.b16 %v1108, %v1092
      %v1157 = vpack.c.b16 %v1109, %v1093
      %v1158 = vpack.c.b16 %v1126, %v1110
      %v1159 = vpack.c.b16 %v1127, %v1111
      %v1160 = vpack.c.b16 %v1128, %v1112
      %v1161 = vpack.c.b16 %v1129, %v1113
      %v1162 = vpack.c.b16 %v1130, %v1114
      %v1163 = vpack.c.b16 %v1131, %v1115
      %v1164 = vpack.c.b16 %v1132, %v1116
      %v1165 = vpack.c.b16 %v1133, %v1117
      %v1166 = vpack.c.b16 %v1134, %v1118
      %v1167 = vpack.c.b16 %v1135, %v1119
      %v1168 = vpack.c.b16 %v1136, %v1120
      %v1169 = vpack.c.b16 %v1137, %v1121
      %v1170 = vpack.c.b16 %v1138, %v1122
      %v1171 = vpack.c.b16 %v1139, %v1123
      %v1172 = vpack.c.b16 %v1140, %v1124
      %v1173 = vpack.c.b16 %v1141, %v1125
      %v1207 = vsel %vm324, %v929, 0
      %1209 = vmatprep.subr.bf16.mxu0 %v1143
      %1210 = vmatpush1.bf16.msra.mxu0 %v1142
      %1211 = vmatprep.subr.bf16.mxu0 %v1159
      %1212 = vmatpush1.bf16.msra.mxu0 %v1158
      %1213 = vmatprep.subr.bf16.mxu0 0
      %1214 = vmatpush1.bf16.msra.mxu0 0
      %1215 = vmatprep.subr.bf16.mxu0 0
      %1216 = vmatpush1.bf16.msra.mxu0 0
      %1217 = vmatprep.subr.bf16.mxu0 0
      %1218 = vmatpush1.bf16.msra.mxu0 0
      %1219 = vmatprep.subr.bf16.mxu0 0
      %1220 = vmatpush1.bf16.msra.mxu0 0
      %1221 = vmatprep.subr.bf16.mxu0 0
      %1222 = vmatpush1.bf16.msra.mxu0 0
      %1223 = vmatprep.subr.bf16.mxu0 0
      %1224 = vmatpush1.bf16.msra.mxu0 0
      %1225 = vmatprep.subr.bf16.mxu0 0
      %1226 = vmatpush1.bf16.msra.mxu0 0
      %1227 = vmatprep.subr.bf16.mxu0 0
      %1228 = vmatpush1.bf16.msra.mxu0 0
      %1229 = vmatprep.subr.bf16.mxu0 0
      %1230 = vmatpush1.bf16.msra.mxu0 0
      %1231 = vmatprep.subr.bf16.mxu0 0
      %1232 = vmatpush1.bf16.msra.mxu0 0
      %1233 = vmatprep.subr.bf16.mxu0 0
      %1234 = vmatpush1.bf16.msra.mxu0 0
      %1235 = vmatprep.subr.bf16.mxu0 0
      %1236 = vmatpush1.bf16.msra.mxu0 0
      %1237 = vmatprep.subr.bf16.mxu0 0
      %1238 = vmatpush1.bf16.msra.mxu0 0
      %1239 = vmatprep.subr.bf16.mxu0 0
      %1240 = vmatpush1.bf16.msra.mxu0 0
      %1241 = vmatprep.mubr.bf16.mxu0 0
      %1242 = vmatmul.mubr.bf16.gmra.mrb[0].mxu0 %v1207
      %v1243 = vpop.f32.mrb[0].mxu0
      %v1244 = vadd.f32 %v969, %v1243
      %v1245 = vpop.f32.mrb[0].mxu0
      %v1246 = vadd.f32 %v973, %v1245
      %v1247 = vpop.f32.mrb[0].mxu0
      %v1248 = vpop.f32.mrb[0].mxu0
      %1249 = vdwg.mxu0
      %1250 = vmatprep.subr.bf16.mxu0 %v1145
      %1251 = vmatpush1.bf16.msra.mxu0 %v1144
      %1252 = vmatprep.subr.bf16.mxu0 %v1161
      %1253 = vmatpush1.bf16.msra.mxu0 %v1160
      %1254 = vmatprep.subr.bf16.mxu0 0
      %1255 = vmatpush1.bf16.msra.mxu0 0
      %1256 = vmatprep.subr.bf16.mxu0 0
      %1257 = vmatpush1.bf16.msra.mxu0 0
      %1258 = vmatprep.subr.bf16.mxu0 0
      %1259 = vmatpush1.bf16.msra.mxu0 0
      %1260 = vmatprep.subr.bf16.mxu0 0
      %1261 = vmatpush1.bf16.msra.mxu0 0
      %1262 = vmatprep.subr.bf16.mxu0 0
      %1263 = vmatpush1.bf16.msra.mxu0 0
      %1264 = vmatprep.subr.bf16.mxu0 0
      %1265 = vmatpush1.bf16.msra.mxu0 0
      %1266 = vmatprep.subr.bf16.mxu0 0
      %1267 = vmatpush1.bf16.msra.mxu0 0
      %1268 = vmatprep.subr.bf16.mxu0 0
      %1269 = vmatpush1.bf16.msra.mxu0 0
      %1270 = vmatprep.subr.bf16.mxu0 0
      %1271 = vmatpush1.bf16.msra.mxu0 0
      %1272 = vmatprep.subr.bf16.mxu0 0
      %1273 = vmatpush1.bf16.msra.mxu0 0
      %1274 = vmatprep.subr.bf16.mxu0 0
      %1275 = vmatpush1.bf16.msra.mxu0 0
      %1276 = vmatprep.subr.bf16.mxu0 0
      %1277 = vmatpush1.bf16.msra.mxu0 0
      %1278 = vmatprep.subr.bf16.mxu0 0
      %1279 = vmatpush1.bf16.msra.mxu0 0
      %1280 = vmatprep.subr.bf16.mxu0 0
      %1281 = vmatpush1.bf16.msra.mxu0 0
      %1282 = vmatprep.mubr.bf16.mxu0 0
      %1283 = vmatmul.mubr.bf16.gmra.mrb[0].mxu0 %v1207
      %v1284 = vpop.f32.mrb[0].mxu0
      %v1285 = vadd.f32 %v977, %v1284
      %v1286 = vpop.f32.mrb[0].mxu0
      %v1287 = vadd.f32 %v981, %v1286
      %v1288 = vpop.f32.mrb[0].mxu0
      %v1289 = vpop.f32.mrb[0].mxu0
      %1290 = vdwg.mxu0
      %1291 = vmatprep.subr.bf16.mxu0 %v1147
      %1292 = vmatpush1.bf16.msra.mxu0 %v1146
      %1293 = vmatprep.subr.bf16.mxu0 %v1163
      %1294 = vmatpush1.bf16.msra.mxu0 %v1162
      %1295 = vmatprep.subr.bf16.mxu0 0
      %1296 = vmatpush1.bf16.msra.mxu0 0
      %1297 = vmatprep.subr.bf16.mxu0 0
      %1298 = vmatpush1.bf16.msra.mxu0 0
      %1299 = vmatprep.subr.bf16.mxu0 0
      %1300 = vmatpush1.bf16.msra.mxu0 0
      %1301 = vmatprep.subr.bf16.mxu0 0
      %1302 = vmatpush1.bf16.msra.mxu0 0
      %1303 = vmatprep.subr.bf16.mxu0 0
      %1304 = vmatpush1.bf16.msra.mxu0 0
      %1305 = vmatprep.subr.bf16.mxu0 0
      %1306 = vmatpush1.bf16.msra.mxu0 0
      %1307 = vmatprep.subr.bf16.mxu0 0
      %1308 = vmatpush1.bf16.msra.mxu0 0
      %1309 = vmatprep.subr.bf16.mxu0 0
      %1310 = vmatpush1.bf16.msra.mxu0 0
      %1311 = vmatprep.subr.bf16.mxu0 0
      %1312 = vmatpush1.bf16.msra.mxu0 0
      %1313 = vmatprep.subr.bf16.mxu0 0
      %1314 = vmatpush1.bf16.msra.mxu0 0
      %1315 = vmatprep.subr.bf16.mxu0 0
      %1316 = vmatpush1.bf16.msra.mxu0 0
      %1317 = vmatprep.subr.bf16.mxu0 0
      %1318 = vmatpush1.bf16.msra.mxu0 0
      %1319 = vmatprep.subr.bf16.mxu0 0
      %1320 = vmatpush1.bf16.msra.mxu0 0
      %1321 = vmatprep.subr.bf16.mxu0 0
      %1322 = vmatpush1.bf16.msra.mxu0 0
      %1323 = vmatprep.mubr.bf16.mxu0 0
      %1324 = vmatmul.mubr.bf16.gmra.mrb[0].mxu0 %v1207
      %v1325 = vpop.f32.mrb[0].mxu0
      %v1326 = vadd.f32 %v985, %v1325
      %v1327 = vpop.f32.mrb[0].mxu0
      %v1328 = vadd.f32 %v989, %v1327
      %v1329 = vpop.f32.mrb[0].mxu0
      %v1330 = vpop.f32.mrb[0].mxu0
      %1331 = vdwg.mxu0
      %1332 = vmatprep.subr.bf16.mxu0 %v1149
      %1333 = vmatpush1.bf16.msra.mxu0 %v1148
      %1334 = vmatprep.subr.bf16.mxu0 %v1165
      %1335 = vmatpush1.bf16.msra.mxu0 %v1164
      %1336 = vmatprep.subr.bf16.mxu0 0
      %1337 = vmatpush1.bf16.msra.mxu0 0
      %1338 = vmatprep.subr.bf16.mxu0 0
      %1339 = vmatpush1.bf16.msra.mxu0 0
      %1340 = vmatprep.subr.bf16.mxu0 0
      %1341 = vmatpush1.bf16.msra.mxu0 0
      %1342 = vmatprep.subr.bf16.mxu0 0
      %1343 = vmatpush1.bf16.msra.mxu0 0
      %1344 = vmatprep.subr.bf16.mxu0 0
      %1345 = vmatpush1.bf16.msra.mxu0 0
      %1346 = vmatprep.subr.bf16.mxu0 0
      %1347 = vmatpush1.bf16.msra.mxu0 0
      %1348 = vmatprep.subr.bf16.mxu0 0
      %1349 = vmatpush1.bf16.msra.mxu0 0
      %1350 = vmatprep.subr.bf16.mxu0 0
      %1351 = vmatpush1.bf16.msra.mxu0 0
      %1352 = vmatprep.subr.bf16.mxu0 0
      %1353 = vmatpush1.bf16.msra.mxu0 0
      %1354 = vmatprep.subr.bf16.mxu0 0
      %1355 = vmatpush1.bf16.msra.mxu0 0
      %1356 = vmatprep.subr.bf16.mxu0 0
      %1357 = vmatpush1.bf16.msra.mxu0 0
      %1358 = vmatprep.subr.bf16.mxu0 0
      %1359 = vmatpush1.bf16.msra.mxu0 0
      %1360 = vmatprep.subr.bf16.mxu0 0
      %1361 = vmatpush1.bf16.msra.mxu0 0
      %1362 = vmatprep.subr.bf16.mxu0 0
      %1363 = vmatpush1.bf16.msra.mxu0 0
      %1364 = vmatprep.mubr.bf16.mxu0 0
      %1365 = vmatmul.mubr.bf16.gmra.mrb[0].mxu0 %v1207
      %v1366 = vpop.f32.mrb[0].mxu0
      %v1367 = vadd.f32 %v993, %v1366
      %v1368 = vpop.f32.mrb[0].mxu0
      %v1369 = vadd.f32 %v997, %v1368
      %v1370 = vpop.f32.mrb[0].mxu0
      %v1371 = vpop.f32.mrb[0].mxu0
      %1372 = vdwg.mxu0
      %1373 = vmatprep.subr.bf16.mxu0 %v1151
      %1374 = vmatpush1.bf16.msra.mxu0 %v1150
      %1375 = vmatprep.subr.bf16.mxu0 %v1167
      %1376 = vmatpush1.bf16.msra.mxu0 %v1166
      %1377 = vmatprep.subr.bf16.mxu0 0
      %1378 = vmatpush1.bf16.msra.mxu0 0
      %1379 = vmatprep.subr.bf16.mxu0 0
      %1380 = vmatpush1.bf16.msra.mxu0 0
      %1381 = vmatprep.subr.bf16.mxu0 0
      %1382 = vmatpush1.bf16.msra.mxu0 0
      %1383 = vmatprep.subr.bf16.mxu0 0
      %1384 = vmatpush1.bf16.msra.mxu0 0
      %1385 = vmatprep.subr.bf16.mxu0 0
      %1386 = vmatpush1.bf16.msra.mxu0 0
      %1387 = vmatprep.subr.bf16.mxu0 0
      %1388 = vmatpush1.bf16.msra.mxu0 0
      %1389 = vmatprep.subr.bf16.mxu0 0
      %1390 = vmatpush1.bf16.msra.mxu0 0
      %1391 = vmatprep.subr.bf16.mxu0 0
      %1392 = vmatpush1.bf16.msra.mxu0 0
      %1393 = vmatprep.subr.bf16.mxu0 0
      %1394 = vmatpush1.bf16.msra.mxu0 0
      %1395 = vmatprep.subr.bf16.mxu0 0
      %1396 = vmatpush1.bf16.msra.mxu0 0
      %1397 = vmatprep.subr.bf16.mxu0 0
      %1398 = vmatpush1.bf16.msra.mxu0 0
      %1399 = vmatprep.subr.bf16.mxu0 0
      %1400 = vmatpush1.bf16.msra.mxu0 0
      %1401 = vmatprep.subr.bf16.mxu0 0
      %1402 = vmatpush1.bf16.msra.mxu0 0
      %1403 = vmatprep.subr.bf16.mxu0 0
      %1404 = vmatpush1.bf16.msra.mxu0 0
      %1405 = vmatprep.mubr.bf16.mxu0 0
      %1406 = vmatmul.mubr.bf16.gmra.mrb[0].mxu0 %v1207
      %v1407 = vpop.f32.mrb[0].mxu0
      %v1408 = vadd.f32 %v1001, %v1407
      %v1409 = vpop.f32.mrb[0].mxu0
      %v1410 = vadd.f32 %v1005, %v1409
      %v1411 = vpop.f32.mrb[0].mxu0
      %v1412 = vpop.f32.mrb[0].mxu0
      %1413 = vdwg.mxu0
      %1414 = vmatprep.subr.bf16.mxu0 %v1153
      %1415 = vmatpush1.bf16.msra.mxu0 %v1152
      %1416 = vmatprep.subr.bf16.mxu0 %v1169
      %1417 = vmatpush1.bf16.msra.mxu0 %v1168
      %1418 = vmatprep.subr.bf16.mxu0 0
      %1419 = vmatpush1.bf16.msra.mxu0 0
      %1420 = vmatprep.subr.bf16.mxu0 0
      %1421 = vmatpush1.bf16.msra.mxu0 0
      %1422 = vmatprep.subr.bf16.mxu0 0
      %1423 = vmatpush1.bf16.msra.mxu0 0
      %1424 = vmatprep.subr.bf16.mxu0 0
      %1425 = vmatpush1.bf16.msra.mxu0 0
      %1426 = vmatprep.subr.bf16.mxu0 0
      %1427 = vmatpush1.bf16.msra.mxu0 0
      %1428 = vmatprep.subr.bf16.mxu0 0
      %1429 = vmatpush1.bf16.msra.mxu0 0
      %1430 = vmatprep.subr.bf16.mxu0 0
      %1431 = vmatpush1.bf16.msra.mxu0 0
      %1432 = vmatprep.subr.bf16.mxu0 0
      %1433 = vmatpush1.bf16.msra.mxu0 0
      %1434 = vmatprep.subr.bf16.mxu0 0
      %1435 = vmatpush1.bf16.msra.mxu0 0
      %1436 = vmatprep.subr.bf16.mxu0 0
      %1437 = vmatpush1.bf16.msra.mxu0 0
      %1438 = vmatprep.subr.bf16.mxu0 0
      %1439 = vmatpush1.bf16.msra.mxu0 0
      %1440 = vmatprep.subr.bf16.mxu0 0
      %1441 = vmatpush1.bf16.msra.mxu0 0
      %1442 = vmatprep.subr.bf16.mxu0 0
      %1443 = vmatpush1.bf16.msra.mxu0 0
      %1444 = vmatprep.subr.bf16.mxu0 0
      %1445 = vmatpush1.bf16.msra.mxu0 0
      %1446 = vmatprep.mubr.bf16.mxu0 0
      %1447 = vmatmul.mubr.bf16.gmra.mrb[0].mxu0 %v1207
      %v1448 = vpop.f32.mrb[0].mxu0
      %v1449 = vadd.f32 %v1009, %v1448
      %v1450 = vpop.f32.mrb[0].mxu0
      %v1451 = vadd.f32 %v1013, %v1450
      %v1452 = vpop.f32.mrb[0].mxu0
      %v1453 = vpop.f32.mrb[0].mxu0
      %1454 = vdwg.mxu0
      %1455 = vmatprep.subr.bf16.mxu0 %v1155
      %1456 = vmatpush1.bf16.msra.mxu0 %v1154
      %1457 = vmatprep.subr.bf16.mxu0 %v1171
      %1458 = vmatpush1.bf16.msra.mxu0 %v1170
      %1459 = vmatprep.subr.bf16.mxu0 0
      %1460 = vmatpush1.bf16.msra.mxu0 0
      %1461 = vmatprep.subr.bf16.mxu0 0
      %1462 = vmatpush1.bf16.msra.mxu0 0
      %1463 = vmatprep.subr.bf16.mxu0 0
      %1464 = vmatpush1.bf16.msra.mxu0 0
      %1465 = vmatprep.subr.bf16.mxu0 0
      %1466 = vmatpush1.bf16.msra.mxu0 0
      %1467 = vmatprep.subr.bf16.mxu0 0
      %1468 = vmatpush1.bf16.msra.mxu0 0
      %1469 = vmatprep.subr.bf16.mxu0 0
      %1470 = vmatpush1.bf16.msra.mxu0 0
      %1471 = vmatprep.subr.bf16.mxu0 0
      %1472 = vmatpush1.bf16.msra.mxu0 0
      %1473 = vmatprep.subr.bf16.mxu0 0
      %1474 = vmatpush1.bf16.msra.mxu0 0
      %1475 = vmatprep.subr.bf16.mxu0 0
      %1476 = vmatpush1.bf16.msra.mxu0 0
      %1477 = vmatprep.subr.bf16.mxu0 0
      %1478 = vmatpush1.bf16.msra.mxu0 0
      %1479 = vmatprep.subr.bf16.mxu0 0
      %1480 = vmatpush1.bf16.msra.mxu0 0
      %1481 = vmatprep.subr.bf16.mxu0 0
      %1482 = vmatpush1.bf16.msra.mxu0 0
      %1483 = vmatprep.subr.bf16.mxu0 0
      %1484 = vmatpush1.bf16.msra.mxu0 0
      %1485 = vmatprep.subr.bf16.mxu0 0
      %1486 = vmatpush1.bf16.msra.mxu0 0
      %1487 = vmatprep.mubr.bf16.mxu0 0
      %1488 = vmatmul.mubr.bf16.gmra.mrb[0].mxu0 %v1207
      %v1489 = vpop.f32.mrb[0].mxu0
      %v1490 = vadd.f32 %v1017, %v1489
      %v1491 = vpop.f32.mrb[0].mxu0
      %v1492 = vadd.f32 %v1021, %v1491
      %v1493 = vpop.f32.mrb[0].mxu0
      %v1494 = vpop.f32.mrb[0].mxu0
      %1495 = vdwg.mxu0
      %1496 = vmatprep.subr.bf16.mxu0 %v1157
      %1497 = vmatpush1.bf16.msra.mxu0 %v1156
      %1498 = vmatprep.subr.bf16.mxu0 %v1173
      %1499 = vmatpush1.bf16.msra.mxu0 %v1172
      %1500 = vmatprep.subr.bf16.mxu0 0
      %1501 = vmatpush1.bf16.msra.mxu0 0
      %1502 = vmatprep.subr.bf16.mxu0 0
      %1503 = vmatpush1.bf16.msra.mxu0 0
      %1504 = vmatprep.subr.bf16.mxu0 0
      %1505 = vmatpush1.bf16.msra.mxu0 0
      %1506 = vmatprep.subr.bf16.mxu0 0
      %1507 = vmatpush1.bf16.msra.mxu0 0
      %1508 = vmatprep.subr.bf16.mxu0 0
      %1509 = vmatpush1.bf16.msra.mxu0 0
      %1510 = vmatprep.subr.bf16.mxu0 0
      %1511 = vmatpush1.bf16.msra.mxu0 0
      %1512 = vmatprep.subr.bf16.mxu0 0
      %1513 = vmatpush1.bf16.msra.mxu0 0
      %1514 = vmatprep.subr.bf16.mxu0 0
      %1515 = vmatpush1.bf16.msra.mxu0 0
      %1516 = vmatprep.subr.bf16.mxu0 0
      %1517 = vmatpush1.bf16.msra.mxu0 0
      %1518 = vmatprep.subr.bf16.mxu0 0
      %1519 = vmatpush1.bf16.msra.mxu0 0
      %1520 = vmatprep.subr.bf16.mxu0 0
      %1521 = vmatpush1.bf16.msra.mxu0 0
      %1522 = vmatprep.subr.bf16.mxu0 0
      %1523 = vmatpush1.bf16.msra.mxu0 0
      %1524 = vmatprep.subr.bf16.mxu0 0
      %1525 = vmatpush1.bf16.msra.mxu0 0
      %1526 = vmatprep.subr.bf16.mxu0 0
      %1527 = vmatpush1.bf16.msra.mxu0 0
      %1528 = vmatprep.mubr.bf16.mxu0 0
      %1529 = vmatmul.mubr.bf16.gmra.mrb[0].mxu0 %v1207
      %v1530 = vpop.f32.mrb[0].mxu0
      %v1531 = vadd.f32 %v1025, %v1530
      %v1532 = vpop.f32.mrb[0].mxu0
      %v1533 = vadd.f32 %v1029, %v1532
      %v1534 = vpop.f32.mrb[0].mxu0
      %v1535 = vpop.f32.mrb[0].mxu0
      %1536 = vdwg.mxu0
      %v1537 = vmax.f32 %v1244, 0.0
      %v1538 = vmax.f32 %v1246, 0.0
      %v1539 = vmax.f32 %v1285, 0.0
      %v1540 = vmax.f32 %v1287, 0.0
      %v1541 = vmax.f32 %v1326, 0.0
      %v1542 = vmax.f32 %v1328, 0.0
      %v1543 = vmax.f32 %v1367, 0.0
      %v1544 = vmax.f32 %v1369, 0.0
      %v1545 = vmax.f32 %v1408, 0.0
      %v1546 = vmax.f32 %v1410, 0.0
      %v1547 = vmax.f32 %v1449, 0.0
      %v1548 = vmax.f32 %v1451, 0.0
      %v1549 = vmax.f32 %v1490, 0.0
      %v1550 = vmax.f32 %v1492, 0.0
      %v1551 = vmax.f32 %v1531, 0.0
      %v1552 = vmax.f32 %v1533, 0.0
      %v1553 = vpack.c.bf16 %v1537, %v1537
      %v1554 = vpack.c.bf16 %v1538, %v1538
      %v1555 = vpack.c.bf16 %v1539, %v1539
      %v1556 = vpack.c.bf16 %v1540, %v1540
      %v1557 = vpack.c.bf16 %v1541, %v1541
      %v1558 = vpack.c.bf16 %v1542, %v1542
      %v1559 = vpack.c.bf16 %v1543, %v1543
      %v1560 = vpack.c.bf16 %v1544, %v1544
      %v1561 = vpack.c.bf16 %v1545, %v1545
      %v1562 = vpack.c.bf16 %v1546, %v1546
      %v1563 = vpack.c.bf16 %v1547, %v1547
      %v1564 = vpack.c.bf16 %v1548, %v1548
      %v1565 = vpack.c.bf16 %v1549, %v1549
      %v1566 = vpack.c.bf16 %v1550, %v1550
      %v1567 = vpack.c.bf16 %v1551, %v1551
      %v1568 = vpack.c.bf16 %v1552, %v1552
      %v1569 = vld [vmem:[%s3 + $0x48] sm:$0xff]
      %v1570 = vld [vmem:[%s3 + $0x50] sm:$0xff]
      %v1571 = vld [vmem:[%s3 + $0x58] sm:$0xff]
      %v1572 = vld [vmem:[%s3 + $0x60] sm:$0xff]
      %v1573 = vld [vmem:[%s3 + $0x68] sm:$0xff]
      %v1574 = vld [vmem:[%s3 + $0x70] sm:$0xff]
      %v1575 = vld [vmem:[%s3 + $0x78] sm:$0xff]
      %v1576 = vld [vmem:[%s3 + $0x80] sm:$0xff]
      %v1577 = vld [vmem:[%s3 + $0x158] sm:$0xff]
      %v1578 = vld [vmem:[%s3 + $0x160] sm:$0xff]
      %v1579 = vld [vmem:[%s3 + $0x168] sm:$0xff]
      %v1580 = vld [vmem:[%s3 + $0x170] sm:$0xff]
      %v1581 = vld [vmem:[%s3 + $0x178] sm:$0xff]
      %v1582 = vld [vmem:[%s3 + $0x180] sm:$0xff]
      %v1583 = vld [vmem:[%s3 + $0x188] sm:$0xff]
      %v1584 = vld [vmem:[%s3 + $0x190] sm:$0xff]
      %v1585 = vld [vmem:[%s3 + $0x268] sm:$0xff]
      %v1586 = vld [vmem:[%s3 + $0x270] sm:$0xff]
      %v1587 = vld [vmem:[%s3 + $0x278] sm:$0xff]
      %v1588 = vld [vmem:[%s3 + $0x280] sm:$0xff]
      %v1589 = vld [vmem:[%s3 + $0x288] sm:$0xff]
      %v1590 = vld [vmem:[%s3 + $0x290] sm:$0xff]
      %v1591 = vld [vmem:[%s3 + $0x298] sm:$0xff]
      %v1592 = vld [vmem:[%s3 + $0x2a0] sm:$0xff]
      %v1593 = vld [vmem:[%s3 + $0x378] sm:$0xff]
      %v1594 = vld [vmem:[%s3 + $0x380] sm:$0xff]
      %v1595 = vld [vmem:[%s3 + $0x388] sm:$0xff]
      %v1596 = vld [vmem:[%s3 + $0x390] sm:$0xff]
      %v1597 = vld [vmem:[%s3 + $0x398] sm:$0xff]
      %v1598 = vld [vmem:[%s3 + $0x3a0] sm:$0xff]
      %v1599 = vld [vmem:[%s3 + $0x3a8] sm:$0xff]
      %v1600 = vld [vmem:[%s3 + $0x3b0] sm:$0xff]
      %v1601 = vld [vmem:[%s4 + $0x15] sm:$0x1]
      %v1603 = vlaneseq
      %v1604 = vshrl.u32 %v1603, 7
      %v1605 = vsub.s32 0, %v1604
      %v1606 = vrot.slane %v1601, %v1605
      %v1640 = vunpack.c.l.b16 %v1569
      %v1641 = vunpack.c.h.b16 %v1569
      %v1642 = vunpack.c.l.b16 %v1570
      %v1643 = vunpack.c.h.b16 %v1570
      %v1644 = vunpack.c.l.b16 %v1571
      %v1645 = vunpack.c.h.b16 %v1571
      %v1646 = vunpack.c.l.b16 %v1572
      %v1647 = vunpack.c.h.b16 %v1572
      %v1648 = vunpack.c.l.b16 %v1573
      %v1649 = vunpack.c.h.b16 %v1573
      %v1650 = vunpack.c.l.b16 %v1574
      %v1651 = vunpack.c.h.b16 %v1574
      %v1652 = vunpack.c.l.b16 %v1575
      %v1653 = vunpack.c.h.b16 %v1575
      %v1654 = vunpack.c.l.b16 %v1576
      %v1655 = vunpack.c.h.b16 %v1576
      %v1656 = vunpack.c.l.b16 %v1577
      %v1657 = vunpack.c.h.b16 %v1577
      %v1658 = vunpack.c.l.b16 %v1578
      %v1659 = vunpack.c.h.b16 %v1578
      %v1660 = vunpack.c.l.b16 %v1579
      %v1661 = vunpack.c.h.b16 %v1579
      %v1662 = vunpack.c.l.b16 %v1580
      %v1663 = vunpack.c.h.b16 %v1580
      %v1664 = vunpack.c.l.b16 %v1581
      %v1665 = vunpack.c.h.b16 %v1581
      %v1666 = vunpack.c.l.b16 %v1582
      %v1667 = vunpack.c.h.b16 %v1582
      %v1668 = vunpack.c.l.b16 %v1583
      %v1669 = vunpack.c.h.b16 %v1583
      %v1670 = vunpack.c.l.b16 %v1584
      %v1671 = vunpack.c.h.b16 %v1584
      %v1672 = vunpack.c.l.b16 %v1585
      %v1673 = vunpack.c.h.b16 %v1585
      %v1674 = vunpack.c.l.b16 %v1586
      %v1675 = vunpack.c.h.b16 %v1586
      %v1676 = vunpack.c.l.b16 %v1587
      %v1677 = vunpack.c.h.b16 %v1587
      %v1678 = vunpack.c.l.b16 %v1588
      %v1679 = vunpack.c.h.b16 %v1588
      %v1680 = vunpack.c.l.b16 %v1589
      %v1681 = vunpack.c.h.b16 %v1589
      %v1682 = vunpack.c.l.b16 %v1590
      %v1683 = vunpack.c.h.b16 %v1590
      %v1684 = vunpack.c.l.b16 %v1591
      %v1685 = vunpack.c.h.b16 %v1591
      %v1686 = vunpack.c.l.b16 %v1592
      %v1687 = vunpack.c.h.b16 %v1592
      %v1688 = vunpack.c.l.b16 %v1593
      %v1689 = vunpack.c.h.b16 %v1593
      %v1690 = vunpack.c.l.b16 %v1594
      %v1691 = vunpack.c.h.b16 %v1594
      %v1692 = vunpack.c.l.b16 %v1595
      %v1693 = vunpack.c.h.b16 %v1595
      %v1694 = vunpack.c.l.b16 %v1596
      %v1695 = vunpack.c.h.b16 %v1596
      %v1696 = vunpack.c.l.b16 %v1597
      %v1697 = vunpack.c.h.b16 %v1597
      %v1698 = vunpack.c.l.b16 %v1598
      %v1699 = vunpack.c.h.b16 %v1598
      %v1700 = vunpack.c.l.b16 %v1599
      %v1701 = vunpack.c.h.b16 %v1599
      %v1702 = vunpack.c.l.b16 %v1600
      %v1703 = vunpack.c.h.b16 %v1600
      %v1704 = vpack.c.b16 %v1656, %v1640
      %v1705 = vpack.c.b16 %v1657, %v1641
      %v1706 = vpack.c.b16 %v1658, %v1642
      %v1707 = vpack.c.b16 %v1659, %v1643
      %v1708 = vpack.c.b16 %v1660, %v1644
      %v1709 = vpack.c.b16 %v1661, %v1645
      %v1710 = vpack.c.b16 %v1662, %v1646
      %v1711 = vpack.c.b16 %v1663, %v1647
      %v1712 = vpack.c.b16 %v1664, %v1648
      %v1713 = vpack.c.b16 %v1665, %v1649
      %v1714 = vpack.c.b16 %v1666, %v1650
      %v1715 = vpack.c.b16 %v1667, %v1651
      %v1716 = vpack.c.b16 %v1668, %v1652
      %v1717 = vpack.c.b16 %v1669, %v1653
      %v1718 = vpack.c.b16 %v1670, %v1654
      %v1719 = vpack.c.b16 %v1671, %v1655
      %v1720 = vpack.c.b16 %v1688, %v1672
      %v1721 = vpack.c.b16 %v1689, %v1673
      %v1722 = vpack.c.b16 %v1690, %v1674
      %v1723 = vpack.c.b16 %v1691, %v1675
      %v1724 = vpack.c.b16 %v1692, %v1676
      %v1725 = vpack.c.b16 %v1693, %v1677
      %v1726 = vpack.c.b16 %v1694, %v1678
      %v1727 = vpack.c.b16 %v1695, %v1679
      %v1728 = vpack.c.b16 %v1696, %v1680
      %v1729 = vpack.c.b16 %v1697, %v1681
      %v1730 = vpack.c.b16 %v1698, %v1682
      %v1731 = vpack.c.b16 %v1699, %v1683
      %v1732 = vpack.c.b16 %v1700, %v1684
      %v1733 = vpack.c.b16 %v1701, %v1685
      %v1734 = vpack.c.b16 %v1702, %v1686
      %v1735 = vpack.c.b16 %v1703, %v1687
      %1768 = vmatprep.subr.bf16.mxu0 %v1705
      %1769 = vmatpush1.bf16.xpose.msra.mxu0 %v1704
      %1770 = vmatprep.subr.bf16.mxu0 %v1721
      %1771 = vmatpush1.bf16.xpose.msra.mxu0 %v1720
      %1772 = vmatprep.subr.bf16.mxu0 0
      %1773 = vmatpush1.bf16.xpose.msra.mxu0 0
      %1774 = vmatprep.subr.bf16.mxu0 0
      %1775 = vmatpush1.bf16.xpose.msra.mxu0 0
      %1776 = vmatprep.subr.bf16.mxu0 0
      %1777 = vmatpush1.bf16.xpose.msra.mxu0 0
      %1778 = vmatprep.subr.bf16.mxu0 0
      %1779 = vmatpush1.bf16.xpose.msra.mxu0 0
      %1780 = vmatprep.subr.bf16.mxu0 0
      %1781 = vmatpush1.bf16.xpose.msra.mxu0 0
      %1782 = vmatprep.subr.bf16.mxu0 0
      %1783 = vmatpush1.bf16.xpose.msra.mxu0 0
      %1784 = vmatprep.subr.bf16.mxu0 0
      %1785 = vmatpush1.bf16.xpose.msra.mxu0 0
      %1786 = vmatprep.subr.bf16.mxu0 0
      %1787 = vmatpush1.bf16.xpose.msra.mxu0 0
      %1788 = vmatprep.subr.bf16.mxu0 0
      %1789 = vmatpush1.bf16.xpose.msra.mxu0 0
      %1790 = vmatprep.subr.bf16.mxu0 0
      %1791 = vmatpush1.bf16.xpose.msra.mxu0 0
      %1792 = vmatprep.subr.bf16.mxu0 0
      %1793 = vmatpush1.bf16.xpose.msra.mxu0 0
      %1794 = vmatprep.subr.bf16.mxu0 0
      %1795 = vmatpush1.bf16.xpose.msra.mxu0 0
      %1796 = vmatprep.subr.bf16.mxu0 0
      %1797 = vmatpush1.bf16.xpose.msra.mxu0 0
      %1798 = vmatprep.subr.bf16.mxu0 0
      %1799 = vmatpush1.bf16.xpose.msra.mxu0 0
      %1800 = vmatprep.mubr.bf16.mxu0 %v1554
      %1801 = vmatmul.mubr.bf16.gmra.mrb[0].mxu0 %v1553
      %v1802 = vpop.f32.mrb[0].mxu0
      %v1803 = vadd.f32 %v1606, %v1802
      %v1804 = vpop.f32.mrb[0].mxu0
      %v1805 = vpop.f32.mrb[0].mxu0
      %v1806 = vpop.f32.mrb[0].mxu0
      %1807 = vdwg.mxu0
      %1808 = vmatprep.subr.bf16.mxu0 %v1707
      %1809 = vmatpush1.bf16.xpose.msra.mxu0 %v1706
      %1810 = vmatprep.subr.bf16.mxu0 %v1723
      %1811 = vmatpush1.bf16.xpose.msra.mxu0 %v1722
      %1812 = vmatprep.subr.bf16.mxu0 0
      %1813 = vmatpush1.bf16.xpose.msra.mxu0 0
      %1814 = vmatprep.subr.bf16.mxu0 0
      %1815 = vmatpush1.bf16.xpose.msra.mxu0 0
      %1816 = vmatprep.subr.bf16.mxu0 0
      %1817 = vmatpush1.bf16.xpose.msra.mxu0 0
      %1818 = vmatprep.subr.bf16.mxu0 0
      %1819 = vmatpush1.bf16.xpose.msra.mxu0 0
      %1820 = vmatprep.subr.bf16.mxu0 0
      %1821 = vmatpush1.bf16.xpose.msra.mxu0 0
      %1822 = vmatprep.subr.bf16.mxu0 0
      %1823 = vmatpush1.bf16.xpose.msra.mxu0 0
      %1824 = vmatprep.subr.bf16.mxu0 0
      %1825 = vmatpush1.bf16.xpose.msra.mxu0 0
      %1826 = vmatprep.subr.bf16.mxu0 0
      %1827 = vmatpush1.bf16.xpose.msra.mxu0 0
      %1828 = vmatprep.subr.bf16.mxu0 0
      %1829 = vmatpush1.bf16.xpose.msra.mxu0 0
      %1830 = vmatprep.subr.bf16.mxu0 0
      %1831 = vmatpush1.bf16.xpose.msra.mxu0 0
      %1832 = vmatprep.subr.bf16.mxu0 0
      %1833 = vmatpush1.bf16.xpose.msra.mxu0 0
      %1834 = vmatprep.subr.bf16.mxu0 0
      %1835 = vmatpush1.bf16.xpose.msra.mxu0 0
      %1836 = vmatprep.subr.bf16.mxu0 0
      %1837 = vmatpush1.bf16.xpose.msra.mxu0 0
      %1838 = vmatprep.subr.bf16.mxu0 0
      %1839 = vmatpush1.bf16.xpose.msra.mxu0 0
      %1840 = vmatprep.mubr.bf16.mxu0 %v1556
      %1841 = vmatmul.mubr.bf16.gmra.mrb[0].mxu0 %v1555
      %v1842 = vpop.f32.mrb[0].mxu0
      %v1843 = vadd.f32 %v1803, %v1842
      %v1844 = vpop.f32.mrb[0].mxu0
      %v1845 = vpop.f32.mrb[0].mxu0
      %v1846 = vpop.f32.mrb[0].mxu0
      %1847 = vdwg.mxu0
      %1848 = vmatprep.subr.bf16.mxu0 %v1709
      %1849 = vmatpush1.bf16.xpose.msra.mxu0 %v1708
      %1850 = vmatprep.subr.bf16.mxu0 %v1725
      %1851 = vmatpush1.bf16.xpose.msra.mxu0 %v1724
      %1852 = vmatprep.subr.bf16.mxu0 0
      %1853 = vmatpush1.bf16.xpose.msra.mxu0 0
      %1854 = vmatprep.subr.bf16.mxu0 0
      %1855 = vmatpush1.bf16.xpose.msra.mxu0 0
      %1856 = vmatprep.subr.bf16.mxu0 0
      %1857 = vmatpush1.bf16.xpose.msra.mxu0 0
      %1858 = vmatprep.subr.bf16.mxu0 0
      %1859 = vmatpush1.bf16.xpose.msra.mxu0 0
      %1860 = vmatprep.subr.bf16.mxu0 0
      %1861 = vmatpush1.bf16.xpose.msra.mxu0 0
      %1862 = vmatprep.subr.bf16.mxu0 0
      %1863 = vmatpush1.bf16.xpose.msra.mxu0 0
      %1864 = vmatprep.subr.bf16.mxu0 0
      %1865 = vmatpush1.bf16.xpose.msra.mxu0 0
      %1866 = vmatprep.subr.bf16.mxu0 0
      %1867 = vmatpush1.bf16.xpose.msra.mxu0 0
      %1868 = vmatprep.subr.bf16.mxu0 0
      %1869 = vmatpush1.bf16.xpose.msra.mxu0 0
      %1870 = vmatprep.subr.bf16.mxu0 0
      %1871 = vmatpush1.bf16.xpose.msra.mxu0 0
      %1872 = vmatprep.subr.bf16.mxu0 0
      %1873 = vmatpush1.bf16.xpose.msra.mxu0 0
      %1874 = vmatprep.subr.bf16.mxu0 0
      %1875 = vmatpush1.bf16.xpose.msra.mxu0 0
      %1876 = vmatprep.subr.bf16.mxu0 0
      %1877 = vmatpush1.bf16.xpose.msra.mxu0 0
      %1878 = vmatprep.subr.bf16.mxu0 0
      %1879 = vmatpush1.bf16.xpose.msra.mxu0 0
      %1880 = vmatprep.mubr.bf16.mxu0 %v1558
      %1881 = vmatmul.mubr.bf16.gmra.mrb[0].mxu0 %v1557
      %v1882 = vpop.f32.mrb[0].mxu0
      %v1883 = vadd.f32 %v1843, %v1882
      %v1884 = vpop.f32.mrb[0].mxu0
      %v1885 = vpop.f32.mrb[0].mxu0
      %v1886 = vpop.f32.mrb[0].mxu0
      %1887 = vdwg.mxu0
      %1888 = vmatprep.subr.bf16.mxu0 %v1711
      %1889 = vmatpush1.bf16.xpose.msra.mxu0 %v1710
      %1890 = vmatprep.subr.bf16.mxu0 %v1727
      %1891 = vmatpush1.bf16.xpose.msra.mxu0 %v1726
      %1892 = vmatprep.subr.bf16.mxu0 0
      %1893 = vmatpush1.bf16.xpose.msra.mxu0 0
      %1894 = vmatprep.subr.bf16.mxu0 0
      %1895 = vmatpush1.bf16.xpose.msra.mxu0 0
      %1896 = vmatprep.subr.bf16.mxu0 0
      %1897 = vmatpush1.bf16.xpose.msra.mxu0 0
      %1898 = vmatprep.subr.bf16.mxu0 0
      %1899 = vmatpush1.bf16.xpose.msra.mxu0 0
      %1900 = vmatprep.subr.bf16.mxu0 0
      %1901 = vmatpush1.bf16.xpose.msra.mxu0 0
      %1902 = vmatprep.subr.bf16.mxu0 0
      %1903 = vmatpush1.bf16.xpose.msra.mxu0 0
      %1904 = vmatprep.subr.bf16.mxu0 0
      %1905 = vmatpush1.bf16.xpose.msra.mxu0 0
      %1906 = vmatprep.subr.bf16.mxu0 0
      %1907 = vmatpush1.bf16.xpose.msra.mxu0 0
      %1908 = vmatprep.subr.bf16.mxu0 0
      %1909 = vmatpush1.bf16.xpose.msra.mxu0 0
      %1910 = vmatprep.subr.bf16.mxu0 0
      %1911 = vmatpush1.bf16.xpose.msra.mxu0 0
      %1912 = vmatprep.subr.bf16.mxu0 0
      %1913 = vmatpush1.bf16.xpose.msra.mxu0 0
      %1914 = vmatprep.subr.bf16.mxu0 0
      %1915 = vmatpush1.bf16.xpose.msra.mxu0 0
      %1916 = vmatprep.subr.bf16.mxu0 0
      %1917 = vmatpush1.bf16.xpose.msra.mxu0 0
      %1918 = vmatprep.subr.bf16.mxu0 0
      %1919 = vmatpush1.bf16.xpose.msra.mxu0 0
      %1920 = vmatprep.mubr.bf16.mxu0 %v1560
      %1921 = vmatmul.mubr.bf16.gmra.mrb[0].mxu0 %v1559
      %v1922 = vpop.f32.mrb[0].mxu0
      %v1923 = vadd.f32 %v1883, %v1922
      %v1924 = vpop.f32.mrb[0].mxu0
      %v1925 = vpop.f32.mrb[0].mxu0
      %v1926 = vpop.f32.mrb[0].mxu0
      %1927 = vdwg.mxu0
      %1928 = vmatprep.subr.bf16.mxu0 %v1713
      %1929 = vmatpush1.bf16.xpose.msra.mxu0 %v1712
      %1930 = vmatprep.subr.bf16.mxu0 %v1729
      %1931 = vmatpush1.bf16.xpose.msra.mxu0 %v1728
      %1932 = vmatprep.subr.bf16.mxu0 0
      %1933 = vmatpush1.bf16.xpose.msra.mxu0 0
      %1934 = vmatprep.subr.bf16.mxu0 0
      %1935 = vmatpush1.bf16.xpose.msra.mxu0 0
      %1936 = vmatprep.subr.bf16.mxu0 0
      %1937 = vmatpush1.bf16.xpose.msra.mxu0 0
      %1938 = vmatprep.subr.bf16.mxu0 0
      %1939 = vmatpush1.bf16.xpose.msra.mxu0 0
      %1940 = vmatprep.subr.bf16.mxu0 0
      %1941 = vmatpush1.bf16.xpose.msra.mxu0 0
      %1942 = vmatprep.subr.bf16.mxu0 0
      %1943 = vmatpush1.bf16.xpose.msra.mxu0 0
      %1944 = vmatprep.subr.bf16.mxu0 0
      %1945 = vmatpush1.bf16.xpose.msra.mxu0 0
      %1946 = vmatprep.subr.bf16.mxu0 0
      %1947 = vmatpush1.bf16.xpose.msra.mxu0 0
      %1948 = vmatprep.subr.bf16.mxu0 0
      %1949 = vmatpush1.bf16.xpose.msra.mxu0 0
      %1950 = vmatprep.subr.bf16.mxu0 0
      %1951 = vmatpush1.bf16.xpose.msra.mxu0 0
      %1952 = vmatprep.subr.bf16.mxu0 0
      %1953 = vmatpush1.bf16.xpose.msra.mxu0 0
      %1954 = vmatprep.subr.bf16.mxu0 0
      %1955 = vmatpush1.bf16.xpose.msra.mxu0 0
      %1956 = vmatprep.subr.bf16.mxu0 0
      %1957 = vmatpush1.bf16.xpose.msra.mxu0 0
      %1958 = vmatprep.subr.bf16.mxu0 0
      %1959 = vmatpush1.bf16.xpose.msra.mxu0 0
      %1960 = vmatprep.mubr.bf16.mxu0 %v1562
      %1961 = vmatmul.mubr.bf16.gmra.mrb[0].mxu0 %v1561
      %v1962 = vpop.f32.mrb[0].mxu0
      %v1963 = vadd.f32 %v1923, %v1962
      %v1964 = vpop.f32.mrb[0].mxu0
      %v1965 = vpop.f32.mrb[0].mxu0
      %v1966 = vpop.f32.mrb[0].mxu0
      %1967 = vdwg.mxu0
      %1968 = vmatprep.subr.bf16.mxu0 %v1715
      %1969 = vmatpush1.bf16.xpose.msra.mxu0 %v1714
      %1970 = vmatprep.subr.bf16.mxu0 %v1731
      %1971 = vmatpush1.bf16.xpose.msra.mxu0 %v1730
      %1972 = vmatprep.subr.bf16.mxu0 0
      %1973 = vmatpush1.bf16.xpose.msra.mxu0 0
      %1974 = vmatprep.subr.bf16.mxu0 0
      %1975 = vmatpush1.bf16.xpose.msra.mxu0 0
      %1976 = vmatprep.subr.bf16.mxu0 0
      %1977 = vmatpush1.bf16.xpose.msra.mxu0 0
      %1978 = vmatprep.subr.bf16.mxu0 0
      %1979 = vmatpush1.bf16.xpose.msra.mxu0 0
      %1980 = vmatprep.subr.bf16.mxu0 0
      %1981 = vmatpush1.bf16.xpose.msra.mxu0 0
      %1982 = vmatprep.subr.bf16.mxu0 0
      %1983 = vmatpush1.bf16.xpose.msra.mxu0 0
      %1984 = vmatprep.subr.bf16.mxu0 0
      %1985 = vmatpush1.bf16.xpose.msra.mxu0 0
      %1986 = vmatprep.subr.bf16.mxu0 0
      %1987 = vmatpush1.bf16.xpose.msra.mxu0 0
      %1988 = vmatprep.subr.bf16.mxu0 0
      %1989 = vmatpush1.bf16.xpose.msra.mxu0 0
      %1990 = vmatprep.subr.bf16.mxu0 0
      %1991 = vmatpush1.bf16.xpose.msra.mxu0 0
      %1992 = vmatprep.subr.bf16.mxu0 0
      %1993 = vmatpush1.bf16.xpose.msra.mxu0 0
      %1994 = vmatprep.subr.bf16.mxu0 0
      %1995 = vmatpush1.bf16.xpose.msra.mxu0 0
      %1996 = vmatprep.subr.bf16.mxu0 0
      %1997 = vmatpush1.bf16.xpose.msra.mxu0 0
      %1998 = vmatprep.subr.bf16.mxu0 0
      %1999 = vmatpush1.bf16.xpose.msra.mxu0 0
      %2000 = vmatprep.mubr.bf16.mxu0 %v1564
      %2001 = vmatmul.mubr.bf16.gmra.mrb[0].mxu0 %v1563
      %v2002 = vpop.f32.mrb[0].mxu0
      %v2003 = vadd.f32 %v1963, %v2002
      %v2004 = vpop.f32.mrb[0].mxu0
      %v2005 = vpop.f32.mrb[0].mxu0
      %v2006 = vpop.f32.mrb[0].mxu0
      %2007 = vdwg.mxu0
      %2008 = vmatprep.subr.bf16.mxu0 %v1717
      %2009 = vmatpush1.bf16.xpose.msra.mxu0 %v1716
      %2010 = vmatprep.subr.bf16.mxu0 %v1733
      %2011 = vmatpush1.bf16.xpose.msra.mxu0 %v1732
      %2012 = vmatprep.subr.bf16.mxu0 0
      %2013 = vmatpush1.bf16.xpose.msra.mxu0 0
      %2014 = vmatprep.subr.bf16.mxu0 0
      %2015 = vmatpush1.bf16.xpose.msra.mxu0 0
      %2016 = vmatprep.subr.bf16.mxu0 0
      %2017 = vmatpush1.bf16.xpose.msra.mxu0 0
      %2018 = vmatprep.subr.bf16.mxu0 0
      %2019 = vmatpush1.bf16.xpose.msra.mxu0 0
      %2020 = vmatprep.subr.bf16.mxu0 0
      %2021 = vmatpush1.bf16.xpose.msra.mxu0 0
      %2022 = vmatprep.subr.bf16.mxu0 0
      %2023 = vmatpush1.bf16.xpose.msra.mxu0 0
      %2024 = vmatprep.subr.bf16.mxu0 0
      %2025 = vmatpush1.bf16.xpose.msra.mxu0 0
      %2026 = vmatprep.subr.bf16.mxu0 0
      %2027 = vmatpush1.bf16.xpose.msra.mxu0 0
      %2028 = vmatprep.subr.bf16.mxu0 0
      %2029 = vmatpush1.bf16.xpose.msra.mxu0 0
      %2030 = vmatprep.subr.bf16.mxu0 0
      %2031 = vmatpush1.bf16.xpose.msra.mxu0 0
      %2032 = vmatprep.subr.bf16.mxu0 0
      %2033 = vmatpush1.bf16.xpose.msra.mxu0 0
      %2034 = vmatprep.subr.bf16.mxu0 0
      %2035 = vmatpush1.bf16.xpose.msra.mxu0 0
      %2036 = vmatprep.subr.bf16.mxu0 0
      %2037 = vmatpush1.bf16.xpose.msra.mxu0 0
      %2038 = vmatprep.subr.bf16.mxu0 0
      %2039 = vmatpush1.bf16.xpose.msra.mxu0 0
      %2040 = vmatprep.mubr.bf16.mxu0 %v1566
      %2041 = vmatmul.mubr.bf16.gmra.mrb[0].mxu0 %v1565
      %v2042 = vpop.f32.mrb[0].mxu0
      %v2043 = vadd.f32 %v2003, %v2042
      %v2044 = vpop.f32.mrb[0].mxu0
      %v2045 = vpop.f32.mrb[0].mxu0
      %v2046 = vpop.f32.mrb[0].mxu0
      %2047 = vdwg.mxu0
      %2048 = vmatprep.subr.bf16.mxu0 %v1719
      %2049 = vmatpush1.bf16.xpose.msra.mxu0 %v1718
      %2050 = vmatprep.subr.bf16.mxu0 %v1735
      %2051 = vmatpush1.bf16.xpose.msra.mxu0 %v1734
      %2052 = vmatprep.subr.bf16.mxu0 0
      %2053 = vmatpush1.bf16.xpose.msra.mxu0 0
      %2054 = vmatprep.subr.bf16.mxu0 0
      %2055 = vmatpush1.bf16.xpose.msra.mxu0 0
      %2056 = vmatprep.subr.bf16.mxu0 0
      %2057 = vmatpush1.bf16.xpose.msra.mxu0 0
      %2058 = vmatprep.subr.bf16.mxu0 0
      %2059 = vmatpush1.bf16.xpose.msra.mxu0 0
      %2060 = vmatprep.subr.bf16.mxu0 0
      %2061 = vmatpush1.bf16.xpose.msra.mxu0 0
      %2062 = vmatprep.subr.bf16.mxu0 0
      %2063 = vmatpush1.bf16.xpose.msra.mxu0 0
      %2064 = vmatprep.subr.bf16.mxu0 0
      %2065 = vmatpush1.bf16.xpose.msra.mxu0 0
      %2066 = vmatprep.subr.bf16.mxu0 0
      %2067 = vmatpush1.bf16.xpose.msra.mxu0 0
      %2068 = vmatprep.subr.bf16.mxu0 0
      %2069 = vmatpush1.bf16.xpose.msra.mxu0 0
      %2070 = vmatprep.subr.bf16.mxu0 0
      %2071 = vmatpush1.bf16.xpose.msra.mxu0 0
      %2072 = vmatprep.subr.bf16.mxu0 0
      %2073 = vmatpush1.bf16.xpose.msra.mxu0 0
      %2074 = vmatprep.subr.bf16.mxu0 0
      %2075 = vmatpush1.bf16.xpose.msra.mxu0 0
      %2076 = vmatprep.subr.bf16.mxu0 0
      %2077 = vmatpush1.bf16.xpose.msra.mxu0 0
      %2078 = vmatprep.subr.bf16.mxu0 0
      %2079 = vmatpush1.bf16.xpose.msra.mxu0 0
      %2080 = vmatprep.mubr.bf16.mxu0 %v1568
      %2081 = vmatmul.mubr.bf16.gmra.mrb[0].mxu0 %v1567
      %v2082 = vpop.f32.mrb[0].mxu0
      %v2083 = vadd.f32 %v2043, %v2082
      %v2084 = vpop.f32.mrb[0].mxu0
      %v2085 = vpop.f32.mrb[0].mxu0
      %v2086 = vpop.f32.mrb[0].mxu0
      %2087 = vdwg.mxu0
      %v2088 = vld [vmem:[%s4 + $0x16] sm:$0x1]
      %v2089 = vld [vmem:[%s4 + $0x17] sm:$0x1]
      %v2090 = vadd.f32 %v928, %v2083
      %v2091 = vsel %vm324, %v2090, 0.0
      %2092 = vadd.xlane.f32.xlu0 %v2091
      %v2093 = vpop.xlane.xlu0 %2092
      %v2094 = vmul.f32 %v2093, %v904
      %v2095 = vsub.f32 %v2090, %v2094
      %v2096 = vmul.f32 %v2095, %v2095
      %v2097 = vsel %vm324, %v2096, 0.0
      %2098 = vadd.xlane.f32.xlu0 %v2097
      %v2099 = vpop.xlane.xlu0 %2098
      %v2100 = vmul.f32 %v2099, %v904
      %v2101 = vadd.f32 %v2100, 1e-05
      %v2102 = vrsqrt.pop %v2101
      %v2103 = vmul.f32 %v2095, %v2102
      %v2105 = vlaneseq
      %v2106 = vshrl.u32 %v2105, 7
      %v2107 = vsub.s32 0, %v2106
      %v2108 = vrot.slane %v2088, %v2107
      %v2110 = vmul.f32 %v2103, %v2108
      %v2112 = vlaneseq
      %v2113 = vshrl.u32 %v2112, 7
      %v2114 = vsub.s32 0, %v2113
      %v2115 = vrot.slane %v2089, %v2114
      %v2117 = vadd.f32 %v2110, %v2115
      %v2118 = vpack.c.bf16 %v2117, %v2117
      %v2119 = vld [vmem:[%s3 + $0x88] sm:$0xf]
      %v2120 = vld [vmem:[%s3 + $0x198] sm:$0xf]
      %v2121 = vld [vmem:[%s3 + $0x2a8] sm:$0xf]
      %v2122 = vld [vmem:[%s3 + $0x3b8] sm:$0xf]
      %v2123 = vld [vmem:[%s4 + $0x18] sm:$0x1]
      %v2125 = vlaneseq
      %v2126 = vshrl.u32 %v2125, 7
      %v2127 = vsub.s32 0, %v2126
      %v2128 = vrot.slane %v2123, %v2127
      %v2134 = vunpack.c.l.b16 %v2119
      %v2135 = vunpack.c.l.b16 %v2120
      %v2136 = vunpack.c.l.b16 %v2121
      %v2137 = vunpack.c.l.b16 %v2122
      %v2138 = vpack.c.b16 %v2135, %v2134
      %v2139 = vpack.c.b16 %v2137, %v2136
      %v2143 = vsel %vm324, %v2118, 0
      %2145 = vmatprep.subr.bf16.mxu0 0
      %2146 = vmatpush1.bf16.msra.mxu0 %v2138
      %2147 = vmatprep.subr.bf16.mxu0 0
      %2148 = vmatpush1.bf16.msra.mxu0 %v2139
      %2149 = vmatprep.subr.bf16.mxu0 0
      %2150 = vmatpush1.bf16.msra.mxu0 0
      %2151 = vmatprep.subr.bf16.mxu0 0
      %2152 = vmatpush1.bf16.msra.mxu0 0
      %2153 = vmatprep.subr.bf16.mxu0 0
      %2154 = vmatpush1.bf16.msra.mxu0 0
      %2155 = vmatprep.subr.bf16.mxu0 0
      %2156 = vmatpush1.bf16.msra.mxu0 0
      %2157 = vmatprep.subr.bf16.mxu0 0
      %2158 = vmatpush1.bf16.msra.mxu0 0
      %2159 = vmatprep.subr.bf16.mxu0 0
      %2160 = vmatpush1.bf16.msra.mxu0 0
      %2161 = vmatprep.subr.bf16.mxu0 0
      %2162 = vmatpush1.bf16.msra.mxu0 0
      %2163 = vmatprep.subr.bf16.mxu0 0
      %2164 = vmatpush1.bf16.msra.mxu0 0
      %2165 = vmatprep.subr.bf16.mxu0 0
      %2166 = vmatpush1.bf16.msra.mxu0 0
      %2167 = vmatprep.subr.bf16.mxu0 0
      %2168 = vmatpush1.bf16.msra.mxu0 0
      %2169 = vmatprep.subr.bf16.mxu0 0
      %2170 = vmatpush1.bf16.msra.mxu0 0
      %2171 = vmatprep.subr.bf16.mxu0 0
      %2172 = vmatpush1.bf16.msra.mxu0 0
      %2173 = vmatprep.subr.bf16.mxu0 0
      %2174 = vmatpush1.bf16.msra.mxu0 0
      %2175 = vmatprep.subr.bf16.mxu0 0
      %2176 = vmatpush1.bf16.msra.mxu0 0
      %2177 = vmatprep.mubr.bf16.mxu0 0
      %2178 = vmatmul.mubr.bf16.gmra.mrb[0].mxu0 %v2143
      %v2179 = vpop.f32.mrb[0].mxu0
      %v2180 = vadd.f32 %v2128, %v2179
      %v2181 = vpop.f32.mrb[0].mxu0
      %v2182 = vpop.f32.mrb[0].mxu0
      %v2183 = vpop.f32.mrb[0].mxu0
      %2184 = vdwg.mxu0
      %v2185 = vpack.c.bf16 %v2180, %v2180
      %2187 = vrot.lane.b32.xlu0 %v2185, 96
      %v2188 = vpop.permute.xlu0 %2187
      %v2190 = vsel %vm372, %v2185, 0
      %v2193 = vsel %vm372, %v2188, 0
      %2195 = vmatprep.subr.bf16.mxu0 0
      %2196 = vmatpush1.bf16.xpose.msra.mxu0 %v2193
      %2197 = vmatprep.subr.bf16.mxu0 0
      %2198 = vmatpush1.bf16.xpose.msra.mxu0 0
      %2199 = vmatprep.subr.bf16.mxu0 0
      %2200 = vmatpush1.bf16.xpose.msra.mxu0 0
      %2201 = vmatprep.subr.bf16.mxu0 0
      %2202 = vmatpush1.bf16.xpose.msra.mxu0 0
      %2203 = vmatprep.subr.bf16.mxu0 0
      %2204 = vmatpush1.bf16.xpose.msra.mxu0 0
      %2205 = vmatprep.subr.bf16.mxu0 0
      %2206 = vmatpush1.bf16.xpose.msra.mxu0 0
      %2207 = vmatprep.subr.bf16.mxu0 0
      %2208 = vmatpush1.bf16.xpose.msra.mxu0 0
      %2209 = vmatprep.subr.bf16.mxu0 0
      %2210 = vmatpush1.bf16.xpose.msra.mxu0 0
      %2211 = vmatprep.subr.bf16.mxu0 0
      %2212 = vmatpush1.bf16.xpose.msra.mxu0 0
      %2213 = vmatprep.subr.bf16.mxu0 0
      %2214 = vmatpush1.bf16.xpose.msra.mxu0 0
      %2215 = vmatprep.subr.bf16.mxu0 0
      %2216 = vmatpush1.bf16.xpose.msra.mxu0 0
      %2217 = vmatprep.subr.bf16.mxu0 0
      %2218 = vmatpush1.bf16.xpose.msra.mxu0 0
      %2219 = vmatprep.subr.bf16.mxu0 0
      %2220 = vmatpush1.bf16.xpose.msra.mxu0 0
      %2221 = vmatprep.subr.bf16.mxu0 0
      %2222 = vmatpush1.bf16.xpose.msra.mxu0 0
      %2223 = vmatprep.subr.bf16.mxu0 0
      %2224 = vmatpush1.bf16.xpose.msra.mxu0 0
      %2225 = vmatprep.subr.bf16.mxu0 0
      %2226 = vmatpush1.bf16.xpose.msra.mxu0 0
      %2227 = vmatprep.mubr.bf16.mxu0 0
      %2228 = vmatmul.mubr.bf16.gmra.mrb[0].mxu0 %v2190
      %v2229 = vpop.f32.mrb[0].mxu0
      %v2230 = vadd.f32 0.0, %v2229
      %v2231 = vpop.f32.mrb[0].mxu0
      %v2232 = vpop.f32.mrb[0].mxu0
      %v2233 = vpop.f32.mrb[0].mxu0
      %2234 = vdwg.mxu0
      %v2235 = vmul.f32 %v2230, 0.35355338
      %v2236 = vsel %vm372, %v2235, -inf
      %2237 = vmax.xlane.f32.xlu0 %v2236
      %v2238 = vpop.xlane.xlu0 %2237
      %v2239 = vsub.f32 %v2235, %v2238
      %v2240 = vmul.f32 %v2239, 1.442695
      %v2241 = vpow.pop %v2240
      %v2242 = vsel %vm372, %v2241, 0.0
      %2243 = vadd.xlane.f32.xlu0 %v2242
      %v2244 = vpop.xlane.xlu0 %2243
      %v2245 = vrcp.pop %v2244
      %v2246 = vmul.f32 %v2241, %v2245
      %v2247 = vpack.c.bf16 %v2246, %v2246
      %2248 = vrot.lane.b32.xlu0 %v2185, 64
      %v2249 = vpop.permute.xlu0 %2248
      %v2251 = vsel %vm372, %v2247, 0
      %v2254 = vsel %vm437, %v2249, 0
      %2256 = vmatprep.subr.bf16.mxu0 0
      %2257 = vmatpush1.bf16.msra.mxu0 %v2254
      %2258 = vmatprep.subr.bf16.mxu0 0
      %2259 = vmatpush1.bf16.msra.mxu0 0
      %2260 = vmatprep.subr.bf16.mxu0 0
      %2261 = vmatpush1.bf16.msra.mxu0 0
      %2262 = vmatprep.subr.bf16.mxu0 0
      %2263 = vmatpush1.bf16.msra.mxu0 0
      %2264 = vmatprep.subr.bf16.mxu0 0
      %2265 = vmatpush1.bf16.msra.mxu0 0
      %2266 = vmatprep.subr.bf16.mxu0 0
      %2267 = vmatpush1.bf16.msra.mxu0 0
      %2268 = vmatprep.subr.bf16.mxu0 0
      %2269 = vmatpush1.bf16.msra.mxu0 0
      %2270 = vmatprep.subr.bf16.mxu0 0
      %2271 = vmatpush1.bf16.msra.mxu0 0
      %2272 = vmatprep.subr.bf16.mxu0 0
      %2273 = vmatpush1.bf16.msra.mxu0 0
      %2274 = vmatprep.subr.bf16.mxu0 0
      %2275 = vmatpush1.bf16.msra.mxu0 0
      %2276 = vmatprep.subr.bf16.mxu0 0
      %2277 = vmatpush1.bf16.msra.mxu0 0
      %2278 = vmatprep.subr.bf16.mxu0 0
      %2279 = vmatpush1.bf16.msra.mxu0 0
      %2280 = vmatprep.subr.bf16.mxu0 0
      %2281 = vmatpush1.bf16.msra.mxu0 0
      %2282 = vmatprep.subr.bf16.mxu0 0
      %2283 = vmatpush1.bf16.msra.mxu0 0
      %2284 = vmatprep.subr.bf16.mxu0 0
      %2285 = vmatpush1.bf16.msra.mxu0 0
      %2286 = vmatprep.subr.bf16.mxu0 0
      %2287 = vmatpush1.bf16.msra.mxu0 0
      %2288 = vmatprep.mubr.bf16.mxu0 0
      %2289 = vmatmul.mubr.bf16.gmra.mrb[0].mxu0 %v2251
      %v2290 = vpop.f32.mrb[0].mxu0
      %v2291 = vadd.f32 0.0, %v2290
      %v2292 = vpop.f32.mrb[0].mxu0
      %v2293 = vpop.f32.mrb[0].mxu0
      %v2294 = vpop.f32.mrb[0].mxu0
      %2295 = vdwg.mxu0
      %2296 = vrot.lane.b32.xlu0 %v2185, 120
      %v2297 = vpop.permute.xlu0 %2296
      %2298 = vrot.lane.b32.xlu0 %v2185, 88
      %v2299 = vpop.permute.xlu0 %2298
      %v2301 = vsel %vm372, %v2297, 0
      %v2304 = vsel %vm372, %v2299, 0
      %2306 = vmatprep.subr.bf16.mxu0 0
      %2307 = vmatpush1.bf16.xpose.msra.mxu0 %v2304
      %2308 = vmatprep.subr.bf16.mxu0 0
      %2309 = vmatpush1.bf16.xpose.msra.mxu0 0
      %2310 = vmatprep.subr.bf16.mxu0 0
      %2311 = vmatpush1.bf16.xpose.msra.mxu0 0
      %2312 = vmatprep.subr.bf16.mxu0 0
      %2313 = vmatpush1.bf16.xpose.msra.mxu0 0
      %2314 = vmatprep.subr.bf16.mxu0 0
      %2315 = vmatpush1.bf16.xpose.msra.mxu0 0
      %2316 = vmatprep.subr.bf16.mxu0 0
      %2317 = vmatpush1.bf16.xpose.msra.mxu0 0
      %2318 = vmatprep.subr.bf16.mxu0 0
      %2319 = vmatpush1.bf16.xpose.msra.mxu0 0
      %2320 = vmatprep.subr.bf16.mxu0 0
      %2321 = vmatpush1.bf16.xpose.msra.mxu0 0
      %2322 = vmatprep.subr.bf16.mxu0 0
      %2323 = vmatpush1.bf16.xpose.msra.mxu0 0
      %2324 = vmatprep.subr.bf16.mxu0 0
      %2325 = vmatpush1.bf16.xpose.msra.mxu0 0
      %2326 = vmatprep.subr.bf16.mxu0 0
      %2327 = vmatpush1.bf16.xpose.msra.mxu0 0
      %2328 = vmatprep.subr.bf16.mxu0 0
      %2329 = vmatpush1.bf16.xpose.msra.mxu0 0
      %2330 = vmatprep.subr.bf16.mxu0 0
      %2331 = vmatpush1.bf16.xpose.msra.mxu0 0
      %2332 = vmatprep.subr.bf16.mxu0 0
      %2333 = vmatpush1.bf16.xpose.msra.mxu0 0
      %2334 = vmatprep.subr.bf16.mxu0 0
      %2335 = vmatpush1.bf16.xpose.msra.mxu0 0
      %2336 = vmatprep.subr.bf16.mxu0 0
      %2337 = vmatpush1.bf16.xpose.msra.mxu0 0
      %2338 = vmatprep.mubr.bf16.mxu0 0
      %2339 = vmatmul.mubr.bf16.gmra.mrb[0].mxu0 %v2301
      %v2340 = vpop.f32.mrb[0].mxu0
      %v2341 = vadd.f32 0.0, %v2340
      %v2342 = vpop.f32.mrb[0].mxu0
      %v2343 = vpop.f32.mrb[0].mxu0
      %v2344 = vpop.f32.mrb[0].mxu0
      %2345 = vdwg.mxu0
      %v2346 = vmul.f32 %v2341, 0.35355338
      %v2347 = vsel %vm372, %v2346, -inf
      %2348 = vmax.xlane.f32.xlu0 %v2347
      %v2349 = vpop.xlane.xlu0 %2348
      %v2350 = vsub.f32 %v2346, %v2349
      %v2351 = vmul.f32 %v2350, 1.442695
      %v2352 = vpow.pop %v2351
      %v2353 = vsel %vm372, %v2352, 0.0
      %2354 = vadd.xlane.f32.xlu0 %v2353
      %v2355 = vpop.xlane.xlu0 %2354
      %v2356 = vrcp.pop %v2355
      %v2357 = vmul.f32 %v2352, %v2356
      %v2358 = vpack.c.bf16 %v2357, %v2357
      %2359 = vrot.lane.b32.xlu0 %v2185, 56
      %v2360 = vpop.permute.xlu0 %2359
      %v2362 = vsel %vm372, %v2358, 0
      %v2365 = vsel %vm437, %v2360, 0
      %2367 = vmatprep.subr.bf16.mxu0 0
      %2368 = vmatpush1.bf16.msra.mxu0 %v2365
      %2369 = vmatprep.subr.bf16.mxu0 0
      %2370 = vmatpush1.bf16.msra.mxu0 0
      %2371 = vmatprep.subr.bf16.mxu0 0
      %2372 = vmatpush1.bf16.msra.mxu0 0
      %2373 = vmatprep.subr.bf16.mxu0 0
      %2374 = vmatpush1.bf16.msra.mxu0 0
      %2375 = vmatprep.subr.bf16.mxu0 0
      %2376 = vmatpush1.bf16.msra.mxu0 0
      %2377 = vmatprep.subr.bf16.mxu0 0
      %2378 = vmatpush1.bf16.msra.mxu0 0
      %2379 = vmatprep.subr.bf16.mxu0 0
      %2380 = vmatpush1.bf16.msra.mxu0 0
      %2381 = vmatprep.subr.bf16.mxu0 0
      %2382 = vmatpush1.bf16.msra.mxu0 0
      %2383 = vmatprep.subr.bf16.mxu0 0
      %2384 = vmatpush1.bf16.msra.mxu0 0
      %2385 = vmatprep.subr.bf16.mxu0 0
      %2386 = vmatpush1.bf16.msra.mxu0 0
      %2387 = vmatprep.subr.bf16.mxu0 0
      %2388 = vmatpush1.bf16.msra.mxu0 0
      %2389 = vmatprep.subr.bf16.mxu0 0
      %2390 = vmatpush1.bf16.msra.mxu0 0
      %2391 = vmatprep.subr.bf16.mxu0 0
      %2392 = vmatpush1.bf16.msra.mxu0 0
      %2393 = vmatprep.subr.bf16.mxu0 0
      %2394 = vmatpush1.bf16.msra.mxu0 0
      %2395 = vmatprep.subr.bf16.mxu0 0
      %2396 = vmatpush1.bf16.msra.mxu0 0
      %2397 = vmatprep.subr.bf16.mxu0 0
      %2398 = vmatpush1.bf16.msra.mxu0 0
      %2399 = vmatprep.mubr.bf16.mxu0 0
      %2400 = vmatmul.mubr.bf16.gmra.mrb[0].mxu0 %v2362
      %v2401 = vpop.f32.mrb[0].mxu0
      %v2402 = vadd.f32 0.0, %v2401
      %v2403 = vpop.f32.mrb[0].mxu0
      %v2404 = vpop.f32.mrb[0].mxu0
      %v2405 = vpop.f32.mrb[0].mxu0
      %2406 = vdwg.mxu0
      %2407 = vrot.lane.b32.xlu0 %v2185, 112
      %v2408 = vpop.permute.xlu0 %2407
      %2409 = vrot.lane.b32.xlu0 %v2185, 80
      %v2410 = vpop.permute.xlu0 %2409
      %v2412 = vsel %vm372, %v2408, 0
      %v2415 = vsel %vm372, %v2410, 0
      %2417 = vmatprep.subr.bf16.mxu0 0
      %2418 = vmatpush1.bf16.xpose.msra.mxu0 %v2415
      %2419 = vmatprep.subr.bf16.mxu0 0
      %2420 = vmatpush1.bf16.xpose.msra.mxu0 0
      %2421 = vmatprep.subr.bf16.mxu0 0
      %2422 = vmatpush1.bf16.xpose.msra.mxu0 0
      %2423 = vmatprep.subr.bf16.mxu0 0
      %2424 = vmatpush1.bf16.xpose.msra.mxu0 0
      %2425 = vmatprep.subr.bf16.mxu0 0
      %2426 = vmatpush1.bf16.xpose.msra.mxu0 0
      %2427 = vmatprep.subr.bf16.mxu0 0
      %2428 = vmatpush1.bf16.xpose.msra.mxu0 0
      %2429 = vmatprep.subr.bf16.mxu0 0
      %2430 = vmatpush1.bf16.xpose.msra.mxu0 0
      %2431 = vmatprep.subr.bf16.mxu0 0
      %2432 = vmatpush1.bf16.xpose.msra.mxu0 0
      %2433 = vmatprep.subr.bf16.mxu0 0
      %2434 = vmatpush1.bf16.xpose.msra.mxu0 0
      %2435 = vmatprep.subr.bf16.mxu0 0
      %2436 = vmatpush1.bf16.xpose.msra.mxu0 0
      %2437 = vmatprep.subr.bf16.mxu0 0
      %2438 = vmatpush1.bf16.xpose.msra.mxu0 0
      %2439 = vmatprep.subr.bf16.mxu0 0
      %2440 = vmatpush1.bf16.xpose.msra.mxu0 0
      %2441 = vmatprep.subr.bf16.mxu0 0
      %2442 = vmatpush1.bf16.xpose.msra.mxu0 0
      %2443 = vmatprep.subr.bf16.mxu0 0
      %2444 = vmatpush1.bf16.xpose.msra.mxu0 0
      %2445 = vmatprep.subr.bf16.mxu0 0
      %2446 = vmatpush1.bf16.xpose.msra.mxu0 0
      %2447 = vmatprep.subr.bf16.mxu0 0
      %2448 = vmatpush1.bf16.xpose.msra.mxu0 0
      %2449 = vmatprep.mubr.bf16.mxu0 0
      %2450 = vmatmul.mubr.bf16.gmra.mrb[0].mxu0 %v2412
      %v2451 = vpop.f32.mrb[0].mxu0
      %v2452 = vadd.f32 0.0, %v2451
      %v2453 = vpop.f32.mrb[0].mxu0
      %v2454 = vpop.f32.mrb[0].mxu0
      %v2455 = vpop.f32.mrb[0].mxu0
      %2456 = vdwg.mxu0
      %v2457 = vmul.f32 %v2452, 0.35355338
      %v2458 = vsel %vm372, %v2457, -inf
      %2459 = vmax.xlane.f32.xlu0 %v2458
      %v2460 = vpop.xlane.xlu0 %2459
      %v2461 = vsub.f32 %v2457, %v2460
      %v2462 = vmul.f32 %v2461, 1.442695
      %v2463 = vpow.pop %v2462
      %v2464 = vsel %vm372, %v2463, 0.0
      %2465 = vadd.xlane.f32.xlu0 %v2464
      %v2466 = vpop.xlane.xlu0 %2465
      %v2467 = vrcp.pop %v2466
      %v2468 = vmul.f32 %v2463, %v2467
      %v2469 = vpack.c.bf16 %v2468, %v2468
      %2470 = vrot.lane.b32.xlu0 %v2185, 48
      %v2471 = vpop.permute.xlu0 %2470
      %v2473 = vsel %vm372, %v2469, 0
      %v2476 = vsel %vm437, %v2471, 0
      %2478 = vmatprep.subr.bf16.mxu0 0
      %2479 = vmatpush1.bf16.msra.mxu0 %v2476
      %2480 = vmatprep.subr.bf16.mxu0 0
      %2481 = vmatpush1.bf16.msra.mxu0 0
      %2482 = vmatprep.subr.bf16.mxu0 0
      %2483 = vmatpush1.bf16.msra.mxu0 0
      %2484 = vmatprep.subr.bf16.mxu0 0
      %2485 = vmatpush1.bf16.msra.mxu0 0
      %2486 = vmatprep.subr.bf16.mxu0 0
      %2487 = vmatpush1.bf16.msra.mxu0 0
      %2488 = vmatprep.subr.bf16.mxu0 0
      %2489 = vmatpush1.bf16.msra.mxu0 0
      %2490 = vmatprep.subr.bf16.mxu0 0
      %2491 = vmatpush1.bf16.msra.mxu0 0
      %2492 = vmatprep.subr.bf16.mxu0 0
      %2493 = vmatpush1.bf16.msra.mxu0 0
      %2494 = vmatprep.subr.bf16.mxu0 0
      %2495 = vmatpush1.bf16.msra.mxu0 0
      %2496 = vmatprep.subr.bf16.mxu0 0
      %2497 = vmatpush1.bf16.msra.mxu0 0
      %2498 = vmatprep.subr.bf16.mxu0 0
      %2499 = vmatpush1.bf16.msra.mxu0 0
      %2500 = vmatprep.subr.bf16.mxu0 0
      %2501 = vmatpush1.bf16.msra.mxu0 0
      %2502 = vmatprep.subr.bf16.mxu0 0
      %2503 = vmatpush1.bf16.msra.mxu0 0
      %2504 = vmatprep.subr.bf16.mxu0 0
      %2505 = vmatpush1.bf16.msra.mxu0 0
      %2506 = vmatprep.subr.bf16.mxu0 0
      %2507 = vmatpush1.bf16.msra.mxu0 0
      %2508 = vmatprep.subr.bf16.mxu0 0
      %2509 = vmatpush1.bf16.msra.mxu0 0
      %2510 = vmatprep.mubr.bf16.mxu0 0
      %2511 = vmatmul.mubr.bf16.gmra.mrb[0].mxu0 %v2473
      %v2512 = vpop.f32.mrb[0].mxu0
      %v2513 = vadd.f32 0.0, %v2512
      %v2514 = vpop.f32.mrb[0].mxu0
      %v2515 = vpop.f32.mrb[0].mxu0
      %v2516 = vpop.f32.mrb[0].mxu0
      %2517 = vdwg.mxu0
      %2518 = vrot.lane.b32.xlu0 %v2185, 104
      %v2519 = vpop.permute.xlu0 %2518
      %2520 = vrot.lane.b32.xlu0 %v2185, 72
      %v2521 = vpop.permute.xlu0 %2520
      %v2523 = vsel %vm372, %v2519, 0
      %v2526 = vsel %vm372, %v2521, 0
      %2528 = vmatprep.subr.bf16.mxu0 0
      %2529 = vmatpush1.bf16.xpose.msra.mxu0 %v2526
      %2530 = vmatprep.subr.bf16.mxu0 0
      %2531 = vmatpush1.bf16.xpose.msra.mxu0 0
      %2532 = vmatprep.subr.bf16.mxu0 0
      %2533 = vmatpush1.bf16.xpose.msra.mxu0 0
      %2534 = vmatprep.subr.bf16.mxu0 0
      %2535 = vmatpush1.bf16.xpose.msra.mxu0 0
      %2536 = vmatprep.subr.bf16.mxu0 0
      %2537 = vmatpush1.bf16.xpose.msra.mxu0 0
      %2538 = vmatprep.subr.bf16.mxu0 0
      %2539 = vmatpush1.bf16.xpose.msra.mxu0 0
      %2540 = vmatprep.subr.bf16.mxu0 0
      %2541 = vmatpush1.bf16.xpose.msra.mxu0 0
      %2542 = vmatprep.subr.bf16.mxu0 0
      %2543 = vmatpush1.bf16.xpose.msra.mxu0 0
      %2544 = vmatprep.subr.bf16.mxu0 0
      %2545 = vmatpush1.bf16.xpose.msra.mxu0 0
      %2546 = vmatprep.subr.bf16.mxu0 0
      %2547 = vmatpush1.bf16.xpose.msra.mxu0 0
      %2548 = vmatprep.subr.bf16.mxu0 0
      %2549 = vmatpush1.bf16.xpose.msra.mxu0 0
      %2550 = vmatprep.subr.bf16.mxu0 0
      %2551 = vmatpush1.bf16.xpose.msra.mxu0 0
      %2552 = vmatprep.subr.bf16.mxu0 0
      %2553 = vmatpush1.bf16.xpose.msra.mxu0 0
      %2554 = vmatprep.subr.bf16.mxu0 0
      %2555 = vmatpush1.bf16.xpose.msra.mxu0 0
      %2556 = vmatprep.subr.bf16.mxu0 0
      %2557 = vmatpush1.bf16.xpose.msra.mxu0 0
      %2558 = vmatprep.subr.bf16.mxu0 0
      %2559 = vmatpush1.bf16.xpose.msra.mxu0 0
      %2560 = vmatprep.mubr.bf16.mxu0 0
      %2561 = vmatmul.mubr.bf16.gmra.mrb[0].mxu0 %v2523
      %v2562 = vpop.f32.mrb[0].mxu0
      %v2563 = vadd.f32 0.0, %v2562
      %v2564 = vpop.f32.mrb[0].mxu0
      %v2565 = vpop.f32.mrb[0].mxu0
      %v2566 = vpop.f32.mrb[0].mxu0
      %2567 = vdwg.mxu0
      %v2568 = vmul.f32 %v2563, 0.35355338
      %v2569 = vsel %vm372, %v2568, -inf
      %2570 = vmax.xlane.f32.xlu0 %v2569
      %v2571 = vpop.xlane.xlu0 %2570
      %v2572 = vsub.f32 %v2568, %v2571
      %v2573 = vmul.f32 %v2572, 1.442695
      %v2574 = vpow.pop %v2573
      %v2575 = vsel %vm372, %v2574, 0.0
      %2576 = vadd.xlane.f32.xlu0 %v2575
      %v2577 = vpop.xlane.xlu0 %2576
      %v2578 = vrcp.pop %v2577
      %v2579 = vmul.f32 %v2574, %v2578
      %v2580 = vpack.c.bf16 %v2579, %v2579
      %2581 = vrot.lane.b32.xlu0 %v2185, 40
      %v2582 = vpop.permute.xlu0 %2581
      %v2584 = vsel %vm372, %v2580, 0
      %v2587 = vsel %vm437, %v2582, 0
      %2589 = vmatprep.subr.bf16.mxu0 0
      %2590 = vmatpush1.bf16.msra.mxu0 %v2587
      %2591 = vmatprep.subr.bf16.mxu0 0
      %2592 = vmatpush1.bf16.msra.mxu0 0
      %2593 = vmatprep.subr.bf16.mxu0 0
      %2594 = vmatpush1.bf16.msra.mxu0 0
      %2595 = vmatprep.subr.bf16.mxu0 0
      %2596 = vmatpush1.bf16.msra.mxu0 0
      %2597 = vmatprep.subr.bf16.mxu0 0
      %2598 = vmatpush1.bf16.msra.mxu0 0
      %2599 = vmatprep.subr.bf16.mxu0 0
      %2600 = vmatpush1.bf16.msra.mxu0 0
      %2601 = vmatprep.subr.bf16.mxu0 0
      %2602 = vmatpush1.bf16.msra.mxu0 0
      %2603 = vmatprep.subr.bf16.mxu0 0
      %2604 = vmatpush1.bf16.msra.mxu0 0
      %2605 = vmatprep.subr.bf16.mxu0 0
      %2606 = vmatpush1.bf16.msra.mxu0 0
      %2607 = vmatprep.subr.bf16.mxu0 0
      %2608 = vmatpush1.bf16.msra.mxu0 0
      %2609 = vmatprep.subr.bf16.mxu0 0
      %2610 = vmatpush1.bf16.msra.mxu0 0
      %2611 = vmatprep.subr.bf16.mxu0 0
      %2612 = vmatpush1.bf16.msra.mxu0 0
      %2613 = vmatprep.subr.bf16.mxu0 0
      %2614 = vmatpush1.bf16.msra.mxu0 0
      %2615 = vmatprep.subr.bf16.mxu0 0
      %2616 = vmatpush1.bf16.msra.mxu0 0
      %2617 = vmatprep.subr.bf16.mxu0 0
      %2618 = vmatpush1.bf16.msra.mxu0 0
      %2619 = vmatprep.subr.bf16.mxu0 0
      %2620 = vmatpush1.bf16.msra.mxu0 0
      %2621 = vmatprep.mubr.bf16.mxu0 0
      %2622 = vmatmul.mubr.bf16.gmra.mrb[0].mxu0 %v2584
      %v2623 = vpop.f32.mrb[0].mxu0
      %v2624 = vadd.f32 0.0, %v2623
      %v2625 = vpop.f32.mrb[0].mxu0
      %v2626 = vpop.f32.mrb[0].mxu0
      %v2627 = vpop.f32.mrb[0].mxu0
      %2628 = vdwg.mxu0
      %2630 = vrot.lane.b32.xlu0 %v2402, 8
      %v2631 = vpop.permute.xlu0 %2630
      %2634 = vrot.lane.b32.xlu0 %v2513, 16
      %v2635 = vpop.permute.xlu0 %2634
      %2638 = vrot.lane.b32.xlu0 %v2624, 24
      %v2639 = vpop.permute.xlu0 %2638
      %v2641 = vsel %vm372, %v2291, %v2631
      %v2642 = vsel %vm827, %v2641, %v2635
      %v2643 = vsel %vm829, %v2642, %v2639
      %v2644 = vpack.c.bf16 %v2643, %v2643
      %v2645 = vld [vmem:[%s3 + $0x8c] sm:$0xf]
      %v2646 = vld [vmem:[%s3 + $0x19c] sm:$0xf]
      %v2647 = vld [vmem:[%s3 + $0x2ac] sm:$0xf]
      %v2648 = vld [vmem:[%s3 + $0x3bc] sm:$0xf]
      %v2649 = vld [vmem:[%s4 + $0x19] sm:$0x1]
      %v2651 = vlaneseq
      %v2652 = vshrl.u32 %v2651, 7
      %v2653 = vsub.s32 0, %v2652
      %v2654 = vrot.slane %v2649, %v2653
      %v2660 = vunpack.c.l.b16 %v2645
      %v2661 = vunpack.c.l.b16 %v2646
      %v2662 = vunpack.c.l.b16 %v2647
      %v2663 = vunpack.c.l.b16 %v2648
      %v2664 = vpack.c.b16 %v2661, %v2660
      %v2665 = vpack.c.b16 %v2663, %v2662
      %v2669 = vsel %vm324, %v2644, 0
      %2671 = vmatprep.subr.bf16.mxu0 0
      %2672 = vmatpush1.bf16.msra.mxu0 %v2664
      %2673 = vmatprep.subr.bf16.mxu0 0
      %2674 = vmatpush1.bf16.msra.mxu0 %v2665
      %2675 = vmatprep.subr.bf16.mxu0 0
      %2676 = vmatpush1.bf16.msra.mxu0 0
      %2677 = vmatprep.subr.bf16.mxu0 0
      %2678 = vmatpush1.bf16.msra.mxu0 0
      %2679 = vmatprep.subr.bf16.mxu0 0
      %2680 = vmatpush1.bf16.msra.mxu0 0
      %2681 = vmatprep.subr.bf16.mxu0 0
      %2682 = vmatpush1.bf16.msra.mxu0 0
      %2683 = vmatprep.subr.bf16.mxu0 0
      %2684 = vmatpush1.bf16.msra.mxu0 0
      %2685 = vmatprep.subr.bf16.mxu0 0
      %2686 = vmatpush1.bf16.msra.mxu0 0
      %2687 = vmatprep.subr.bf16.mxu0 0
      %2688 = vmatpush1.bf16.msra.mxu0 0
      %2689 = vmatprep.subr.bf16.mxu0 0
      %2690 = vmatpush1.bf16.msra.mxu0 0
      %2691 = vmatprep.subr.bf16.mxu0 0
      %2692 = vmatpush1.bf16.msra.mxu0 0
      %2693 = vmatprep.subr.bf16.mxu0 0
      %2694 = vmatpush1.bf16.msra.mxu0 0
      %2695 = vmatprep.subr.bf16.mxu0 0
      %2696 = vmatpush1.bf16.msra.mxu0 0
      %2697 = vmatprep.subr.bf16.mxu0 0
      %2698 = vmatpush1.bf16.msra.mxu0 0
      %2699 = vmatprep.subr.bf16.mxu0 0
      %2700 = vmatpush1.bf16.msra.mxu0 0
      %2701 = vmatprep.subr.bf16.mxu0 0
      %2702 = vmatpush1.bf16.msra.mxu0 0
      %2703 = vmatprep.mubr.bf16.mxu0 0
      %2704 = vmatmul.mubr.bf16.gmra.mrb[0].mxu0 %v2669
      %v2705 = vpop.f32.mrb[0].mxu0
      %v2706 = vadd.f32 %v2654, %v2705
      %v2707 = vpop.f32.mrb[0].mxu0
      %v2708 = vpop.f32.mrb[0].mxu0
      %v2709 = vpop.f32.mrb[0].mxu0
      %2710 = vdwg.mxu0
      %v2711 = vld [vmem:[%s4 + $0x1a] sm:$0x1]
      %v2712 = vld [vmem:[%s4 + $0x1b] sm:$0x1]
      %v2713 = vadd.f32 %v2117, %v2706
      %v2714 = vsel %vm324, %v2713, 0.0
      %2715 = vadd.xlane.f32.xlu0 %v2714
      %v2716 = vpop.xlane.xlu0 %2715
      %v2717 = vmul.f32 %v2716, %v904
      %v2718 = vsub.f32 %v2713, %v2717
      %v2719 = vmul.f32 %v2718, %v2718
      %v2720 = vsel %vm324, %v2719, 0.0
      %2721 = vadd.xlane.f32.xlu0 %v2720
      %v2722 = vpop.xlane.xlu0 %2721
      %v2723 = vmul.f32 %v2722, %v904
      %v2724 = vadd.f32 %v2723, 1e-05
      %v2725 = vrsqrt.pop %v2724
      %v2726 = vmul.f32 %v2718, %v2725
      %v2728 = vlaneseq
      %v2729 = vshrl.u32 %v2728, 7
      %v2730 = vsub.s32 0, %v2729
      %v2731 = vrot.slane %v2711, %v2730
      %v2733 = vmul.f32 %v2726, %v2731
      %v2735 = vlaneseq
      %v2736 = vshrl.u32 %v2735, 7
      %v2737 = vsub.s32 0, %v2736
      %v2738 = vrot.slane %v2712, %v2737
      %v2740 = vadd.f32 %v2733, %v2738
      %v2741 = vpack.c.bf16 %v2740, %v2740
      %v2742 = vld [vmem:[%s3 + $0x90] sm:$0xff]
      %v2743 = vld [vmem:[%s3 + $0x98] sm:$0xff]
      %v2744 = vld [vmem:[%s3 + $0xa0] sm:$0xff]
      %v2745 = vld [vmem:[%s3 + $0xa8] sm:$0xff]
      %v2746 = vld [vmem:[%s3 + $0xb0] sm:$0xff]
      %v2747 = vld [vmem:[%s3 + $0xb8] sm:$0xff]
      %v2748 = vld [vmem:[%s3 + $0xc0] sm:$0xff]
      %v2749 = vld [vmem:[%s3 + $0xc8] sm:$0xff]
      %v2750 = vld [vmem:[%s3 + $0x1a0] sm:$0xff]
      %v2751 = vld [vmem:[%s3 + $0x1a8] sm:$0xff]
      %v2752 = vld [vmem:[%s3 + $0x1b0] sm:$0xff]
      %v2753 = vld [vmem:[%s3 + $0x1b8] sm:$0xff]
      %v2754 = vld [vmem:[%s3 + $0x1c0] sm:$0xff]
      %v2755 = vld [vmem:[%s3 + $0x1c8] sm:$0xff]
      %v2756 = vld [vmem:[%s3 + $0x1d0] sm:$0xff]
      %v2757 = vld [vmem:[%s3 + $0x1d8] sm:$0xff]
      %v2758 = vld [vmem:[%s3 + $0x2b0] sm:$0xff]
      %v2759 = vld [vmem:[%s3 + $0x2b8] sm:$0xff]
      %v2760 = vld [vmem:[%s3 + $0x2c0] sm:$0xff]
      %v2761 = vld [vmem:[%s3 + $0x2c8] sm:$0xff]
      %v2762 = vld [vmem:[%s3 + $0x2d0] sm:$0xff]
      %v2763 = vld [vmem:[%s3 + $0x2d8] sm:$0xff]
      %v2764 = vld [vmem:[%s3 + $0x2e0] sm:$0xff]
      %v2765 = vld [vmem:[%s3 + $0x2e8] sm:$0xff]
      %v2766 = vld [vmem:[%s3 + $0x3c0] sm:$0xff]
      %v2767 = vld [vmem:[%s3 + $0x3c8] sm:$0xff]
      %v2768 = vld [vmem:[%s3 + $0x3d0] sm:$0xff]
      %v2769 = vld [vmem:[%s3 + $0x3d8] sm:$0xff]
      %v2770 = vld [vmem:[%s3 + $0x3e0] sm:$0xff]
      %v2771 = vld [vmem:[%s3 + $0x3e8] sm:$0xff]
      %v2772 = vld [vmem:[%s3 + $0x3f0] sm:$0xff]
      %v2773 = vld [vmem:[%s3 + $0x3f8] sm:$0xff]
      %v2774 = vld [vmem:[%s4 + $0x1c] sm:$0xff]
      %v2775 = vld [vmem:[%s4 + $0x24] sm:$0xff]
      %v2778 = vlaneseq
      %v2779 = vshrl.u32 %v2778, 7
      %v2780 = vsub.s32 0, %v2779
      %v2781 = vrot.slane %v2774, %v2780
      %v2782 = vlaneseq
      %v2783 = vshrl.u32 %v2782, 7
      %v2784 = vsub.s32 1, %v2783
      %v2785 = vrot.slane %v2774, %v2784
      %v2786 = vlaneseq
      %v2787 = vshrl.u32 %v2786, 7
      %v2788 = vsub.s32 2, %v2787
      %v2789 = vrot.slane %v2774, %v2788
      %v2790 = vlaneseq
      %v2791 = vshrl.u32 %v2790, 7
      %v2792 = vsub.s32 3, %v2791
      %v2793 = vrot.slane %v2774, %v2792
      %v2794 = vlaneseq
      %v2795 = vshrl.u32 %v2794, 7
      %v2796 = vsub.s32 4, %v2795
      %v2797 = vrot.slane %v2774, %v2796
      %v2798 = vlaneseq
      %v2799 = vshrl.u32 %v2798, 7
      %v2800 = vsub.s32 5, %v2799
      %v2801 = vrot.slane %v2774, %v2800
      %v2802 = vlaneseq
      %v2803 = vshrl.u32 %v2802, 7
      %v2804 = vsub.s32 6, %v2803
      %v2805 = vrot.slane %v2774, %v2804
      %v2806 = vlaneseq
      %v2807 = vshrl.u32 %v2806, 7
      %v2808 = vsub.s32 7, %v2807
      %v2809 = vrot.slane %v2774, %v2808
      %v2810 = vlaneseq
      %v2811 = vshrl.u32 %v2810, 7
      %v2812 = vsub.s32 0, %v2811
      %v2813 = vrot.slane %v2775, %v2812
      %v2814 = vlaneseq
      %v2815 = vshrl.u32 %v2814, 7
      %v2816 = vsub.s32 1, %v2815
      %v2817 = vrot.slane %v2775, %v2816
      %v2818 = vlaneseq
      %v2819 = vshrl.u32 %v2818, 7
      %v2820 = vsub.s32 2, %v2819
      %v2821 = vrot.slane %v2775, %v2820
      %v2822 = vlaneseq
      %v2823 = vshrl.u32 %v2822, 7
      %v2824 = vsub.s32 3, %v2823
      %v2825 = vrot.slane %v2775, %v2824
      %v2826 = vlaneseq
      %v2827 = vshrl.u32 %v2826, 7
      %v2828 = vsub.s32 4, %v2827
      %v2829 = vrot.slane %v2775, %v2828
      %v2830 = vlaneseq
      %v2831 = vshrl.u32 %v2830, 7
      %v2832 = vsub.s32 5, %v2831
      %v2833 = vrot.slane %v2775, %v2832
      %v2834 = vlaneseq
      %v2835 = vshrl.u32 %v2834, 7
      %v2836 = vsub.s32 6, %v2835
      %v2837 = vrot.slane %v2775, %v2836
      %v2838 = vlaneseq
      %v2839 = vshrl.u32 %v2838, 7
      %v2840 = vsub.s32 7, %v2839
      %v2841 = vrot.slane %v2775, %v2840
      %v2890 = vunpack.c.l.b16 %v2742
      %v2891 = vunpack.c.h.b16 %v2742
      %v2892 = vunpack.c.l.b16 %v2743
      %v2893 = vunpack.c.h.b16 %v2743
      %v2894 = vunpack.c.l.b16 %v2744
      %v2895 = vunpack.c.h.b16 %v2744
      %v2896 = vunpack.c.l.b16 %v2745
      %v2897 = vunpack.c.h.b16 %v2745
      %v2898 = vunpack.c.l.b16 %v2746
      %v2899 = vunpack.c.h.b16 %v2746
      %v2900 = vunpack.c.l.b16 %v2747
      %v2901 = vunpack.c.h.b16 %v2747
      %v2902 = vunpack.c.l.b16 %v2748
      %v2903 = vunpack.c.h.b16 %v2748
      %v2904 = vunpack.c.l.b16 %v2749
      %v2905 = vunpack.c.h.b16 %v2749
      %v2906 = vunpack.c.l.b16 %v2750
      %v2907 = vunpack.c.h.b16 %v2750
      %v2908 = vunpack.c.l.b16 %v2751
      %v2909 = vunpack.c.h.b16 %v2751
      %v2910 = vunpack.c.l.b16 %v2752
      %v2911 = vunpack.c.h.b16 %v2752
      %v2912 = vunpack.c.l.b16 %v2753
      %v2913 = vunpack.c.h.b16 %v2753
      %v2914 = vunpack.c.l.b16 %v2754
      %v2915 = vunpack.c.h.b16 %v2754
      %v2916 = vunpack.c.l.b16 %v2755
      %v2917 = vunpack.c.h.b16 %v2755
      %v2918 = vunpack.c.l.b16 %v2756
      %v2919 = vunpack.c.h.b16 %v2756
      %v2920 = vunpack.c.l.b16 %v2757
      %v2921 = vunpack.c.h.b16 %v2757
      %v2922 = vunpack.c.l.b16 %v2758
      %v2923 = vunpack.c.h.b16 %v2758
      %v2924 = vunpack.c.l.b16 %v2759
      %v2925 = vunpack.c.h.b16 %v2759
      %v2926 = vunpack.c.l.b16 %v2760
      %v2927 = vunpack.c.h.b16 %v2760
      %v2928 = vunpack.c.l.b16 %v2761
      %v2929 = vunpack.c.h.b16 %v2761
      %v2930 = vunpack.c.l.b16 %v2762
      %v2931 = vunpack.c.h.b16 %v2762
      %v2932 = vunpack.c.l.b16 %v2763
      %v2933 = vunpack.c.h.b16 %v2763
      %v2934 = vunpack.c.l.b16 %v2764
      %v2935 = vunpack.c.h.b16 %v2764
      %v2936 = vunpack.c.l.b16 %v2765
      %v2937 = vunpack.c.h.b16 %v2765
      %v2938 = vunpack.c.l.b16 %v2766
      %v2939 = vunpack.c.h.b16 %v2766
      %v2940 = vunpack.c.l.b16 %v2767
      %v2941 = vunpack.c.h.b16 %v2767
      %v2942 = vunpack.c.l.b16 %v2768
      %v2943 = vunpack.c.h.b16 %v2768
      %v2944 = vunpack.c.l.b16 %v2769
      %v2945 = vunpack.c.h.b16 %v2769
      %v2946 = vunpack.c.l.b16 %v2770
      %v2947 = vunpack.c.h.b16 %v2770
      %v2948 = vunpack.c.l.b16 %v2771
      %v2949 = vunpack.c.h.b16 %v2771
      %v2950 = vunpack.c.l.b16 %v2772
      %v2951 = vunpack.c.h.b16 %v2772
      %v2952 = vunpack.c.l.b16 %v2773
      %v2953 = vunpack.c.h.b16 %v2773
      %v2954 = vpack.c.b16 %v2906, %v2890
      %v2955 = vpack.c.b16 %v2907, %v2891
      %v2956 = vpack.c.b16 %v2908, %v2892
      %v2957 = vpack.c.b16 %v2909, %v2893
      %v2958 = vpack.c.b16 %v2910, %v2894
      %v2959 = vpack.c.b16 %v2911, %v2895
      %v2960 = vpack.c.b16 %v2912, %v2896
      %v2961 = vpack.c.b16 %v2913, %v2897
      %v2962 = vpack.c.b16 %v2914, %v2898
      %v2963 = vpack.c.b16 %v2915, %v2899
      %v2964 = vpack.c.b16 %v2916, %v2900
      %v2965 = vpack.c.b16 %v2917, %v2901
      %v2966 = vpack.c.b16 %v2918, %v2902
      %v2967 = vpack.c.b16 %v2919, %v2903
      %v2968 = vpack.c.b16 %v2920, %v2904
      %v2969 = vpack.c.b16 %v2921, %v2905
      %v2970 = vpack.c.b16 %v2938, %v2922
      %v2971 = vpack.c.b16 %v2939, %v2923
      %v2972 = vpack.c.b16 %v2940, %v2924
      %v2973 = vpack.c.b16 %v2941, %v2925
      %v2974 = vpack.c.b16 %v2942, %v2926
      %v2975 = vpack.c.b16 %v2943, %v2927
      %v2976 = vpack.c.b16 %v2944, %v2928
      %v2977 = vpack.c.b16 %v2945, %v2929
      %v2978 = vpack.c.b16 %v2946, %v2930
      %v2979 = vpack.c.b16 %v2947, %v2931
      %v2980 = vpack.c.b16 %v2948, %v2932
      %v2981 = vpack.c.b16 %v2949, %v2933
      %v2982 = vpack.c.b16 %v2950, %v2934
      %v2983 = vpack.c.b16 %v2951, %v2935
      %v2984 = vpack.c.b16 %v2952, %v2936
      %v2985 = vpack.c.b16 %v2953, %v2937
      %v3019 = vsel %vm324, %v2741, 0
      %3021 = vmatprep.subr.bf16.mxu0 %v2955
      %3022 = vmatpush1.bf16.msra.mxu0 %v2954
      %3023 = vmatprep.subr.bf16.mxu0 %v2971
      %3024 = vmatpush1.bf16.msra.mxu0 %v2970
      %3025 = vmatprep.subr.bf16.mxu0 0
      %3026 = vmatpush1.bf16.msra.mxu0 0
      %3027 = vmatprep.subr.bf16.mxu0 0
      %3028 = vmatpush1.bf16.msra.mxu0 0
      %3029 = vmatprep.subr.bf16.mxu0 0
      %3030 = vmatpush1.bf16.msra.mxu0 0
      %3031 = vmatprep.subr.bf16.mxu0 0
      %3032 = vmatpush1.bf16.msra.mxu0 0
      %3033 = vmatprep.subr.bf16.mxu0 0
      %3034 = vmatpush1.bf16.msra.mxu0 0
      %3035 = vmatprep.subr.bf16.mxu0 0
      %3036 = vmatpush1.bf16.msra.mxu0 0
      %3037 = vmatprep.subr.bf16.mxu0 0
      %3038 = vmatpush1.bf16.msra.mxu0 0
      %3039 = vmatprep.subr.bf16.mxu0 0
      %3040 = vmatpush1.bf16.msra.mxu0 0
      %3041 = vmatprep.subr.bf16.mxu0 0
      %3042 = vmatpush1.bf16.msra.mxu0 0
      %3043 = vmatprep.subr.bf16.mxu0 0
      %3044 = vmatpush1.bf16.msra.mxu0 0
      %3045 = vmatprep.subr.bf16.mxu0 0
      %3046 = vmatpush1.bf16.msra.mxu0 0
      %3047 = vmatprep.subr.bf16.mxu0 0
      %3048 = vmatpush1.bf16.msra.mxu0 0
      %3049 = vmatprep.subr.bf16.mxu0 0
      %3050 = vmatpush1.bf16.msra.mxu0 0
      %3051 = vmatprep.subr.bf16.mxu0 0
      %3052 = vmatpush1.bf16.msra.mxu0 0
      %3053 = vmatprep.mubr.bf16.mxu0 0
      %3054 = vmatmul.mubr.bf16.gmra.mrb[0].mxu0 %v3019
      %v3055 = vpop.f32.mrb[0].mxu0
      %v3056 = vadd.f32 %v2781, %v3055
      %v3057 = vpop.f32.mrb[0].mxu0
      %v3058 = vadd.f32 %v2785, %v3057
      %v3059 = vpop.f32.mrb[0].mxu0
      %v3060 = vpop.f32.mrb[0].mxu0
      %3061 = vdwg.mxu0
      %3062 = vmatprep.subr.bf16.mxu0 %v2957
      %3063 = vmatpush1.bf16.msra.mxu0 %v2956
      %3064 = vmatprep.subr.bf16.mxu0 %v2973
      %3065 = vmatpush1.bf16.msra.mxu0 %v2972
      %3066 = vmatprep.subr.bf16.mxu0 0
      %3067 = vmatpush1.bf16.msra.mxu0 0
      %3068 = vmatprep.subr.bf16.mxu0 0
      %3069 = vmatpush1.bf16.msra.mxu0 0
      %3070 = vmatprep.subr.bf16.mxu0 0
      %3071 = vmatpush1.bf16.msra.mxu0 0
      %3072 = vmatprep.subr.bf16.mxu0 0
      %3073 = vmatpush1.bf16.msra.mxu0 0
      %3074 = vmatprep.subr.bf16.mxu0 0
      %3075 = vmatpush1.bf16.msra.mxu0 0
      %3076 = vmatprep.subr.bf16.mxu0 0
      %3077 = vmatpush1.bf16.msra.mxu0 0
      %3078 = vmatprep.subr.bf16.mxu0 0
      %3079 = vmatpush1.bf16.msra.mxu0 0
      %3080 = vmatprep.subr.bf16.mxu0 0
      %3081 = vmatpush1.bf16.msra.mxu0 0
      %3082 = vmatprep.subr.bf16.mxu0 0
      %3083 = vmatpush1.bf16.msra.mxu0 0
      %3084 = vmatprep.subr.bf16.mxu0 0
      %3085 = vmatpush1.bf16.msra.mxu0 0
      %3086 = vmatprep.subr.bf16.mxu0 0
      %3087 = vmatpush1.bf16.msra.mxu0 0
      %3088 = vmatprep.subr.bf16.mxu0 0
      %3089 = vmatpush1.bf16.msra.mxu0 0
      %3090 = vmatprep.subr.bf16.mxu0 0
      %3091 = vmatpush1.bf16.msra.mxu0 0
      %3092 = vmatprep.subr.bf16.mxu0 0
      %3093 = vmatpush1.bf16.msra.mxu0 0
      %3094 = vmatprep.mubr.bf16.mxu0 0
      %3095 = vmatmul.mubr.bf16.gmra.mrb[0].mxu0 %v3019
      %v3096 = vpop.f32.mrb[0].mxu0
      %v3097 = vadd.f32 %v2789, %v3096
      %v3098 = vpop.f32.mrb[0].mxu0
      %v3099 = vadd.f32 %v2793, %v3098
      %v3100 = vpop.f32.mrb[0].mxu0
      %v3101 = vpop.f32.mrb[0].mxu0
      %3102 = vdwg.mxu0
      %3103 = vmatprep.subr.bf16.mxu0 %v2959
      %3104 = vmatpush1.bf16.msra.mxu0 %v2958
      %3105 = vmatprep.subr.bf16.mxu0 %v2975
      %3106 = vmatpush1.bf16.msra.mxu0 %v2974
      %3107 = vmatprep.subr.bf16.mxu0 0
      %3108 = vmatpush1.bf16.msra.mxu0 0
      %3109 = vmatprep.subr.bf16.mxu0 0
      %3110 = vmatpush1.bf16.msra.mxu0 0
      %3111 = vmatprep.subr.bf16.mxu0 0
      %3112 = vmatpush1.bf16.msra.mxu0 0
      %3113 = vmatprep.subr.bf16.mxu0 0
      %3114 = vmatpush1.bf16.msra.mxu0 0
      %3115 = vmatprep.subr.bf16.mxu0 0
      %3116 = vmatpush1.bf16.msra.mxu0 0
      %3117 = vmatprep.subr.bf16.mxu0 0
      %3118 = vmatpush1.bf16.msra.mxu0 0
      %3119 = vmatprep.subr.bf16.mxu0 0
      %3120 = vmatpush1.bf16.msra.mxu0 0
      %3121 = vmatprep.subr.bf16.mxu0 0
      %3122 = vmatpush1.bf16.msra.mxu0 0
      %3123 = vmatprep.subr.bf16.mxu0 0
      %3124 = vmatpush1.bf16.msra.mxu0 0
      %3125 = vmatprep.subr.bf16.mxu0 0
      %3126 = vmatpush1.bf16.msra.mxu0 0
      %3127 = vmatprep.subr.bf16.mxu0 0
      %3128 = vmatpush1.bf16.msra.mxu0 0
      %3129 = vmatprep.subr.bf16.mxu0 0
      %3130 = vmatpush1.bf16.msra.mxu0 0
      %3131 = vmatprep.subr.bf16.mxu0 0
      %3132 = vmatpush1.bf16.msra.mxu0 0
      %3133 = vmatprep.subr.bf16.mxu0 0
      %3134 = vmatpush1.bf16.msra.mxu0 0
      %3135 = vmatprep.mubr.bf16.mxu0 0
      %3136 = vmatmul.mubr.bf16.gmra.mrb[0].mxu0 %v3019
      %v3137 = vpop.f32.mrb[0].mxu0
      %v3138 = vadd.f32 %v2797, %v3137
      %v3139 = vpop.f32.mrb[0].mxu0
      %v3140 = vadd.f32 %v2801, %v3139
      %v3141 = vpop.f32.mrb[0].mxu0
      %v3142 = vpop.f32.mrb[0].mxu0
      %3143 = vdwg.mxu0
      %3144 = vmatprep.subr.bf16.mxu0 %v2961
      %3145 = vmatpush1.bf16.msra.mxu0 %v2960
      %3146 = vmatprep.subr.bf16.mxu0 %v2977
      %3147 = vmatpush1.bf16.msra.mxu0 %v2976
      %3148 = vmatprep.subr.bf16.mxu0 0
      %3149 = vmatpush1.bf16.msra.mxu0 0
      %3150 = vmatprep.subr.bf16.mxu0 0
      %3151 = vmatpush1.bf16.msra.mxu0 0
      %3152 = vmatprep.subr.bf16.mxu0 0
      %3153 = vmatpush1.bf16.msra.mxu0 0
      %3154 = vmatprep.subr.bf16.mxu0 0
      %3155 = vmatpush1.bf16.msra.mxu0 0
      %3156 = vmatprep.subr.bf16.mxu0 0
      %3157 = vmatpush1.bf16.msra.mxu0 0
      %3158 = vmatprep.subr.bf16.mxu0 0
      %3159 = vmatpush1.bf16.msra.mxu0 0
      %3160 = vmatprep.subr.bf16.mxu0 0
      %3161 = vmatpush1.bf16.msra.mxu0 0
      %3162 = vmatprep.subr.bf16.mxu0 0
      %3163 = vmatpush1.bf16.msra.mxu0 0
      %3164 = vmatprep.subr.bf16.mxu0 0
      %3165 = vmatpush1.bf16.msra.mxu0 0
      %3166 = vmatprep.subr.bf16.mxu0 0
      %3167 = vmatpush1.bf16.msra.mxu0 0
      %3168 = vmatprep.subr.bf16.mxu0 0
      %3169 = vmatpush1.bf16.msra.mxu0 0
      %3170 = vmatprep.subr.bf16.mxu0 0
      %3171 = vmatpush1.bf16.msra.mxu0 0
      %3172 = vmatprep.subr.bf16.mxu0 0
      %3173 = vmatpush1.bf16.msra.mxu0 0
      %3174 = vmatprep.subr.bf16.mxu0 0
      %3175 = vmatpush1.bf16.msra.mxu0 0
      %3176 = vmatprep.mubr.bf16.mxu0 0
      %3177 = vmatmul.mubr.bf16.gmra.mrb[0].mxu0 %v3019
      %v3178 = vpop.f32.mrb[0].mxu0
      %v3179 = vadd.f32 %v2805, %v3178
      %v3180 = vpop.f32.mrb[0].mxu0
      %v3181 = vadd.f32 %v2809, %v3180
      %v3182 = vpop.f32.mrb[0].mxu0
      %v3183 = vpop.f32.mrb[0].mxu0
      %3184 = vdwg.mxu0
      %3185 = vmatprep.subr.bf16.mxu0 %v2963
      %3186 = vmatpush1.bf16.msra.mxu0 %v2962
      %3187 = vmatprep.subr.bf16.mxu0 %v2979
      %3188 = vmatpush1.bf16.msra.mxu0 %v2978
      %3189 = vmatprep.subr.bf16.mxu0 0
      %3190 = vmatpush1.bf16.msra.mxu0 0
      %3191 = vmatprep.subr.bf16.mxu0 0
      %3192 = vmatpush1.bf16.msra.mxu0 0
      %3193 = vmatprep.subr.bf16.mxu0 0
      %3194 = vmatpush1.bf16.msra.mxu0 0
      %3195 = vmatprep.subr.bf16.mxu0 0
      %3196 = vmatpush1.bf16.msra.mxu0 0
      %3197 = vmatprep.subr.bf16.mxu0 0
      %3198 = vmatpush1.bf16.msra.mxu0 0
      %3199 = vmatprep.subr.bf16.mxu0 0
      %3200 = vmatpush1.bf16.msra.mxu0 0
      %3201 = vmatprep.subr.bf16.mxu0 0
      %3202 = vmatpush1.bf16.msra.mxu0 0
      %3203 = vmatprep.subr.bf16.mxu0 0
      %3204 = vmatpush1.bf16.msra.mxu0 0
      %3205 = vmatprep.subr.bf16.mxu0 0
      %3206 = vmatpush1.bf16.msra.mxu0 0
      %3207 = vmatprep.subr.bf16.mxu0 0
      %3208 = vmatpush1.bf16.msra.mxu0 0
      %3209 = vmatprep.subr.bf16.mxu0 0
      %3210 = vmatpush1.bf16.msra.mxu0 0
      %3211 = vmatprep.subr.bf16.mxu0 0
      %3212 = vmatpush1.bf16.msra.mxu0 0
      %3213 = vmatprep.subr.bf16.mxu0 0
      %3214 = vmatpush1.bf16.msra.mxu0 0
      %3215 = vmatprep.subr.bf16.mxu0 0
      %3216 = vmatpush1.bf16.msra.mxu0 0
      %3217 = vmatprep.mubr.bf16.mxu0 0
      %3218 = vmatmul.mubr.bf16.gmra.mrb[0].mxu0 %v3019
      %v3219 = vpop.f32.mrb[0].mxu0
      %v3220 = vadd.f32 %v2813, %v3219
      %v3221 = vpop.f32.mrb[0].mxu0
      %v3222 = vadd.f32 %v2817, %v3221
      %v3223 = vpop.f32.mrb[0].mxu0
      %v3224 = vpop.f32.mrb[0].mxu0
      %3225 = vdwg.mxu0
      %3226 = vmatprep.subr.bf16.mxu0 %v2965
      %3227 = vmatpush1.bf16.msra.mxu0 %v2964
      %3228 = vmatprep.subr.bf16.mxu0 %v2981
      %3229 = vmatpush1.bf16.msra.mxu0 %v2980
      %3230 = vmatprep.subr.bf16.mxu0 0
      %3231 = vmatpush1.bf16.msra.mxu0 0
      %3232 = vmatprep.subr.bf16.mxu0 0
      %3233 = vmatpush1.bf16.msra.mxu0 0
      %3234 = vmatprep.subr.bf16.mxu0 0
      %3235 = vmatpush1.bf16.msra.mxu0 0
      %3236 = vmatprep.subr.bf16.mxu0 0
      %3237 = vmatpush1.bf16.msra.mxu0 0
      %3238 = vmatprep.subr.bf16.mxu0 0
      %3239 = vmatpush1.bf16.msra.mxu0 0
      %3240 = vmatprep.subr.bf16.mxu0 0
      %3241 = vmatpush1.bf16.msra.mxu0 0
      %3242 = vmatprep.subr.bf16.mxu0 0
      %3243 = vmatpush1.bf16.msra.mxu0 0
      %3244 = vmatprep.subr.bf16.mxu0 0
      %3245 = vmatpush1.bf16.msra.mxu0 0
      %3246 = vmatprep.subr.bf16.mxu0 0
      %3247 = vmatpush1.bf16.msra.mxu0 0
      %3248 = vmatprep.subr.bf16.mxu0 0
      %3249 = vmatpush1.bf16.msra.mxu0 0
      %3250 = vmatprep.subr.bf16.mxu0 0
      %3251 = vmatpush1.bf16.msra.mxu0 0
      %3252 = vmatprep.subr.bf16.mxu0 0
      %3253 = vmatpush1.bf16.msra.mxu0 0
      %3254 = vmatprep.subr.bf16.mxu0 0
      %3255 = vmatpush1.bf16.msra.mxu0 0
      %3256 = vmatprep.subr.bf16.mxu0 0
      %3257 = vmatpush1.bf16.msra.mxu0 0
      %3258 = vmatprep.mubr.bf16.mxu0 0
      %3259 = vmatmul.mubr.bf16.gmra.mrb[0].mxu0 %v3019
      %v3260 = vpop.f32.mrb[0].mxu0
      %v3261 = vadd.f32 %v2821, %v3260
      %v3262 = vpop.f32.mrb[0].mxu0
      %v3263 = vadd.f32 %v2825, %v3262
      %v3264 = vpop.f32.mrb[0].mxu0
      %v3265 = vpop.f32.mrb[0].mxu0
      %3266 = vdwg.mxu0
      %3267 = vmatprep.subr.bf16.mxu0 %v2967
      %3268 = vmatpush1.bf16.msra.mxu0 %v2966
      %3269 = vmatprep.subr.bf16.mxu0 %v2983
      %3270 = vmatpush1.bf16.msra.mxu0 %v2982
      %3271 = vmatprep.subr.bf16.mxu0 0
      %3272 = vmatpush1.bf16.msra.mxu0 0
      %3273 = vmatprep.subr.bf16.mxu0 0
      %3274 = vmatpush1.bf16.msra.mxu0 0
      %3275 = vmatprep.subr.bf16.mxu0 0
      %3276 = vmatpush1.bf16.msra.mxu0 0
      %3277 = vmatprep.subr.bf16.mxu0 0
      %3278 = vmatpush1.bf16.msra.mxu0 0
      %3279 = vmatprep.subr.bf16.mxu0 0
      %3280 = vmatpush1.bf16.msra.mxu0 0
      %3281 = vmatprep.subr.bf16.mxu0 0
      %3282 = vmatpush1.bf16.msra.mxu0 0
      %3283 = vmatprep.subr.bf16.mxu0 0
      %3284 = vmatpush1.bf16.msra.mxu0 0
      %3285 = vmatprep.subr.bf16.mxu0 0
      %3286 = vmatpush1.bf16.msra.mxu0 0
      %3287 = vmatprep.subr.bf16.mxu0 0
      %3288 = vmatpush1.bf16.msra.mxu0 0
      %3289 = vmatprep.subr.bf16.mxu0 0
      %3290 = vmatpush1.bf16.msra.mxu0 0
      %3291 = vmatprep.subr.bf16.mxu0 0
      %3292 = vmatpush1.bf16.msra.mxu0 0
      %3293 = vmatprep.subr.bf16.mxu0 0
      %3294 = vmatpush1.bf16.msra.mxu0 0
      %3295 = vmatprep.subr.bf16.mxu0 0
      %3296 = vmatpush1.bf16.msra.mxu0 0
      %3297 = vmatprep.subr.bf16.mxu0 0
      %3298 = vmatpush1.bf16.msra.mxu0 0
      %3299 = vmatprep.mubr.bf16.mxu0 0
      %3300 = vmatmul.mubr.bf16.gmra.mrb[0].mxu0 %v3019
      %v3301 = vpop.f32.mrb[0].mxu0
      %v3302 = vadd.f32 %v2829, %v3301
      %v3303 = vpop.f32.mrb[0].mxu0
      %v3304 = vadd.f32 %v2833, %v3303
      %v3305 = vpop.f32.mrb[0].mxu0
      %v3306 = vpop.f32.mrb[0].mxu0
      %3307 = vdwg.mxu0
      %3308 = vmatprep.subr.bf16.mxu0 %v2969
      %3309 = vmatpush1.bf16.msra.mxu0 %v2968
      %3310 = vmatprep.subr.bf16.mxu0 %v2985
      %3311 = vmatpush1.bf16.msra.mxu0 %v2984
      %3312 = vmatprep.subr.bf16.mxu0 0
      %3313 = vmatpush1.bf16.msra.mxu0 0
      %3314 = vmatprep.subr.bf16.mxu0 0
      %3315 = vmatpush1.bf16.msra.mxu0 0
      %3316 = vmatprep.subr.bf16.mxu0 0
      %3317 = vmatpush1.bf16.msra.mxu0 0
      %3318 = vmatprep.subr.bf16.mxu0 0
      %3319 = vmatpush1.bf16.msra.mxu0 0
      %3320 = vmatprep.subr.bf16.mxu0 0
      %3321 = vmatpush1.bf16.msra.mxu0 0
      %3322 = vmatprep.subr.bf16.mxu0 0
      %3323 = vmatpush1.bf16.msra.mxu0 0
      %3324 = vmatprep.subr.bf16.mxu0 0
      %3325 = vmatpush1.bf16.msra.mxu0 0
      %3326 = vmatprep.subr.bf16.mxu0 0
      %3327 = vmatpush1.bf16.msra.mxu0 0
      %3328 = vmatprep.subr.bf16.mxu0 0
      %3329 = vmatpush1.bf16.msra.mxu0 0
      %3330 = vmatprep.subr.bf16.mxu0 0
      %3331 = vmatpush1.bf16.msra.mxu0 0
      %3332 = vmatprep.subr.bf16.mxu0 0
      %3333 = vmatpush1.bf16.msra.mxu0 0
      %3334 = vmatprep.subr.bf16.mxu0 0
      %3335 = vmatpush1.bf16.msra.mxu0 0
      %3336 = vmatprep.subr.bf16.mxu0 0
      %3337 = vmatpush1.bf16.msra.mxu0 0
      %3338 = vmatprep.subr.bf16.mxu0 0
      %3339 = vmatpush1.bf16.msra.mxu0 0
      %3340 = vmatprep.mubr.bf16.mxu0 0
      %3341 = vmatmul.mubr.bf16.gmra.mrb[0].mxu0 %v3019
      %v3342 = vpop.f32.mrb[0].mxu0
      %v3343 = vadd.f32 %v2837, %v3342
      %v3344 = vpop.f32.mrb[0].mxu0
      %v3345 = vadd.f32 %v2841, %v3344
      %v3346 = vpop.f32.mrb[0].mxu0
      %v3347 = vpop.f32.mrb[0].mxu0
      %3348 = vdwg.mxu0
      %v3349 = vmax.f32 %v3056, 0.0
      %v3350 = vmax.f32 %v3058, 0.0
      %v3351 = vmax.f32 %v3097, 0.0
      %v3352 = vmax.f32 %v3099, 0.0
      %v3353 = vmax.f32 %v3138, 0.0
      %v3354 = vmax.f32 %v3140, 0.0
      %v3355 = vmax.f32 %v3179, 0.0
      %v3356 = vmax.f32 %v3181, 0.0
      %v3357 = vmax.f32 %v3220, 0.0
      %v3358 = vmax.f32 %v3222, 0.0
      %v3359 = vmax.f32 %v3261, 0.0
      %v3360 = vmax.f32 %v3263, 0.0
      %v3361 = vmax.f32 %v3302, 0.0
      %v3362 = vmax.f32 %v3304, 0.0
      %v3363 = vmax.f32 %v3343, 0.0
      %v3364 = vmax.f32 %v3345, 0.0
      %v3365 = vpack.c.bf16 %v3349, %v3349
      %v3366 = vpack.c.bf16 %v3350, %v3350
      %v3367 = vpack.c.bf16 %v3351, %v3351
      %v3368 = vpack.c.bf16 %v3352, %v3352
      %v3369 = vpack.c.bf16 %v3353, %v3353
      %v3370 = vpack.c.bf16 %v3354, %v3354
      %v3371 = vpack.c.bf16 %v3355, %v3355
      %v3372 = vpack.c.bf16 %v3356, %v3356
      %v3373 = vpack.c.bf16 %v3357, %v3357
      %v3374 = vpack.c.bf16 %v3358, %v3358
      %v3375 = vpack.c.bf16 %v3359, %v3359
      %v3376 = vpack.c.bf16 %v3360, %v3360
      %v3377 = vpack.c.bf16 %v3361, %v3361
      %v3378 = vpack.c.bf16 %v3362, %v3362
      %v3379 = vpack.c.bf16 %v3363, %v3363
      %v3380 = vpack.c.bf16 %v3364, %v3364
      %v3381 = vld [vmem:[%s3 + $0xd0] sm:$0xff]
      %v3382 = vld [vmem:[%s3 + $0xd8] sm:$0xff]
      %v3383 = vld [vmem:[%s3 + $0xe0] sm:$0xff]
      %v3384 = vld [vmem:[%s3 + $0xe8] sm:$0xff]
      %v3385 = vld [vmem:[%s3 + $0xf0] sm:$0xff]
      %v3386 = vld [vmem:[%s3 + $0xf8] sm:$0xff]
      %v3387 = vld [vmem:[%s3 + $0x100] sm:$0xff]
      %v3388 = vld [vmem:[%s3 + $0x108] sm:$0xff]
      %v3389 = vld [vmem:[%s3 + $0x1e0] sm:$0xff]
      %v3390 = vld [vmem:[%s3 + $0x1e8] sm:$0xff]
      %v3391 = vld [vmem:[%s3 + $0x1f0] sm:$0xff]
      %v3392 = vld [vmem:[%s3 + $0x1f8] sm:$0xff]
      %v3393 = vld [vmem:[%s3 + $0x200] sm:$0xff]
      %v3394 = vld [vmem:[%s3 + $0x208] sm:$0xff]
      %v3395 = vld [vmem:[%s3 + $0x210] sm:$0xff]
      %v3396 = vld [vmem:[%s3 + $0x218] sm:$0xff]
      %v3397 = vld [vmem:[%s3 + $0x2f0] sm:$0xff]
      %v3398 = vld [vmem:[%s3 + $0x2f8] sm:$0xff]
      %v3399 = vld [vmem:[%s3 + $0x300] sm:$0xff]
      %v3400 = vld [vmem:[%s3 + $0x308] sm:$0xff]
      %v3401 = vld [vmem:[%s3 + $0x310] sm:$0xff]
      %v3402 = vld [vmem:[%s3 + $0x318] sm:$0xff]
      %v3403 = vld [vmem:[%s3 + $0x320] sm:$0xff]
      %v3404 = vld [vmem:[%s3 + $0x328] sm:$0xff]
      %v3405 = vld [vmem:[%s3 + $0x400] sm:$0xff]
      %v3406 = vld [vmem:[%s3 + $0x408] sm:$0xff]
      %v3407 = vld [vmem:[%s3 + $0x410] sm:$0xff]
      %v3408 = vld [vmem:[%s3 + $0x418] sm:$0xff]
      %v3409 = vld [vmem:[%s3 + $0x420] sm:$0xff]
      %v3410 = vld [vmem:[%s3 + $0x428] sm:$0xff]
      %v3411 = vld [vmem:[%s3 + $0x430] sm:$0xff]
      %v3412 = vld [vmem:[%s3 + $0x438] sm:$0xff]
      %v3413 = vld [vmem:[%s4 + $0x2c] sm:$0x1]
      %v3415 = vlaneseq
      %v3416 = vshrl.u32 %v3415, 7
      %v3417 = vsub.s32 0, %v3416
      %v3418 = vrot.slane %v3413, %v3417
      %v3452 = vunpack.c.l.b16 %v3381
      %v3453 = vunpack.c.h.b16 %v3381
      %v3454 = vunpack.c.l.b16 %v3382
      %v3455 = vunpack.c.h.b16 %v3382
      %v3456 = vunpack.c.l.b16 %v3383
      %v3457 = vunpack.c.h.b16 %v3383
      %v3458 = vunpack.c.l.b16 %v3384
      %v3459 = vunpack.c.h.b16 %v3384
      %v3460 = vunpack.c.l.b16 %v3385
      %v3461 = vunpack.c.h.b16 %v3385
      %v3462 = vunpack.c.l.b16 %v3386
      %v3463 = vunpack.c.h.b16 %v3386
      %v3464 = vunpack.c.l.b16 %v3387
      %v3465 = vunpack.c.h.b16 %v3387
      %v3466 = vunpack.c.l.b16 %v3388
      %v3467 = vunpack.c.h.b16 %v3388
      %v3468 = vunpack.c.l.b16 %v3389
      %v3469 = vunpack.c.h.b16 %v3389
      %v3470 = vunpack.c.l.b16 %v3390
      %v3471 = vunpack.c.h.b16 %v3390
      %v3472 = vunpack.c.l.b16 %v3391
      %v3473 = vunpack.c.h.b16 %v3391
      %v3474 = vunpack.c.l.b16 %v3392
      %v3475 = vunpack.c.h.b16 %v3392
      %v3476 = vunpack.c.l.b16 %v3393
      %v3477 = vunpack.c.h.b16 %v3393
      %v3478 = vunpack.c.l.b16 %v3394
      %v3479 = vunpack.c.h.b16 %v3394
      %v3480 = vunpack.c.l.b16 %v3395
      %v3481 = vunpack.c.h.b16 %v3395
      %v3482 = vunpack.c.l.b16 %v3396
      %v3483 = vunpack.c.h.b16 %v3396
      %v3484 = vunpack.c.l.b16 %v3397
      %v3485 = vunpack.c.h.b16 %v3397
      %v3486 = vunpack.c.l.b16 %v3398
      %v3487 = vunpack.c.h.b16 %v3398
      %v3488 = vunpack.c.l.b16 %v3399
      %v3489 = vunpack.c.h.b16 %v3399
      %v3490 = vunpack.c.l.b16 %v3400
      %v3491 = vunpack.c.h.b16 %v3400
      %v3492 = vunpack.c.l.b16 %v3401
      %v3493 = vunpack.c.h.b16 %v3401
      %v3494 = vunpack.c.l.b16 %v3402
      %v3495 = vunpack.c.h.b16 %v3402
      %v3496 = vunpack.c.l.b16 %v3403
      %v3497 = vunpack.c.h.b16 %v3403
      %v3498 = vunpack.c.l.b16 %v3404
      %v3499 = vunpack.c.h.b16 %v3404
      %v3500 = vunpack.c.l.b16 %v3405
      %v3501 = vunpack.c.h.b16 %v3405
      %v3502 = vunpack.c.l.b16 %v3406
      %v3503 = vunpack.c.h.b16 %v3406
      %v3504 = vunpack.c.l.b16 %v3407
      %v3505 = vunpack.c.h.b16 %v3407
      %v3506 = vunpack.c.l.b16 %v3408
      %v3507 = vunpack.c.h.b16 %v3408
      %v3508 = vunpack.c.l.b16 %v3409
      %v3509 = vunpack.c.h.b16 %v3409
      %v3510 = vunpack.c.l.b16 %v3410
      %v3511 = vunpack.c.h.b16 %v3410
      %v3512 = vunpack.c.l.b16 %v3411
      %v3513 = vunpack.c.h.b16 %v3411
      %v3514 = vunpack.c.l.b16 %v3412
      %v3515 = vunpack.c.h.b16 %v3412
      %v3516 = vpack.c.b16 %v3468, %v3452
      %v3517 = vpack.c.b16 %v3469, %v3453
      %v3518 = vpack.c.b16 %v3470, %v3454
      %v3519 = vpack.c.b16 %v3471, %v3455
      %v3520 = vpack.c.b16 %v3472, %v3456
      %v3521 = vpack.c.b16 %v3473, %v3457
      %v3522 = vpack.c.b16 %v3474, %v3458
      %v3523 = vpack.c.b16 %v3475, %v3459
      %v3524 = vpack.c.b16 %v3476, %v3460
      %v3525 = vpack.c.b16 %v3477, %v3461
      %v3526 = vpack.c.b16 %v3478, %v3462
      %v3527 = vpack.c.b16 %v3479, %v3463
      %v3528 = vpack.c.b16 %v3480, %v3464
      %v3529 = vpack.c.b16 %v3481, %v3465
      %v3530 = vpack.c.b16 %v3482, %v3466
      %v3531 = vpack.c.b16 %v3483, %v3467
      %v3532 = vpack.c.b16 %v3500, %v3484
      %v3533 = vpack.c.b16 %v3501, %v3485
      %v3534 = vpack.c.b16 %v3502, %v3486
      %v3535 = vpack.c.b16 %v3503, %v3487
      %v3536 = vpack.c.b16 %v3504, %v3488
      %v3537 = vpack.c.b16 %v3505, %v3489
      %v3538 = vpack.c.b16 %v3506, %v3490
      %v3539 = vpack.c.b16 %v3507, %v3491
      %v3540 = vpack.c.b16 %v3508, %v3492
      %v3541 = vpack.c.b16 %v3509, %v3493
      %v3542 = vpack.c.b16 %v3510, %v3494
      %v3543 = vpack.c.b16 %v3511, %v3495
      %v3544 = vpack.c.b16 %v3512, %v3496
      %v3545 = vpack.c.b16 %v3513, %v3497
      %v3546 = vpack.c.b16 %v3514, %v3498
      %v3547 = vpack.c.b16 %v3515, %v3499
      %3580 = vmatprep.subr.bf16.mxu0 %v3517
      %3581 = vmatpush1.bf16.xpose.msra.mxu0 %v3516
      %3582 = vmatprep.subr.bf16.mxu0 %v3533
      %3583 = vmatpush1.bf16.xpose.msra.mxu0 %v3532
      %3584 = vmatprep.subr.bf16.mxu0 0
      %3585 = vmatpush1.bf16.xpose.msra.mxu0 0
      %3586 = vmatprep.subr.bf16.mxu0 0
      %3587 = vmatpush1.bf16.xpose.msra.mxu0 0
      %3588 = vmatprep.subr.bf16.mxu0 0
      %3589 = vmatpush1.bf16.xpose.msra.mxu0 0
      %3590 = vmatprep.subr.bf16.mxu0 0
      %3591 = vmatpush1.bf16.xpose.msra.mxu0 0
      %3592 = vmatprep.subr.bf16.mxu0 0
      %3593 = vmatpush1.bf16.xpose.msra.mxu0 0
      %3594 = vmatprep.subr.bf16.mxu0 0
      %3595 = vmatpush1.bf16.xpose.msra.mxu0 0
      %3596 = vmatprep.subr.bf16.mxu0 0
      %3597 = vmatpush1.bf16.xpose.msra.mxu0 0
      %3598 = vmatprep.subr.bf16.mxu0 0
      %3599 = vmatpush1.bf16.xpose.msra.mxu0 0
      %3600 = vmatprep.subr.bf16.mxu0 0
      %3601 = vmatpush1.bf16.xpose.msra.mxu0 0
      %3602 = vmatprep.subr.bf16.mxu0 0
      %3603 = vmatpush1.bf16.xpose.msra.mxu0 0
      %3604 = vmatprep.subr.bf16.mxu0 0
      %3605 = vmatpush1.bf16.xpose.msra.mxu0 0
      %3606 = vmatprep.subr.bf16.mxu0 0
      %3607 = vmatpush1.bf16.xpose.msra.mxu0 0
      %3608 = vmatprep.subr.bf16.mxu0 0
      %3609 = vmatpush1.bf16.xpose.msra.mxu0 0
      %3610 = vmatprep.subr.bf16.mxu0 0
      %3611 = vmatpush1.bf16.xpose.msra.mxu0 0
      %3612 = vmatprep.mubr.bf16.mxu0 %v3366
      %3613 = vmatmul.mubr.bf16.gmra.mrb[0].mxu0 %v3365
      %v3614 = vpop.f32.mrb[0].mxu0
      %v3615 = vadd.f32 %v3418, %v3614
      %v3616 = vpop.f32.mrb[0].mxu0
      %v3617 = vpop.f32.mrb[0].mxu0
      %v3618 = vpop.f32.mrb[0].mxu0
      %3619 = vdwg.mxu0
      %3620 = vmatprep.subr.bf16.mxu0 %v3519
      %3621 = vmatpush1.bf16.xpose.msra.mxu0 %v3518
      %3622 = vmatprep.subr.bf16.mxu0 %v3535
      %3623 = vmatpush1.bf16.xpose.msra.mxu0 %v3534
      %3624 = vmatprep.subr.bf16.mxu0 0
      %3625 = vmatpush1.bf16.xpose.msra.mxu0 0
      %3626 = vmatprep.subr.bf16.mxu0 0
      %3627 = vmatpush1.bf16.xpose.msra.mxu0 0
      %3628 = vmatprep.subr.bf16.mxu0 0
      %3629 = vmatpush1.bf16.xpose.msra.mxu0 0
      %3630 = vmatprep.subr.bf16.mxu0 0
      %3631 = vmatpush1.bf16.xpose.msra.mxu0 0
      %3632 = vmatprep.subr.bf16.mxu0 0
      %3633 = vmatpush1.bf16.xpose.msra.mxu0 0
      %3634 = vmatprep.subr.bf16.mxu0 0
      %3635 = vmatpush1.bf16.xpose.msra.mxu0 0
      %3636 = vmatprep.subr.bf16.mxu0 0
      %3637 = vmatpush1.bf16.xpose.msra.mxu0 0
      %3638 = vmatprep.subr.bf16.mxu0 0
      %3639 = vmatpush1.bf16.xpose.msra.mxu0 0
      %3640 = vmatprep.subr.bf16.mxu0 0
      %3641 = vmatpush1.bf16.xpose.msra.mxu0 0
      %3642 = vmatprep.subr.bf16.mxu0 0
      %3643 = vmatpush1.bf16.xpose.msra.mxu0 0
      %3644 = vmatprep.subr.bf16.mxu0 0
      %3645 = vmatpush1.bf16.xpose.msra.mxu0 0
      %3646 = vmatprep.subr.bf16.mxu0 0
      %3647 = vmatpush1.bf16.xpose.msra.mxu0 0
      %3648 = vmatprep.subr.bf16.mxu0 0
      %3649 = vmatpush1.bf16.xpose.msra.mxu0 0
      %3650 = vmatprep.subr.bf16.mxu0 0
      %3651 = vmatpush1.bf16.xpose.msra.mxu0 0
      %3652 = vmatprep.mubr.bf16.mxu0 %v3368
      %3653 = vmatmul.mubr.bf16.gmra.mrb[0].mxu0 %v3367
      %v3654 = vpop.f32.mrb[0].mxu0
      %v3655 = vadd.f32 %v3615, %v3654
      %v3656 = vpop.f32.mrb[0].mxu0
      %v3657 = vpop.f32.mrb[0].mxu0
      %v3658 = vpop.f32.mrb[0].mxu0
      %3659 = vdwg.mxu0
      %3660 = vmatprep.subr.bf16.mxu0 %v3521
      %3661 = vmatpush1.bf16.xpose.msra.mxu0 %v3520
      %3662 = vmatprep.subr.bf16.mxu0 %v3537
      %3663 = vmatpush1.bf16.xpose.msra.mxu0 %v3536
      %3664 = vmatprep.subr.bf16.mxu0 0
      %3665 = vmatpush1.bf16.xpose.msra.mxu0 0
      %3666 = vmatprep.subr.bf16.mxu0 0
      %3667 = vmatpush1.bf16.xpose.msra.mxu0 0
      %3668 = vmatprep.subr.bf16.mxu0 0
      %3669 = vmatpush1.bf16.xpose.msra.mxu0 0
      %3670 = vmatprep.subr.bf16.mxu0 0
      %3671 = vmatpush1.bf16.xpose.msra.mxu0 0
      %3672 = vmatprep.subr.bf16.mxu0 0
      %3673 = vmatpush1.bf16.xpose.msra.mxu0 0
      %3674 = vmatprep.subr.bf16.mxu0 0
      %3675 = vmatpush1.bf16.xpose.msra.mxu0 0
      %3676 = vmatprep.subr.bf16.mxu0 0
      %3677 = vmatpush1.bf16.xpose.msra.mxu0 0
      %3678 = vmatprep.subr.bf16.mxu0 0
      %3679 = vmatpush1.bf16.xpose.msra.mxu0 0
      %3680 = vmatprep.subr.bf16.mxu0 0
      %3681 = vmatpush1.bf16.xpose.msra.mxu0 0
      %3682 = vmatprep.subr.bf16.mxu0 0
      %3683 = vmatpush1.bf16.xpose.msra.mxu0 0
      %3684 = vmatprep.subr.bf16.mxu0 0
      %3685 = vmatpush1.bf16.xpose.msra.mxu0 0
      %3686 = vmatprep.subr.bf16.mxu0 0
      %3687 = vmatpush1.bf16.xpose.msra.mxu0 0
      %3688 = vmatprep.subr.bf16.mxu0 0
      %3689 = vmatpush1.bf16.xpose.msra.mxu0 0
      %3690 = vmatprep.subr.bf16.mxu0 0
      %3691 = vmatpush1.bf16.xpose.msra.mxu0 0
      %3692 = vmatprep.mubr.bf16.mxu0 %v3370
      %3693 = vmatmul.mubr.bf16.gmra.mrb[0].mxu0 %v3369
      %v3694 = vpop.f32.mrb[0].mxu0
      %v3695 = vadd.f32 %v3655, %v3694
      %v3696 = vpop.f32.mrb[0].mxu0
      %v3697 = vpop.f32.mrb[0].mxu0
      %v3698 = vpop.f32.mrb[0].mxu0
      %3699 = vdwg.mxu0
      %3700 = vmatprep.subr.bf16.mxu0 %v3523
      %3701 = vmatpush1.bf16.xpose.msra.mxu0 %v3522
      %3702 = vmatprep.subr.bf16.mxu0 %v3539
      %3703 = vmatpush1.bf16.xpose.msra.mxu0 %v3538
      %3704 = vmatprep.subr.bf16.mxu0 0
      %3705 = vmatpush1.bf16.xpose.msra.mxu0 0
      %3706 = vmatprep.subr.bf16.mxu0 0
      %3707 = vmatpush1.bf16.xpose.msra.mxu0 0
      %3708 = vmatprep.subr.bf16.mxu0 0
      %3709 = vmatpush1.bf16.xpose.msra.mxu0 0
      %3710 = vmatprep.subr.bf16.mxu0 0
      %3711 = vmatpush1.bf16.xpose.msra.mxu0 0
      %3712 = vmatprep.subr.bf16.mxu0 0
      %3713 = vmatpush1.bf16.xpose.msra.mxu0 0
      %3714 = vmatprep.subr.bf16.mxu0 0
      %3715 = vmatpush1.bf16.xpose.msra.mxu0 0
      %3716 = vmatprep.subr.bf16.mxu0 0
      %3717 = vmatpush1.bf16.xpose.msra.mxu0 0
      %3718 = vmatprep.subr.bf16.mxu0 0
      %3719 = vmatpush1.bf16.xpose.msra.mxu0 0
      %3720 = vmatprep.subr.bf16.mxu0 0
      %3721 = vmatpush1.bf16.xpose.msra.mxu0 0
      %3722 = vmatprep.subr.bf16.mxu0 0
      %3723 = vmatpush1.bf16.xpose.msra.mxu0 0
      %3724 = vmatprep.subr.bf16.mxu0 0
      %3725 = vmatpush1.bf16.xpose.msra.mxu0 0
      %3726 = vmatprep.subr.bf16.mxu0 0
      %3727 = vmatpush1.bf16.xpose.msra.mxu0 0
      %3728 = vmatprep.subr.bf16.mxu0 0
      %3729 = vmatpush1.bf16.xpose.msra.mxu0 0
      %3730 = vmatprep.subr.bf16.mxu0 0
      %3731 = vmatpush1.bf16.xpose.msra.mxu0 0
      %3732 = vmatprep.mubr.bf16.mxu0 %v3372
      %3733 = vmatmul.mubr.bf16.gmra.mrb[0].mxu0 %v3371
      %v3734 = vpop.f32.mrb[0].mxu0
      %v3735 = vadd.f32 %v3695, %v3734
      %v3736 = vpop.f32.mrb[0].mxu0
      %v3737 = vpop.f32.mrb[0].mxu0
      %v3738 = vpop.f32.mrb[0].mxu0
      %3739 = vdwg.mxu0
      %3740 = vmatprep.subr.bf16.mxu0 %v3525
      %3741 = vmatpush1.bf16.xpose.msra.mxu0 %v3524
      %3742 = vmatprep.subr.bf16.mxu0 %v3541
      %3743 = vmatpush1.bf16.xpose.msra.mxu0 %v3540
      %3744 = vmatprep.subr.bf16.mxu0 0
      %3745 = vmatpush1.bf16.xpose.msra.mxu0 0
      %3746 = vmatprep.subr.bf16.mxu0 0
      %3747 = vmatpush1.bf16.xpose.msra.mxu0 0
      %3748 = vmatprep.subr.bf16.mxu0 0
      %3749 = vmatpush1.bf16.xpose.msra.mxu0 0
      %3750 = vmatprep.subr.bf16.mxu0 0
      %3751 = vmatpush1.bf16.xpose.msra.mxu0 0
      %3752 = vmatprep.subr.bf16.mxu0 0
      %3753 = vmatpush1.bf16.xpose.msra.mxu0 0
      %3754 = vmatprep.subr.bf16.mxu0 0
      %3755 = vmatpush1.bf16.xpose.msra.mxu0 0
      %3756 = vmatprep.subr.bf16.mxu0 0
      %3757 = vmatpush1.bf16.xpose.msra.mxu0 0
      %3758 = vmatprep.subr.bf16.mxu0 0
      %3759 = vmatpush1.bf16.xpose.msra.mxu0 0
      %3760 = vmatprep.subr.bf16.mxu0 0
      %3761 = vmatpush1.bf16.xpose.msra.mxu0 0
      %3762 = vmatprep.subr.bf16.mxu0 0
      %3763 = vmatpush1.bf16.xpose.msra.mxu0 0
      %3764 = vmatprep.subr.bf16.mxu0 0
      %3765 = vmatpush1.bf16.xpose.msra.mxu0 0
      %3766 = vmatprep.subr.bf16.mxu0 0
      %3767 = vmatpush1.bf16.xpose.msra.mxu0 0
      %3768 = vmatprep.subr.bf16.mxu0 0
      %3769 = vmatpush1.bf16.xpose.msra.mxu0 0
      %3770 = vmatprep.subr.bf16.mxu0 0
      %3771 = vmatpush1.bf16.xpose.msra.mxu0 0
      %3772 = vmatprep.mubr.bf16.mxu0 %v3374
      %3773 = vmatmul.mubr.bf16.gmra.mrb[0].mxu0 %v3373
      %v3774 = vpop.f32.mrb[0].mxu0
      %v3775 = vadd.f32 %v3735, %v3774
      %v3776 = vpop.f32.mrb[0].mxu0
      %v3777 = vpop.f32.mrb[0].mxu0
      %v3778 = vpop.f32.mrb[0].mxu0
      %3779 = vdwg.mxu0
      %3780 = vmatprep.subr.bf16.mxu0 %v3527
      %3781 = vmatpush1.bf16.xpose.msra.mxu0 %v3526
      %3782 = vmatprep.subr.bf16.mxu0 %v3543
      %3783 = vmatpush1.bf16.xpose.msra.mxu0 %v3542
      %3784 = vmatprep.subr.bf16.mxu0 0
      %3785 = vmatpush1.bf16.xpose.msra.mxu0 0
      %3786 = vmatprep.subr.bf16.mxu0 0
      %3787 = vmatpush1.bf16.xpose.msra.mxu0 0
      %3788 = vmatprep.subr.bf16.mxu0 0
      %3789 = vmatpush1.bf16.xpose.msra.mxu0 0
      %3790 = vmatprep.subr.bf16.mxu0 0
      %3791 = vmatpush1.bf16.xpose.msra.mxu0 0
      %3792 = vmatprep.subr.bf16.mxu0 0
      %3793 = vmatpush1.bf16.xpose.msra.mxu0 0
      %3794 = vmatprep.subr.bf16.mxu0 0
      %3795 = vmatpush1.bf16.xpose.msra.mxu0 0
      %3796 = vmatprep.subr.bf16.mxu0 0
      %3797 = vmatpush1.bf16.xpose.msra.mxu0 0
      %3798 = vmatprep.subr.bf16.mxu0 0
      %3799 = vmatpush1.bf16.xpose.msra.mxu0 0
      %3800 = vmatprep.subr.bf16.mxu0 0
      %3801 = vmatpush1.bf16.xpose.msra.mxu0 0
      %3802 = vmatprep.subr.bf16.mxu0 0
      %3803 = vmatpush1.bf16.xpose.msra.mxu0 0
      %3804 = vmatprep.subr.bf16.mxu0 0
      %3805 = vmatpush1.bf16.xpose.msra.mxu0 0
      %3806 = vmatprep.subr.bf16.mxu0 0
      %3807 = vmatpush1.bf16.xpose.msra.mxu0 0
      %3808 = vmatprep.subr.bf16.mxu0 0
      %3809 = vmatpush1.bf16.xpose.msra.mxu0 0
      %3810 = vmatprep.subr.bf16.mxu0 0
      %3811 = vmatpush1.bf16.xpose.msra.mxu0 0
      %3812 = vmatprep.mubr.bf16.mxu0 %v3376
      %3813 = vmatmul.mubr.bf16.gmra.mrb[0].mxu0 %v3375
      %v3814 = vpop.f32.mrb[0].mxu0
      %v3815 = vadd.f32 %v3775, %v3814
      %v3816 = vpop.f32.mrb[0].mxu0
      %v3817 = vpop.f32.mrb[0].mxu0
      %v3818 = vpop.f32.mrb[0].mxu0
      %3819 = vdwg.mxu0
      %3820 = vmatprep.subr.bf16.mxu0 %v3529
      %3821 = vmatpush1.bf16.xpose.msra.mxu0 %v3528
      %3822 = vmatprep.subr.bf16.mxu0 %v3545
      %3823 = vmatpush1.bf16.xpose.msra.mxu0 %v3544
      %3824 = vmatprep.subr.bf16.mxu0 0
      %3825 = vmatpush1.bf16.xpose.msra.mxu0 0
      %3826 = vmatprep.subr.bf16.mxu0 0
      %3827 = vmatpush1.bf16.xpose.msra.mxu0 0
      %3828 = vmatprep.subr.bf16.mxu0 0
      %3829 = vmatpush1.bf16.xpose.msra.mxu0 0
      %3830 = vmatprep.subr.bf16.mxu0 0
      %3831 = vmatpush1.bf16.xpose.msra.mxu0 0
      %3832 = vmatprep.subr.bf16.mxu0 0
      %3833 = vmatpush1.bf16.xpose.msra.mxu0 0
      %3834 = vmatprep.subr.bf16.mxu0 0
      %3835 = vmatpush1.bf16.xpose.msra.mxu0 0
      %3836 = vmatprep.subr.bf16.mxu0 0
      %3837 = vmatpush1.bf16.xpose.msra.mxu0 0
      %3838 = vmatprep.subr.bf16.mxu0 0
      %3839 = vmatpush1.bf16.xpose.msra.mxu0 0
      %3840 = vmatprep.subr.bf16.mxu0 0
      %3841 = vmatpush1.bf16.xpose.msra.mxu0 0
      %3842 = vmatprep.subr.bf16.mxu0 0
      %3843 = vmatpush1.bf16.xpose.msra.mxu0 0
      %3844 = vmatprep.subr.bf16.mxu0 0
      %3845 = vmatpush1.bf16.xpose.msra.mxu0 0
      %3846 = vmatprep.subr.bf16.mxu0 0
      %3847 = vmatpush1.bf16.xpose.msra.mxu0 0
      %3848 = vmatprep.subr.bf16.mxu0 0
      %3849 = vmatpush1.bf16.xpose.msra.mxu0 0
      %3850 = vmatprep.subr.bf16.mxu0 0
      %3851 = vmatpush1.bf16.xpose.msra.mxu0 0
      %3852 = vmatprep.mubr.bf16.mxu0 %v3378
      %3853 = vmatmul.mubr.bf16.gmra.mrb[0].mxu0 %v3377
      %v3854 = vpop.f32.mrb[0].mxu0
      %v3855 = vadd.f32 %v3815, %v3854
      %v3856 = vpop.f32.mrb[0].mxu0
      %v3857 = vpop.f32.mrb[0].mxu0
      %v3858 = vpop.f32.mrb[0].mxu0
      %3859 = vdwg.mxu0
      %3860 = vmatprep.subr.bf16.mxu0 %v3531
      %3861 = vmatpush1.bf16.xpose.msra.mxu0 %v3530
      %3862 = vmatprep.subr.bf16.mxu0 %v3547
      %3863 = vmatpush1.bf16.xpose.msra.mxu0 %v3546
      %3864 = vmatprep.subr.bf16.mxu0 0
      %3865 = vmatpush1.bf16.xpose.msra.mxu0 0
      %3866 = vmatprep.subr.bf16.mxu0 0
      %3867 = vmatpush1.bf16.xpose.msra.mxu0 0
      %3868 = vmatprep.subr.bf16.mxu0 0
      %3869 = vmatpush1.bf16.xpose.msra.mxu0 0
      %3870 = vmatprep.subr.bf16.mxu0 0
      %3871 = vmatpush1.bf16.xpose.msra.mxu0 0
      %3872 = vmatprep.subr.bf16.mxu0 0
      %3873 = vmatpush1.bf16.xpose.msra.mxu0 0
      %3874 = vmatprep.subr.bf16.mxu0 0
      %3875 = vmatpush1.bf16.xpose.msra.mxu0 0
      %3876 = vmatprep.subr.bf16.mxu0 0
      %3877 = vmatpush1.bf16.xpose.msra.mxu0 0
      %3878 = vmatprep.subr.bf16.mxu0 0
      %3879 = vmatpush1.bf16.xpose.msra.mxu0 0
      %3880 = vmatprep.subr.bf16.mxu0 0
      %3881 = vmatpush1.bf16.xpose.msra.mxu0 0
      %3882 = vmatprep.subr.bf16.mxu0 0
      %3883 = vmatpush1.bf16.xpose.msra.mxu0 0
      %3884 = vmatprep.subr.bf16.mxu0 0
      %3885 = vmatpush1.bf16.xpose.msra.mxu0 0
      %3886 = vmatprep.subr.bf16.mxu0 0
      %3887 = vmatpush1.bf16.xpose.msra.mxu0 0
      %3888 = vmatprep.subr.bf16.mxu0 0
      %3889 = vmatpush1.bf16.xpose.msra.mxu0 0
      %3890 = vmatprep.subr.bf16.mxu0 0
      %3891 = vmatpush1.bf16.xpose.msra.mxu0 0
      %3892 = vmatprep.mubr.bf16.mxu0 %v3380
      %3893 = vmatmul.mubr.bf16.gmra.mrb[0].mxu0 %v3379
      %v3894 = vpop.f32.mrb[0].mxu0
      %v3895 = vadd.f32 %v3855, %v3894
      %v3896 = vpop.f32.mrb[0].mxu0
      %v3897 = vpop.f32.mrb[0].mxu0
      %v3898 = vpop.f32.mrb[0].mxu0
      %3899 = vdwg.mxu0
      %v3900 = vld [vmem:[%s4 + $0x2d] sm:$0x1]
      %v3901 = vld [vmem:[%s4 + $0x2e] sm:$0x1]
      %v3902 = vadd.f32 %v2740, %v3895
      %v3903 = vsel %vm324, %v3902, 0.0
      %3904 = vadd.xlane.f32.xlu0 %v3903
      %v3905 = vpop.xlane.xlu0 %3904
      %v3906 = vmul.f32 %v3905, %v904
      %v3907 = vsub.f32 %v3902, %v3906
      %v3908 = vmul.f32 %v3907, %v3907
      %v3909 = vsel %vm324, %v3908, 0.0
      %3910 = vadd.xlane.f32.xlu0 %v3909
      %v3911 = vpop.xlane.xlu0 %3910
      %v3912 = vmul.f32 %v3911, %v904
      %v3913 = vadd.f32 %v3912, 1e-05
      %v3914 = vrsqrt.pop %v3913
      %v3915 = vmul.f32 %v3907, %v3914
      %v3917 = vlaneseq
      %v3918 = vshrl.u32 %v3917, 7
      %v3919 = vsub.s32 0, %v3918
      %v3920 = vrot.slane %v3900, %v3919
      %v3922 = vmul.f32 %v3915, %v3920
      %v3924 = vlaneseq
      %v3925 = vshrl.u32 %v3924, 7
      %v3926 = vsub.s32 0, %v3925
      %v3927 = vrot.slane %v3901, %v3926
      %v3929 = vadd.f32 %v3922, %v3927
      %3930 = vst.msk [vmem:[%s219] sm:$0xff] %vm324, %v3929
      %p3931 = scmp.lt.s32.totalorder %s16, 1
      %s3932 = scalar_select %p3931, %s16, 1
      %s3933 = smul.addr %s3932, 8
      %s3934 = scalar_lea.vmem %s5, %s3933
      // Predicated region
      $region41: #{_unnamed_function_.1} parent=39 // pred_check
        %p3935 = pneg %p144
      $region42: #{_unnamed_function_.1} parent=39 // pred_check_branch
        %3937 = sbr.rel (%p3935) target = $region44
      $region43: #{_unnamed_function_.1} parent=39 // pred_region
        _
      $region44: #{_unnamed_function_.1} parent=39 // pred_fallthru
        _
    $region40: #{_unnamed_function_.1} parent=5 // pred_fallthru
      _
    %p3938 = scmp.le.s32.totalorder 2, %s11
    // Predicated region
    $region45: #{_unnamed_function_.1} parent=5 // pred_check
      %p3939 = pneg %p3938
    $region46: #{_unnamed_function_.1} parent=5 // pred_check_branch
      %3941 = sbr.rel (%p3939) target = $region48
    $region47: #{_unnamed_function_.1} parent=5 // pred_region
      %s3942 = ssub.s32 %s11, 2
      // Predicated region
      $region49: #{_unnamed_function_.1} parent=47 // pred_check
        %p3943 = pneg %p150
      $region50: #{_unnamed_function_.1} parent=47 // pred_check_branch
        %3945 = sbr.rel (%p3943) target = $region52
      $region51: #{_unnamed_function_.1} parent=47 // pred_region
        %p3946 = scmp.lt.s32.totalorder %s17, 1
        %s3947 = scalar_select %p3946, %s17, 1
        %s3948 = smul.addr %s3947, 8
        %s3949 = scalar_lea.vmem %s5, %s3948
      $region52: #{_unnamed_function_.1} parent=47 // pred_fallthru
        _
    $region48: #{_unnamed_function_.1} parent=5 // pred_fallthru
      _
  $region6: #{_unnamed_function_.1} parent=0 // loop_footer
    %s15 = sadd.s32 1, %s11
  $region7: #{_unnamed_function_.1} parent=0 // loop_footer_branch
    %10 = sbr.rel target = $region3
  $region8: #{_unnamed_function_.1} parent=0 // loop_exit
    _

</llo_original>
